<compile_context>
chip_gen: v7x
topology: tpu7x:2x2x1
jax: 0.10.0
libtpu: 0.0.40
codegen_flags: <defaults>
</compile_context>

<pallas_src>
import functools

import jax
import jax.numpy as jnp
import numpy as np
from jax.experimental import pallas as pl
from jax.experimental.pallas import tpu as pltpu

EPS = 1e-5
_VMEM_LIMIT_BYTES = 32 * 1024 * 1024  # safe scoped-VMEM budget on v5e/v6e/v7x


def _round_up(x, m):
    return (x + m - 1) // m * m


# --------------------------------------------------------------------------
# Phase 1: fused (conv1 | downsample-conv) im2col matmul + BN sum/sumsq stats
# --------------------------------------------------------------------------
def _conv_stats_kernel(xcol_ref, wcat_ref, bcat_ref, conv_ref, stats_ref,
                       *, m_valid, tile_m, mxu_dtype):
    i = pl.program_id(0)

    x = xcol_ref[...]                        # (TM, 3*Nin) f32
    w = wcat_ref[...]                        # (3*Nin, NCh+Nout)
    conv = jnp.dot(x.astype(mxu_dtype), w.astype(mxu_dtype),
                   preferred_element_type=jnp.float32) + bcat_ref[...]
    conv_ref[...] = conv                     # (TM, NCh+Nout) f32

    # Masked one-pass statistics (exclude rows padded up to the tile size).
    row = jax.lax.broadcasted_iota(jnp.int32, (tile_m, 1), 0) + i * tile_m
    maskf = (row < m_valid).astype(jnp.float32)
    cm = conv * maskf
    s = jnp.sum(cm, axis=0, keepdims=True)          # (1, Ccat)
    ssq = jnp.sum(cm * cm, axis=0, keepdims=True)   # (1, Ccat)

    @pl.when(i == 0)
    def _():
        stats_ref[...] = jnp.zeros_like(stats_ref)

    stats_ref[...] += jnp.concatenate([s, ssq], axis=0)   # resident accumulator


# --------------------------------------------------------------------------
# Phase 2: fused BN (scale/shift) -> ReLU -> conv2 (k=1) -> residual -> ReLU
# --------------------------------------------------------------------------
def _bn_conv2_residual_kernel(conv_ref, stats_ref, w2_ref, b2_ref,
                              gamma_ref, beta_ref, o_ref,
                              *, m_valid, nch, mxu_dtype):
    stats = stats_ref[...]                    # (2, Ccat): [sum; sumsq]
    inv_m = 1.0 / float(m_valid)
    mean = stats[0:1, :] * inv_m
    var = stats[1:2, :] * inv_m - mean * mean
    scale = gamma_ref[...] * jax.lax.rsqrt(var + EPS)
    shift = beta_ref[...] - mean * scale

    norm = conv_ref[...] * scale + shift      # (TM, Ccat), BN of both branches
    main = jnp.maximum(norm[:, :nch], 0.0)    # conv1 branch after BN + ReLU
    ds = norm[:, nch:]                        # downsample branch after BN

    y = jnp.dot(main.astype(mxu_dtype), w2_ref[...].astype(mxu_dtype),
                preferred_element_type=jnp.float32) + b2_ref[...]
    o_ref[...] = jnp.maximum(ds + y, 0.0)


def resid_block_forward_nlc(x_nlc, p, *, stride, mxu_dtype=jnp.float32,
                            tile_m=512):
    """One ResidBlock. x_nlc: (B, L, Nin) channels-last. Returns (B, L_out, Nout)."""
    B, L, Nin = x_nlc.shape
    L_out = (L - 1) // stride + 1             # kernel=3, pad=1
    NCh, Nout = p["w2"].shape
    Ccat = NCh + Nout
    K3 = 3 * Nin

    # im2col (3 taps, stride folded into the slice) -> flat (M, 3*Nin) matmul LHS.
    xp = jnp.pad(x_nlc, ((0, 0), (1, 1), (0, 0)))
    taps = [xp[:, k: k + stride * (L_out - 1) + 1: stride, :] for k in range(3)]
    xcol = jnp.concatenate(taps, axis=-1).reshape(B * L_out, K3)

    M = B * L_out
    TM = min(tile_m, _round_up(M, 8))
    M_pad = _round_up(M, TM)
    if M_pad != M:
        xcol = jnp.pad(xcol, ((0, M_pad - M), (0, 0)))
    n_tiles = M_pad // TM

    conv_cat, stats = pl.pallas_call(
        functools.partial(_conv_stats_kernel, m_valid=M, tile_m=TM,
                          mxu_dtype=mxu_dtype),
        grid=(n_tiles,),
        in_specs=[
            pl.BlockSpec((TM, K3), lambda i: (i, 0)),
            pl.BlockSpec((K3, Ccat), lambda i: (0, 0)),
            pl.BlockSpec((1, Ccat), lambda i: (0, 0)),
        ],
        out_specs=(
            pl.BlockSpec((TM, Ccat), lambda i: (i, 0)),
            pl.BlockSpec((2, Ccat), lambda i: (0, 0)),     # resident stats acc
        ),
        out_shape=(
            jax.ShapeDtypeStruct((M_pad, Ccat), jnp.float32),
            jax.ShapeDtypeStruct((2, Ccat), jnp.float32),
        ),
        compiler_params=pltpu.CompilerParams(
            dimension_semantics=("arbitrary",),            # stats reduction axis
            vmem_limit_bytes=_VMEM_LIMIT_BYTES),
    )(xcol, p["wcat"], p["bcat"])

    out_flat = pl.pallas_call(
        functools.partial(_bn_conv2_residual_kernel, m_valid=M, nch=NCh,
                          mxu_dtype=mxu_dtype),
        grid=(n_tiles,),
        in_specs=[
            pl.BlockSpec((TM, Ccat), lambda i: (i, 0)),
            pl.BlockSpec((2, Ccat), lambda i: (0, 0)),
            pl.BlockSpec((NCh, Nout), lambda i: (0, 0)),
            pl.BlockSpec((1, Nout), lambda i: (0, 0)),
            pl.BlockSpec((1, Ccat), lambda i: (0, 0)),
            pl.BlockSpec((1, Ccat), lambda i: (0, 0)),
        ],
        out_specs=pl.BlockSpec((TM, Nout), lambda i: (i, 0)),
        out_shape=jax.ShapeDtypeStruct((M_pad, Nout), jnp.float32),
        compiler_params=pltpu.CompilerParams(
            dimension_semantics=("parallel",),             # megacore on v7x
            vmem_limit_bytes=_VMEM_LIMIT_BYTES),
    )(conv_cat, stats, p["w2"], p["b2"], p["gamma_cat"], p["beta_cat"])

    return out_flat[:M].reshape(B, L_out, Nout)


# --------------------------------------------------------------------------
# Head: AdaptiveAvgPool1d (as a constant matrix) -> Linear -> softmax
# --------------------------------------------------------------------------
def _head_kernel(xflat_ref, pool_ref, wfc_ref, bfc_ref, o_ref):
    pooled = jnp.dot(xflat_ref[...], pool_ref[...],
                     preferred_element_type=jnp.float32)
    logits = jnp.dot(pooled, wfc_ref[...],
                     preferred_element_type=jnp.float32) + bfc_ref[...]
    m = jnp.max(logits, axis=-1, keepdims=True)
    e = jnp.exp(logits - m)
    o_ref[...] = e / jnp.sum(e, axis=-1, keepdims=True)


def adaptive_avg_pool_matrix(l_in, l_out):
    """Exact nn.AdaptiveAvgPool1d(l_out) as an (l_in, l_out) averaging matrix."""
    m = np.zeros((l_in, l_out), np.float32)
    for i in range(l_out):
        start = (i * l_in) // l_out
        end = -(-((i + 1) * l_in) // l_out)   # ceil
        m[start:end, i] = 1.0 / (end - start)
    return jnp.asarray(m)


def head_forward(xflat, pool_mat, wfc, bfc):
    B = xflat.shape[0]
    dsize = wfc.shape[1]
    vmem = pl.BlockSpec(memory_space=pltpu.MemorySpace.VMEM)
    return pl.pallas_call(
        _head_kernel,
        out_shape=jax.ShapeDtypeStruct((B, dsize), jnp.float32),
        in_specs=[vmem] * 4,
        out_specs=vmem,
        compiler_params=pltpu.CompilerParams(
            vmem_limit_bytes=_VMEM_LIMIT_BYTES),
    )(xflat, pool_mat, wfc, bfc)


# --------------------------------------------------------------------------
# Full ResidNN forward
# --------------------------------------------------------------------------
def residnn_forward(x_ncl, params, *, strides, pool_out,
                    mxu_dtype=jnp.float32):
    """x_ncl: (B, Nin, L) in PyTorch NCL layout -> (B, 1, dsize) softmax probs."""
    x = jnp.transpose(x_ncl, (0, 2, 1))       # NCL -> NLC once for the whole net
    for pi, part in enumerate(params["blocks"]):
        for bi, blk in enumerate(part):
            s = strides[pi] if bi == 0 else 1
            x = resid_block_forward_nlc(x, blk, stride=s, mxu_dtype=mxu_dtype)
    x_ncl_out = jnp.transpose(x, (0, 2, 1))   # back to NCL for x.view(B, 1, -1)
    B, C, Lf = x_ncl_out.shape
    xflat = x_ncl_out.reshape(B, C * Lf)
    pool_mat = adaptive_avg_pool_matrix(C * Lf, pool_out)
    probs = head_forward(xflat, pool_mat, params["wfc"], params["bfc"])
    return probs.reshape(B, 1, -1)


# --------------------------------------------------------------------------
# Synthetic parameters (shapes mirror the PyTorch module; conv weights stored
# channels-last and pre-fused into the kernel layout)
# --------------------------------------------------------------------------
def init_residblock_params(key, Nin, Nout, NCh):
    assert NCh == Nout, "ResidBlock forward requires NCh == Nout (bn1 features)"
    ks = jax.random.split(key, 8)
    w1 = 0.3 * jax.random.normal(ks[0], (3, Nin, NCh), jnp.float32)
    b1 = 0.1 * jax.random.normal(ks[1], (1, NCh), jnp.float32)
    w2 = 0.3 * jax.random.normal(ks[2], (NCh, Nout), jnp.float32)   # k=1 conv
    b2 = 0.1 * jax.random.normal(ks[3], (1, Nout), jnp.float32)
    wd = 0.3 * jax.random.normal(ks[4], (3, Nin, Nout), jnp.float32)
    bd = 0.1 * jax.random.normal(ks[5], (1, Nout), jnp.float32)
    gamma = 1.0 + 0.1 * jax.random.normal(ks[6], (1, Nout), jnp.float32)
    beta = 0.1 * jax.random.normal(ks[7], (1, Nout), jnp.float32)
    # fused kernel layout: [conv1 | downsample] along the output-channel axis
    wcat = jnp.concatenate([w1, wd], axis=-1).reshape(3 * Nin, NCh + Nout)
    bcat = jnp.concatenate([b1, bd], axis=-1)
    gamma_cat = jnp.concatenate([gamma, gamma], axis=-1)   # shared bn1 affine
    beta_cat = jnp.concatenate([beta, beta], axis=-1)
    return dict(w1=w1, b1=b1, w2=w2, b2=b2, wd=wd, bd=bd, gamma=gamma, beta=beta,
                wcat=wcat, bcat=bcat, gamma_cat=gamma_cat, beta_cat=beta_cat)


def init_residnn_params(key, *, Nin, part_chs, Nblk, strides, dsize):
    keys = jax.random.split(key, len(part_chs) * Nblk + 2)
    blocks, ki, cin = [], 0, Nin
    for pc in part_chs:
        part = []
        for bi in range(Nblk):
            n_in = cin if bi == 0 else pc
            part.append(init_residblock_params(keys[ki], n_in, pc, pc))
            ki += 1
        blocks.append(part)
        cin = pc
    downscale = int(np.prod(strides))
    P = dsize * downscale
    wfc = 0.3 * jax.random.normal(keys[ki], (P, dsize), jnp.float32)
    bfc = 0.1 * jax.random.normal(keys[ki + 1], (1, dsize), jnp.float32)
    return dict(blocks=blocks, wfc=wfc, bfc=bfc)


# --------------------------------------------------------------------------
# Pure-JAX reference (PyTorch-style math; no Pallas) for correctness checking
# --------------------------------------------------------------------------
def _ref_block(x_nlc, p, stride):
    B, L, Nin = x_nlc.shape
    L_out = (L - 1) // stride + 1
    xp = jnp.pad(x_nlc, ((0, 0), (1, 1), (0, 0)))

    def conv3(w, b):
        acc = jnp.zeros((B, L_out, w.shape[2]), jnp.float32)
        for k in range(3):
            xs = xp[:, k: k + stride * (L_out - 1) + 1: stride, :]
            acc = acc + jnp.einsum("blc,co->blo", xs, w[k])
        return acc + b

    def bn(y):
        m = jnp.mean(y, axis=(0, 1), keepdims=True)
        v = jnp.mean((y - m) ** 2, axis=(0, 1), keepdims=True)
        return (y - m) / jnp.sqrt(v + EPS) * p["gamma"] + p["beta"]

    y = jnp.maximum(bn(conv3(p["w1"], p["b1"])), 0.0)
    y = jnp.einsum("blc,co->blo", y, p["w2"]) + p["b2"]
    ds = bn(conv3(p["wd"], p["bd"]))
    return jnp.maximum(ds + y, 0.0)


def residnn_reference(x_ncl, params, *, strides, pool_out):
    x = jnp.transpose(x_ncl, (0, 2, 1))
    for pi, part in enumerate(params["blocks"]):
        for bi, blk in enumerate(part):
            s = strides[pi] if bi == 0 else 1
            x = _ref_block(x, blk, s)
    x_ncl_out = jnp.transpose(x, (0, 2, 1))
    B, C, Lf = x_ncl_out.shape
    xflat = x_ncl_out.reshape(B, C * Lf)
    pooled = xflat @ adaptive_avg_pool_matrix(C * Lf, pool_out)
    logits = pooled @ params["wfc"] + params["bfc"]
    return jax.nn.softmax(logits, axis=-1).reshape(B, 1, -1)


if __name__ == "__main__":
    key = jax.random.PRNGKey(0)
    kx, kp = jax.random.split(key)

    # ResidNN(dsize=8, Nin=1, part_chs=[16,32,64], Nblk_per_part=3), input L=16
    B, Nin, L = 2, 1, 16
    part_chs = [16, 32, 64]
    Nblk = 3
    strides = (1, 2, 2)
    dsize = 8
    pool_out = dsize * int(np.prod(strides))   # dsize * downscale

    x = jax.random.normal(kx, (B, Nin, L), jnp.float32)
    params = init_residnn_params(kp, Nin=Nin, part_chs=part_chs, Nblk=Nblk,
                                 strides=strides, dsize=dsize)

    fwd_f32 = jax.jit(functools.partial(
        residnn_forward, strides=strides, pool_out=pool_out,
        mxu_dtype=jnp.float32))
    out = jax.block_until_ready(fwd_f32(x, params))

    ref = residnn_reference(x, params, strides=strides, pool_out=pool_out)
    np.testing.assert_allclose(np.asarray(out), np.asarray(ref),
                               rtol=5e-4, atol=1e-5)

    # Exercise the bf16-MXU variant (recommended on v6e/v7x); f32 accumulation,
    # checked for finiteness only (numerics validated by the f32 path above).
    fwd_bf16 = jax.jit(functools.partial(
        residnn_forward, strides=strides, pool_out=pool_out,
        mxu_dtype=jnp.bfloat16))
    out_bf16 = jax.block_until_ready(fwd_bf16(x, params))
    assert bool(jnp.all(jnp.isfinite(out_bf16)))

    print("KERNEL_OK")
</pallas_src>

<mosaic_0001>
module attributes {stable_mosaic.version = 11 : i64} {
  func.func @_bn_conv2_residual_kernel(%arg0: i32, %arg1: memref<32x32xf32, #tpu.memory_space<vmem>>, %arg2: memref<2x32xf32, #tpu.memory_space<vmem>>, %arg3: memref<16x16xf32, #tpu.memory_space<vmem>>, %arg4: memref<1x16xf32, #tpu.memory_space<vmem>>, %arg5: memref<1x32xf32, #tpu.memory_space<vmem>>, %arg6: memref<1x32xf32, #tpu.memory_space<vmem>>, %arg7: memref<32x16xf32, #tpu.memory_space<vmem>>) attributes {dimension_semantics = [#tpu.dimension_semantics<parallel>], iteration_bounds = array<i64: 1>, scalar_prefetch = 0 : i64, scratch_operands = 0 : i64, tpu.core_type = #tpu.core_type<tc>, window_params = [{transform_indices = @transform_0, window_bounds = array<i64: 32, 32>}, {pipeline_mode = #tpu.pipeline_mode<synchronous>, transform_indices = @transform_1, window_bounds = array<i64: 2, 32>}, {pipeline_mode = #tpu.pipeline_mode<synchronous>, transform_indices = @transform_2, window_bounds = array<i64: 16, 16>}, {pipeline_mode = #tpu.pipeline_mode<synchronous>, transform_indices = @transform_3, window_bounds = array<i64: 1, 16>}, {pipeline_mode = #tpu.pipeline_mode<synchronous>, transform_indices = @transform_4, window_bounds = array<i64: 1, 32>}, {pipeline_mode = #tpu.pipeline_mode<synchronous>, transform_indices = @transform_5, window_bounds = array<i64: 1, 32>}, {transform_indices = @transform_6, window_bounds = array<i64: 32, 16>}]} {
    %c0 = arith.constant 0 : index
    %c0_0 = arith.constant 0 : index
    %0 = vector.load %arg2[%c0, %c0_0] : memref<2x32xf32, #tpu.memory_space<vmem>>, vector<2x32xf32>
    %1 = vector.extract_strided_slice %0 {offsets = [0, 0], sizes = [1, 32], strides = [1, 1]} : vector<2x32xf32> to vector<1x32xf32>
    %cst = arith.constant 3.125000e-02 : f32
    %2 = vector.broadcast %cst : f32 to vector<1x32xf32>
    %3 = arith.mulf %1, %2 : vector<1x32xf32>
    %4 = vector.extract_strided_slice %0 {offsets = [1, 0], sizes = [1, 32], strides = [1, 1]} : vector<2x32xf32> to vector<1x32xf32>
    %cst_1 = arith.constant 3.125000e-02 : f32
    %5 = vector.broadcast %cst_1 : f32 to vector<1x32xf32>
    %6 = arith.mulf %4, %5 : vector<1x32xf32>
    %7 = arith.mulf %3, %3 : vector<1x32xf32>
    %8 = arith.subf %6, %7 : vector<1x32xf32>
    %c0_2 = arith.constant 0 : index
    %c0_3 = arith.constant 0 : index
    %9 = vector.load %arg5[%c0_2, %c0_3] : memref<1x32xf32, #tpu.memory_space<vmem>>, vector<1x32xf32>
    %cst_4 = arith.constant 9.99999974E-6 : f32
    %10 = vector.broadcast %cst_4 : f32 to vector<1x32xf32>
    %11 = arith.addf %8, %10 : vector<1x32xf32>
    %12 = math.rsqrt %11 : vector<1x32xf32>
    %13 = arith.mulf %9, %12 : vector<1x32xf32>
    %c0_5 = arith.constant 0 : index
    %c0_6 = arith.constant 0 : index
    %14 = vector.load %arg6[%c0_5, %c0_6] : memref<1x32xf32, #tpu.memory_space<vmem>>, vector<1x32xf32>
    %15 = arith.mulf %3, %13 : vector<1x32xf32>
    %16 = arith.subf %14, %15 : vector<1x32xf32>
    %c0_7 = arith.constant 0 : index
    %c0_8 = arith.constant 0 : index
    %17 = vector.load %arg1[%c0_7, %c0_8] : memref<32x32xf32, #tpu.memory_space<vmem>>, vector<32x32xf32>
    %18 = vector.broadcast %13 : vector<1x32xf32> to vector<32x32xf32>
    %19 = arith.mulf %17, %18 : vector<32x32xf32>
    %20 = vector.broadcast %16 : vector<1x32xf32> to vector<32x32xf32>
    %21 = arith.addf %19, %20 : vector<32x32xf32>
    %22 = vector.extract_strided_slice %21 {offsets = [0, 0], sizes = [32, 16], strides = [1, 1]} : vector<32x32xf32> to vector<32x16xf32>
    %cst_9 = arith.constant 0.000000e+00 : f32
    %23 = vector.broadcast %cst_9 : f32 to vector<32x16xf32>
    %24 = arith.maximumf %22, %23 : vector<32x16xf32>
    %25 = vector.extract_strided_slice %21 {offsets = [0, 16], sizes = [32, 16], strides = [1, 1]} : vector<32x32xf32> to vector<32x16xf32>
    %c0_10 = arith.constant 0 : index
    %c0_11 = arith.constant 0 : index
    %26 = vector.load %arg3[%c0_10, %c0_11] : memref<16x16xf32, #tpu.memory_space<vmem>>, vector<16x16xf32>
    %cst_12 = arith.constant dense<0.000000e+00> : vector<32x16xf32>
    %27 = tpu.matmul %24, %26, %cst_12 {dimension_numbers = #tpu.dot_dimension_numbers<[1], [0], [0], [1], [0, 0, 1, 1], [], []>} : vector<32x16xf32>, vector<16x16xf32>, vector<32x16xf32> -> vector<32x16xf32>
    %c0_13 = arith.constant 0 : index
    %c0_14 = arith.constant 0 : index
    %28 = vector.load %arg4[%c0_13, %c0_14] : memref<1x16xf32, #tpu.memory_space<vmem>>, vector<1x16xf32>
    %29 = vector.broadcast %28 : vector<1x16xf32> to vector<32x16xf32>
    %30 = arith.addf %27, %29 : vector<32x16xf32>
    %31 = arith.addf %25, %30 : vector<32x16xf32>
    %cst_15 = arith.constant 0.000000e+00 : f32
    %32 = vector.broadcast %cst_15 : f32 to vector<32x16xf32>
    %33 = arith.maximumf %31, %32 : vector<32x16xf32>
    %c0_16 = arith.constant 0 : index
    %c0_17 = arith.constant 0 : index
    %34 = vector.load %arg7[%c0_16, %c0_17] : memref<32x16xf32, #tpu.memory_space<vmem>>, vector<32x16xf32>
    tpu.vector_store %arg7[%c0_16, %c0_17], %33 {strides = array<i32>} : memref<32x16xf32, #tpu.memory_space<vmem>>, vector<32x16xf32>,
    return
  }
  func.func @transform_0(%arg0: i32) -> (i32, i32) {
    %c0_i32 = arith.constant 0 : i32
    %c0_i32_0 = arith.constant 0 : i32
    return %arg0, %c0_i32 : i32, i32
  }
  func.func @transform_1(%arg0: i32) -> (i32, i32) {
    %c0_i32 = arith.constant 0 : i32
    %c0_i32_0 = arith.constant 0 : i32
    %c0_i32_1 = arith.constant 0 : i32
    return %c0_i32, %c0_i32_0 : i32, i32
  }
  func.func @transform_2(%arg0: i32) -> (i32, i32) {
    %c0_i32 = arith.constant 0 : i32
    %c0_i32_0 = arith.constant 0 : i32
    %c0_i32_1 = arith.constant 0 : i32
    return %c0_i32, %c0_i32_0 : i32, i32
  }
  func.func @transform_3(%arg0: i32) -> (i32, i32) {
    %c0_i32 = arith.constant 0 : i32
    %c0_i32_0 = arith.constant 0 : i32
    %c0_i32_1 = arith.constant 0 : i32
    return %c0_i32, %c0_i32_0 : i32, i32
  }
  func.func @transform_4(%arg0: i32) -> (i32, i32) {
    %c0_i32 = arith.constant 0 : i32
    %c0_i32_0 = arith.constant 0 : i32
    %c0_i32_1 = arith.constant 0 : i32
    return %c0_i32, %c0_i32_0 : i32, i32
  }
  func.func @transform_5(%arg0: i32) -> (i32, i32) {
    %c0_i32 = arith.constant 0 : i32
    %c0_i32_0 = arith.constant 0 : i32
    %c0_i32_1 = arith.constant 0 : i32
    return %c0_i32, %c0_i32_0 : i32, i32
  }
  func.func @transform_6(%arg0: i32) -> (i32, i32) {
    %c0_i32 = arith.constant 0 : i32
    %c0_i32_0 = arith.constant 0 : i32
    return %arg0, %c0_i32 : i32, i32
  }
}

module attributes {stable_mosaic.version = 11 : i64} {
  func.func @_conv_stats_kernel(%arg0: i32, %arg1: memref<32x3xf32, #tpu.memory_space<vmem>>, %arg2: memref<3x32xf32, #tpu.memory_space<vmem>>, %arg3: memref<1x32xf32, #tpu.memory_space<vmem>>, %arg4: memref<32x32xf32, #tpu.memory_space<vmem>>, %arg5: memref<2x32xf32, #tpu.memory_space<vmem>>) attributes {dimension_semantics = [#tpu.dimension_semantics<arbitrary>], iteration_bounds = array<i64: 1>, scalar_prefetch = 0 : i64, scratch_operands = 0 : i64, tpu.core_type = #tpu.core_type<tc>, window_params = [{transform_indices = @transform_0, window_bounds = array<i64: 32, 3>}, {pipeline_mode = #tpu.pipeline_mode<synchronous>, transform_indices = @transform_1, window_bounds = array<i64: 3, 32>}, {pipeline_mode = #tpu.pipeline_mode<synchronous>, transform_indices = @transform_2, window_bounds = array<i64: 1, 32>}, {transform_indices = @transform_3, window_bounds = array<i64: 32, 32>}, {pipeline_mode = #tpu.pipeline_mode<synchronous>, transform_indices = @transform_4, window_bounds = array<i64: 2, 32>}]} {
    %c0 = arith.constant 0 : index
    %c0_0 = arith.constant 0 : index
    %0 = vector.load %arg1[%c0, %c0_0] : memref<32x3xf32, #tpu.memory_space<vmem>>, vector<32x3xf32>
    %c0_1 = arith.constant 0 : index
    %c0_2 = arith.constant 0 : index
    %1 = vector.load %arg2[%c0_1, %c0_2] : memref<3x32xf32, #tpu.memory_space<vmem>>, vector<3x32xf32>
    %cst = arith.constant dense<0.000000e+00> : vector<32x32xf32>
    %2 = tpu.matmul %0, %1, %cst {dimension_numbers = #tpu.dot_dimension_numbers<[1], [0], [0], [1], [0, 0, 1, 1], [], []>} : vector<32x3xf32>, vector<3x32xf32>, vector<32x32xf32> -> vector<32x32xf32>
    %c0_3 = arith.constant 0 : index
    %c0_4 = arith.constant 0 : index
    %3 = vector.load %arg3[%c0_3, %c0_4] : memref<1x32xf32, #tpu.memory_space<vmem>>, vector<1x32xf32>
    %4 = vector.broadcast %3 : vector<1x32xf32> to vector<32x32xf32>
    %5 = arith.addf %2, %4 : vector<32x32xf32>
    %c0_5 = arith.constant 0 : index
    %c0_6 = arith.constant 0 : index
    %6 = vector.load %arg4[%c0_5, %c0_6] : memref<32x32xf32, #tpu.memory_space<vmem>>, vector<32x32xf32>
    tpu.vector_store %arg4[%c0_5, %c0_6], %5 {strides = array<i32>} : memref<32x32xf32, #tpu.memory_space<vmem>>, vector<32x32xf32>,
    %7 = tpu.iota {dimensions = array<i32: 0>} : vector<32x1xi32>
    %c32_i32 = arith.constant 32 : i32
    %8 = arith.muli %arg0, %c32_i32 : i32
    %9 = vector.broadcast %8 : i32 to vector<32x1xi32>
    %10 = arith.addi %7, %9 : vector<32x1xi32>
    %c32_i32_7 = arith.constant 32 : i32
    %11 = vector.broadcast %c32_i32_7 : i32 to vector<32x1xi32>
    %12 = arith.cmpi slt, %10, %11 : vector<32x1xi32>
    %13 = arith.extui %12 : vector<32x1xi1> to vector<32x1xi32>
    %14 = arith.sitofp %13 : vector<32x1xi32> to vector<32x1xf32>
    %15 = vector.broadcast %14 : vector<32x1xf32> to vector<32x32xf32>
    %16 = arith.mulf %5, %15 : vector<32x32xf32>
    %cst_8 = arith.constant dense<0.000000e+00> : vector<32xf32>
    %17 = vector.multi_reduction <add>, %16, %cst_8 [0] : vector<32x32xf32> to vector<32xf32>
    %18 = vector.shape_cast %17 : vector<32xf32> to vector<1x32xf32>
    %19 = arith.mulf %16, %16 : vector<32x32xf32>
    %cst_9 = arith.constant dense<0.000000e+00> : vector<32xf32>
    %20 = vector.multi_reduction <add>, %19, %cst_9 [0] : vector<32x32xf32> to vector<32xf32>
    %21 = vector.shape_cast %20 : vector<32xf32> to vector<1x32xf32>
    %c0_i32 = arith.constant 0 : i32
    %22 = arith.cmpi eq, %arg0, %c0_i32 : i32
    %23 = arith.extui %22 : i1 to i32
    %c0_i32_10 = arith.constant 0 : i32
    %24 = arith.cmpi ne, %23, %c0_i32_10 : i32
    scf.if %24 {
      %cst_15 = arith.constant 0.000000e+00 : f32
      %29 = vector.broadcast %cst_15 : f32 to vector<2x32xf32>
      %c0_16 = arith.constant 0 : index
      %c0_17 = arith.constant 0 : index
      %30 = vector.load %arg5[%c0_16, %c0_17] : memref<2x32xf32, #tpu.memory_space<vmem>>, vector<2x32xf32>
      tpu.vector_store %arg5[%c0_16, %c0_17], %29 {strides = array<i32>} : memref<2x32xf32, #tpu.memory_space<vmem>>, vector<2x32xf32>,
    } else {
    }
    %c0_11 = arith.constant 0 : index
    %c0_12 = arith.constant 0 : index
    %25 = vector.load %arg5[%c0_11, %c0_12] : memref<2x32xf32, #tpu.memory_space<vmem>>, vector<2x32xf32>
    %26 = tpu.concatenate %18, %21 in 0 : vector<1x32xf32>, vector<1x32xf32> -> vector<2x32xf32>
    %27 = arith.addf %25, %26 : vector<2x32xf32>
    %c0_13 = arith.constant 0 : index
    %c0_14 = arith.constant 0 : index
    %28 = vector.load %arg5[%c0_13, %c0_14] : memref<2x32xf32, #tpu.memory_space<vmem>>, vector<2x32xf32>
    tpu.vector_store %arg5[%c0_13, %c0_14], %27 {strides = array<i32>} : memref<2x32xf32, #tpu.memory_space<vmem>>, vector<2x32xf32>,
    return
  }
  func.func @transform_0(%arg0: i32) -> (i32, i32) {
    %c0_i32 = arith.constant 0 : i32
    %c0_i32_0 = arith.constant 0 : i32
    return %arg0, %c0_i32 : i32, i32
  }
  func.func @transform_1(%arg0: i32) -> (i32, i32) {
    %c0_i32 = arith.constant 0 : i32
    %c0_i32_0 = arith.constant 0 : i32
    %c0_i32_1 = arith.constant 0 : i32
    return %c0_i32, %c0_i32_0 : i32, i32
  }
  func.func @transform_2(%arg0: i32) -> (i32, i32) {
    %c0_i32 = arith.constant 0 : i32
    %c0_i32_0 = arith.constant 0 : i32
    %c0_i32_1 = arith.constant 0 : i32
    return %c0_i32, %c0_i32_0 : i32, i32
  }
  func.func @transform_3(%arg0: i32) -> (i32, i32) {
    %c0_i32 = arith.constant 0 : i32
    %c0_i32_0 = arith.constant 0 : i32
    return %arg0, %c0_i32 : i32, i32
  }
  func.func @transform_4(%arg0: i32) -> (i32, i32) {
    %c0_i32 = arith.constant 0 : i32
    %c0_i32_0 = arith.constant 0 : i32
    %c0_i32_1 = arith.constant 0 : i32
    return %c0_i32, %c0_i32_0 : i32, i32
  }
}

module attributes {stable_mosaic.version = 11 : i64} {
  func.func @_conv_stats_kernel(%arg0: i32, %arg1: memref<32x48xf32, #tpu.memory_space<vmem>>, %arg2: memref<48x32xf32, #tpu.memory_space<vmem>>, %arg3: memref<1x32xf32, #tpu.memory_space<vmem>>, %arg4: memref<32x32xf32, #tpu.memory_space<vmem>>, %arg5: memref<2x32xf32, #tpu.memory_space<vmem>>) attributes {dimension_semantics = [#tpu.dimension_semantics<arbitrary>], iteration_bounds = array<i64: 1>, scalar_prefetch = 0 : i64, scratch_operands = 0 : i64, tpu.core_type = #tpu.core_type<tc>, window_params = [{transform_indices = @transform_0, window_bounds = array<i64: 32, 48>}, {pipeline_mode = #tpu.pipeline_mode<synchronous>, transform_indices = @transform_1, window_bounds = array<i64: 48, 32>}, {pipeline_mode = #tpu.pipeline_mode<synchronous>, transform_indices = @transform_2, window_bounds = array<i64: 1, 32>}, {transform_indices = @transform_3, window_bounds = array<i64: 32, 32>}, {pipeline_mode = #tpu.pipeline_mode<synchronous>, transform_indices = @transform_4, window_bounds = array<i64: 2, 32>}]} {
    %c0 = arith.constant 0 : index
    %c0_0 = arith.constant 0 : index
    %0 = vector.load %arg1[%c0, %c0_0] : memref<32x48xf32, #tpu.memory_space<vmem>>, vector<32x48xf32>
    %c0_1 = arith.constant 0 : index
    %c0_2 = arith.constant 0 : index
    %1 = vector.load %arg2[%c0_1, %c0_2] : memref<48x32xf32, #tpu.memory_space<vmem>>, vector<48x32xf32>
    %cst = arith.constant dense<0.000000e+00> : vector<32x32xf32>
    %2 = tpu.matmul %0, %1, %cst {dimension_numbers = #tpu.dot_dimension_numbers<[1], [0], [0], [1], [0, 0, 1, 1], [], []>} : vector<32x48xf32>, vector<48x32xf32>, vector<32x32xf32> -> vector<32x32xf32>
    %c0_3 = arith.constant 0 : index
    %c0_4 = arith.constant 0 : index
    %3 = vector.load %arg3[%c0_3, %c0_4] : memref<1x32xf32, #tpu.memory_space<vmem>>, vector<1x32xf32>
    %4 = vector.broadcast %3 : vector<1x32xf32> to vector<32x32xf32>
    %5 = arith.addf %2, %4 : vector<32x32xf32>
    %c0_5 = arith.constant 0 : index
    %c0_6 = arith.constant 0 : index
    %6 = vector.load %arg4[%c0_5, %c0_6] : memref<32x32xf32, #tpu.memory_space<vmem>>, vector<32x32xf32>
    tpu.vector_store %arg4[%c0_5, %c0_6], %5 {strides = array<i32>} : memref<32x32xf32, #tpu.memory_space<vmem>>, vector<32x32xf32>,
    %7 = tpu.iota {dimensions = array<i32: 0>} : vector<32x1xi32>
    %c32_i32 = arith.constant 32 : i32
    %8 = arith.muli %arg0, %c32_i32 : i32
    %9 = vector.broadcast %8 : i32 to vector<32x1xi32>
    %10 = arith.addi %7, %9 : vector<32x1xi32>
    %c32_i32_7 = arith.constant 32 : i32
    %11 = vector.broadcast %c32_i32_7 : i32 to vector<32x1xi32>
    %12 = arith.cmpi slt, %10, %11 : vector<32x1xi32>
    %13 = arith.extui %12 : vector<32x1xi1> to vector<32x1xi32>
    %14 = arith.sitofp %13 : vector<32x1xi32> to vector<32x1xf32>
    %15 = vector.broadcast %14 : vector<32x1xf32> to vector<32x32xf32>
    %16 = arith.mulf %5, %15 : vector<32x32xf32>
    %cst_8 = arith.constant dense<0.000000e+00> : vector<32xf32>
    %17 = vector.multi_reduction <add>, %16, %cst_8 [0] : vector<32x32xf32> to vector<32xf32>
    %18 = vector.shape_cast %17 : vector<32xf32> to vector<1x32xf32>
    %19 = arith.mulf %16, %16 : vector<32x32xf32>
    %cst_9 = arith.constant dense<0.000000e+00> : vector<32xf32>
    %20 = vector.multi_reduction <add>, %19, %cst_9 [0] : vector<32x32xf32> to vector<32xf32>
    %21 = vector.shape_cast %20 : vector<32xf32> to vector<1x32xf32>
    %c0_i32 = arith.constant 0 : i32
    %22 = arith.cmpi eq, %arg0, %c0_i32 : i32
    %23 = arith.extui %22 : i1 to i32
    %c0_i32_10 = arith.constant 0 : i32
    %24 = arith.cmpi ne, %23, %c0_i32_10 : i32
    scf.if %24 {
      %cst_15 = arith.constant 0.000000e+00 : f32
      %29 = vector.broadcast %cst_15 : f32 to vector<2x32xf32>
      %c0_16 = arith.constant 0 : index
      %c0_17 = arith.constant 0 : index
      %30 = vector.load %arg5[%c0_16, %c0_17] : memref<2x32xf32, #tpu.memory_space<vmem>>, vector<2x32xf32>
      tpu.vector_store %arg5[%c0_16, %c0_17], %29 {strides = array<i32>} : memref<2x32xf32, #tpu.memory_space<vmem>>, vector<2x32xf32>,
    } else {
    }
    %c0_11 = arith.constant 0 : index
    %c0_12 = arith.constant 0 : index
    %25 = vector.load %arg5[%c0_11, %c0_12] : memref<2x32xf32, #tpu.memory_space<vmem>>, vector<2x32xf32>
    %26 = tpu.concatenate %18, %21 in 0 : vector<1x32xf32>, vector<1x32xf32> -> vector<2x32xf32>
    %27 = arith.addf %25, %26 : vector<2x32xf32>
    %c0_13 = arith.constant 0 : index
    %c0_14 = arith.constant 0 : index
    %28 = vector.load %arg5[%c0_13, %c0_14] : memref<2x32xf32, #tpu.memory_space<vmem>>, vector<2x32xf32>
    tpu.vector_store %arg5[%c0_13, %c0_14], %27 {strides = array<i32>} : memref<2x32xf32, #tpu.memory_space<vmem>>, vector<2x32xf32>,
    return
  }
  func.func @transform_0(%arg0: i32) -> (i32, i32) {
    %c0_i32 = arith.constant 0 : i32
    %c0_i32_0 = arith.constant 0 : i32
    return %arg0, %c0_i32 : i32, i32
  }
  func.func @transform_1(%arg0: i32) -> (i32, i32) {
    %c0_i32 = arith.constant 0 : i32
    %c0_i32_0 = arith.constant 0 : i32
    %c0_i32_1 = arith.constant 0 : i32
    return %c0_i32, %c0_i32_0 : i32, i32
  }
  func.func @transform_2(%arg0: i32) -> (i32, i32) {
    %c0_i32 = arith.constant 0 : i32
    %c0_i32_0 = arith.constant 0 : i32
    %c0_i32_1 = arith.constant 0 : i32
    return %c0_i32, %c0_i32_0 : i32, i32
  }
  func.func @transform_3(%arg0: i32) -> (i32, i32) {
    %c0_i32 = arith.constant 0 : i32
    %c0_i32_0 = arith.constant 0 : i32
    return %arg0, %c0_i32 : i32, i32
  }
  func.func @transform_4(%arg0: i32) -> (i32, i32) {
    %c0_i32 = arith.constant 0 : i32
    %c0_i32_0 = arith.constant 0 : i32
    %c0_i32_1 = arith.constant 0 : i32
    return %c0_i32, %c0_i32_0 : i32, i32
  }
}

module attributes {stable_mosaic.version = 11 : i64} {
  func.func @_conv_stats_kernel(%arg0: i32, %arg1: memref<16x48xf32, #tpu.memory_space<vmem>>, %arg2: memref<48x64xf32, #tpu.memory_space<vmem>>, %arg3: memref<1x64xf32, #tpu.memory_space<vmem>>, %arg4: memref<16x64xf32, #tpu.memory_space<vmem>>, %arg5: memref<2x64xf32, #tpu.memory_space<vmem>>) attributes {dimension_semantics = [#tpu.dimension_semantics<arbitrary>], iteration_bounds = array<i64: 1>, scalar_prefetch = 0 : i64, scratch_operands = 0 : i64, tpu.core_type = #tpu.core_type<tc>, window_params = [{transform_indices = @transform_0, window_bounds = array<i64: 16, 48>}, {pipeline_mode = #tpu.pipeline_mode<synchronous>, transform_indices = @transform_1, window_bounds = array<i64: 48, 64>}, {pipeline_mode = #tpu.pipeline_mode<synchronous>, transform_indices = @transform_2, window_bounds = array<i64: 1, 64>}, {transform_indices = @transform_3, window_bounds = array<i64: 16, 64>}, {pipeline_mode = #tpu.pipeline_mode<synchronous>, transform_indices = @transform_4, window_bounds = array<i64: 2, 64>}]} {
    %c0 = arith.constant 0 : index
    %c0_0 = arith.constant 0 : index
    %0 = vector.load %arg1[%c0, %c0_0] : memref<16x48xf32, #tpu.memory_space<vmem>>, vector<16x48xf32>
    %c0_1 = arith.constant 0 : index
    %c0_2 = arith.constant 0 : index
    %1 = vector.load %arg2[%c0_1, %c0_2] : memref<48x64xf32, #tpu.memory_space<vmem>>, vector<48x64xf32>
    %cst = arith.constant dense<0.000000e+00> : vector<16x64xf32>
    %2 = tpu.matmul %0, %1, %cst {dimension_numbers = #tpu.dot_dimension_numbers<[1], [0], [0], [1], [0, 0, 1, 1], [], []>} : vector<16x48xf32>, vector<48x64xf32>, vector<16x64xf32> -> vector<16x64xf32>
    %c0_3 = arith.constant 0 : index
    %c0_4 = arith.constant 0 : index
    %3 = vector.load %arg3[%c0_3, %c0_4] : memref<1x64xf32, #tpu.memory_space<vmem>>, vector<1x64xf32>
    %4 = vector.broadcast %3 : vector<1x64xf32> to vector<16x64xf32>
    %5 = arith.addf %2, %4 : vector<16x64xf32>
    %c0_5 = arith.constant 0 : index
    %c0_6 = arith.constant 0 : index
    %6 = vector.load %arg4[%c0_5, %c0_6] : memref<16x64xf32, #tpu.memory_space<vmem>>, vector<16x64xf32>
    tpu.vector_store %arg4[%c0_5, %c0_6], %5 {strides = array<i32>} : memref<16x64xf32, #tpu.memory_space<vmem>>, vector<16x64xf32>,
    %7 = tpu.iota {dimensions = array<i32: 0>} : vector<16x1xi32>
    %c16_i32 = arith.constant 16 : i32
    %8 = arith.muli %arg0, %c16_i32 : i32
    %9 = vector.broadcast %8 : i32 to vector<16x1xi32>
    %10 = arith.addi %7, %9 : vector<16x1xi32>
    %c16_i32_7 = arith.constant 16 : i32
    %11 = vector.broadcast %c16_i32_7 : i32 to vector<16x1xi32>
    %12 = arith.cmpi slt, %10, %11 : vector<16x1xi32>
    %13 = arith.extui %12 : vector<16x1xi1> to vector<16x1xi32>
    %14 = arith.sitofp %13 : vector<16x1xi32> to vector<16x1xf32>
    %15 = vector.broadcast %14 : vector<16x1xf32> to vector<16x64xf32>
    %16 = arith.mulf %5, %15 : vector<16x64xf32>
    %cst_8 = arith.constant dense<0.000000e+00> : vector<64xf32>
    %17 = vector.multi_reduction <add>, %16, %cst_8 [0] : vector<16x64xf32> to vector<64xf32>
    %18 = vector.shape_cast %17 : vector<64xf32> to vector<1x64xf32>
    %19 = arith.mulf %16, %16 : vector<16x64xf32>
    %cst_9 = arith.constant dense<0.000000e+00> : vector<64xf32>
    %20 = vector.multi_reduction <add>, %19, %cst_9 [0] : vector<16x64xf32> to vector<64xf32>
    %21 = vector.shape_cast %20 : vector<64xf32> to vector<1x64xf32>
    %c0_i32 = arith.constant 0 : i32
    %22 = arith.cmpi eq, %arg0, %c0_i32 : i32
    %23 = arith.extui %22 : i1 to i32
    %c0_i32_10 = arith.constant 0 : i32
    %24 = arith.cmpi ne, %23, %c0_i32_10 : i32
    scf.if %24 {
      %cst_15 = arith.constant 0.000000e+00 : f32
      %29 = vector.broadcast %cst_15 : f32 to vector<2x64xf32>
      %c0_16 = arith.constant 0 : index
      %c0_17 = arith.constant 0 : index
      %30 = vector.load %arg5[%c0_16, %c0_17] : memref<2x64xf32, #tpu.memory_space<vmem>>, vector<2x64xf32>
      tpu.vector_store %arg5[%c0_16, %c0_17], %29 {strides = array<i32>} : memref<2x64xf32, #tpu.memory_space<vmem>>, vector<2x64xf32>,
    } else {
    }
    %c0_11 = arith.constant 0 : index
    %c0_12 = arith.constant 0 : index
    %25 = vector.load %arg5[%c0_11, %c0_12] : memref<2x64xf32, #tpu.memory_space<vmem>>, vector<2x64xf32>
    %26 = tpu.concatenate %18, %21 in 0 : vector<1x64xf32>, vector<1x64xf32> -> vector<2x64xf32>
    %27 = arith.addf %25, %26 : vector<2x64xf32>
    %c0_13 = arith.constant 0 : index
    %c0_14 = arith.constant 0 : index
    %28 = vector.load %arg5[%c0_13, %c0_14] : memref<2x64xf32, #tpu.memory_space<vmem>>, vector<2x64xf32>
    tpu.vector_store %arg5[%c0_13, %c0_14], %27 {strides = array<i32>} : memref<2x64xf32, #tpu.memory_space<vmem>>, vector<2x64xf32>,
    return
  }
  func.func @transform_0(%arg0: i32) -> (i32, i32) {
    %c0_i32 = arith.constant 0 : i32
    %c0_i32_0 = arith.constant 0 : i32
    return %arg0, %c0_i32 : i32, i32
  }
  func.func @transform_1(%arg0: i32) -> (i32, i32) {
    %c0_i32 = arith.constant 0 : i32
    %c0_i32_0 = arith.constant 0 : i32
    %c0_i32_1 = arith.constant 0 : i32
    return %c0_i32, %c0_i32_0 : i32, i32
  }
  func.func @transform_2(%arg0: i32) -> (i32, i32) {
    %c0_i32 = arith.constant 0 : i32
    %c0_i32_0 = arith.constant 0 : i32
    %c0_i32_1 = arith.constant 0 : i32
    return %c0_i32, %c0_i32_0 : i32, i32
  }
  func.func @transform_3(%arg0: i32) -> (i32, i32) {
    %c0_i32 = arith.constant 0 : i32
    %c0_i32_0 = arith.constant 0 : i32
    return %arg0, %c0_i32 : i32, i32
  }
  func.func @transform_4(%arg0: i32) -> (i32, i32) {
    %c0_i32 = arith.constant 0 : i32
    %c0_i32_0 = arith.constant 0 : i32
    %c0_i32_1 = arith.constant 0 : i32
    return %c0_i32, %c0_i32_0 : i32, i32
  }
}

module attributes {stable_mosaic.version = 11 : i64} {
  func.func @_bn_conv2_residual_kernel(%arg0: i32, %arg1: memref<16x64xf32, #tpu.memory_space<vmem>>, %arg2: memref<2x64xf32, #tpu.memory_space<vmem>>, %arg3: memref<32x32xf32, #tpu.memory_space<vmem>>, %arg4: memref<1x32xf32, #tpu.memory_space<vmem>>, %arg5: memref<1x64xf32, #tpu.memory_space<vmem>>, %arg6: memref<1x64xf32, #tpu.memory_space<vmem>>, %arg7: memref<16x32xf32, #tpu.memory_space<vmem>>) attributes {dimension_semantics = [#tpu.dimension_semantics<parallel>], iteration_bounds = array<i64: 1>, scalar_prefetch = 0 : i64, scratch_operands = 0 : i64, tpu.core_type = #tpu.core_type<tc>, window_params = [{transform_indices = @transform_0, window_bounds = array<i64: 16, 64>}, {pipeline_mode = #tpu.pipeline_mode<synchronous>, transform_indices = @transform_1, window_bounds = array<i64: 2, 64>}, {pipeline_mode = #tpu.pipeline_mode<synchronous>, transform_indices = @transform_2, window_bounds = array<i64: 32, 32>}, {pipeline_mode = #tpu.pipeline_mode<synchronous>, transform_indices = @transform_3, window_bounds = array<i64: 1, 32>}, {pipeline_mode = #tpu.pipeline_mode<synchronous>, transform_indices = @transform_4, window_bounds = array<i64: 1, 64>}, {pipeline_mode = #tpu.pipeline_mode<synchronous>, transform_indices = @transform_5, window_bounds = array<i64: 1, 64>}, {transform_indices = @transform_6, window_bounds = array<i64: 16, 32>}]} {
    %c0 = arith.constant 0 : index
    %c0_0 = arith.constant 0 : index
    %0 = vector.load %arg2[%c0, %c0_0] : memref<2x64xf32, #tpu.memory_space<vmem>>, vector<2x64xf32>
    %1 = vector.extract_strided_slice %0 {offsets = [0, 0], sizes = [1, 64], strides = [1, 1]} : vector<2x64xf32> to vector<1x64xf32>
    %cst = arith.constant 6.250000e-02 : f32
    %2 = vector.broadcast %cst : f32 to vector<1x64xf32>
    %3 = arith.mulf %1, %2 : vector<1x64xf32>
    %4 = vector.extract_strided_slice %0 {offsets = [1, 0], sizes = [1, 64], strides = [1, 1]} : vector<2x64xf32> to vector<1x64xf32>
    %cst_1 = arith.constant 6.250000e-02 : f32
    %5 = vector.broadcast %cst_1 : f32 to vector<1x64xf32>
    %6 = arith.mulf %4, %5 : vector<1x64xf32>
    %7 = arith.mulf %3, %3 : vector<1x64xf32>
    %8 = arith.subf %6, %7 : vector<1x64xf32>
    %c0_2 = arith.constant 0 : index
    %c0_3 = arith.constant 0 : index
    %9 = vector.load %arg5[%c0_2, %c0_3] : memref<1x64xf32, #tpu.memory_space<vmem>>, vector<1x64xf32>
    %cst_4 = arith.constant 9.99999974E-6 : f32
    %10 = vector.broadcast %cst_4 : f32 to vector<1x64xf32>
    %11 = arith.addf %8, %10 : vector<1x64xf32>
    %12 = math.rsqrt %11 : vector<1x64xf32>
    %13 = arith.mulf %9, %12 : vector<1x64xf32>
    %c0_5 = arith.constant 0 : index
    %c0_6 = arith.constant 0 : index
    %14 = vector.load %arg6[%c0_5, %c0_6] : memref<1x64xf32, #tpu.memory_space<vmem>>, vector<1x64xf32>
    %15 = arith.mulf %3, %13 : vector<1x64xf32>
    %16 = arith.subf %14, %15 : vector<1x64xf32>
    %c0_7 = arith.constant 0 : index
    %c0_8 = arith.constant 0 : index
    %17 = vector.load %arg1[%c0_7, %c0_8] : memref<16x64xf32, #tpu.memory_space<vmem>>, vector<16x64xf32>
    %18 = vector.broadcast %13 : vector<1x64xf32> to vector<16x64xf32>
    %19 = arith.mulf %17, %18 : vector<16x64xf32>
    %20 = vector.broadcast %16 : vector<1x64xf32> to vector<16x64xf32>
    %21 = arith.addf %19, %20 : vector<16x64xf32>
    %22 = vector.extract_strided_slice %21 {offsets = [0, 0], sizes = [16, 32], strides = [1, 1]} : vector<16x64xf32> to vector<16x32xf32>
    %cst_9 = arith.constant 0.000000e+00 : f32
    %23 = vector.broadcast %cst_9 : f32 to vector<16x32xf32>
    %24 = arith.maximumf %22, %23 : vector<16x32xf32>
    %25 = vector.extract_strided_slice %21 {offsets = [0, 32], sizes = [16, 32], strides = [1, 1]} : vector<16x64xf32> to vector<16x32xf32>
    %c0_10 = arith.constant 0 : index
    %c0_11 = arith.constant 0 : index
    %26 = vector.load %arg3[%c0_10, %c0_11] : memref<32x32xf32, #tpu.memory_space<vmem>>, vector<32x32xf32>
    %cst_12 = arith.constant dense<0.000000e+00> : vector<16x32xf32>
    %27 = tpu.matmul %24, %26, %cst_12 {dimension_numbers = #tpu.dot_dimension_numbers<[1], [0], [0], [1], [0, 0, 1, 1], [], []>} : vector<16x32xf32>, vector<32x32xf32>, vector<16x32xf32> -> vector<16x32xf32>
    %c0_13 = arith.constant 0 : index
    %c0_14 = arith.constant 0 : index
    %28 = vector.load %arg4[%c0_13, %c0_14] : memref<1x32xf32, #tpu.memory_space<vmem>>, vector<1x32xf32>
    %29 = vector.broadcast %28 : vector<1x32xf32> to vector<16x32xf32>
    %30 = arith.addf %27, %29 : vector<16x32xf32>
    %31 = arith.addf %25, %30 : vector<16x32xf32>
    %cst_15 = arith.constant 0.000000e+00 : f32
    %32 = vector.broadcast %cst_15 : f32 to vector<16x32xf32>
    %33 = arith.maximumf %31, %32 : vector<16x32xf32>
    %c0_16 = arith.constant 0 : index
    %c0_17 = arith.constant 0 : index
    %34 = vector.load %arg7[%c0_16, %c0_17] : memref<16x32xf32, #tpu.memory_space<vmem>>, vector<16x32xf32>
    tpu.vector_store %arg7[%c0_16, %c0_17], %33 {strides = array<i32>} : memref<16x32xf32, #tpu.memory_space<vmem>>, vector<16x32xf32>,
    return
  }
  func.func @transform_0(%arg0: i32) -> (i32, i32) {
    %c0_i32 = arith.constant 0 : i32
    %c0_i32_0 = arith.constant 0 : i32
    return %arg0, %c0_i32 : i32, i32
  }
  func.func @transform_1(%arg0: i32) -> (i32, i32) {
    %c0_i32 = arith.constant 0 : i32
    %c0_i32_0 = arith.constant 0 : i32
    %c0_i32_1 = arith.constant 0 : i32
    return %c0_i32, %c0_i32_0 : i32, i32
  }
  func.func @transform_2(%arg0: i32) -> (i32, i32) {
    %c0_i32 = arith.constant 0 : i32
    %c0_i32_0 = arith.constant 0 : i32
    %c0_i32_1 = arith.constant 0 : i32
    return %c0_i32, %c0_i32_0 : i32, i32
  }
  func.func @transform_3(%arg0: i32) -> (i32, i32) {
    %c0_i32 = arith.constant 0 : i32
    %c0_i32_0 = arith.constant 0 : i32
    %c0_i32_1 = arith.constant 0 : i32
    return %c0_i32, %c0_i32_0 : i32, i32
  }
  func.func @transform_4(%arg0: i32) -> (i32, i32) {
    %c0_i32 = arith.constant 0 : i32
    %c0_i32_0 = arith.constant 0 : i32
    %c0_i32_1 = arith.constant 0 : i32
    return %c0_i32, %c0_i32_0 : i32, i32
  }
  func.func @transform_5(%arg0: i32) -> (i32, i32) {
    %c0_i32 = arith.constant 0 : i32
    %c0_i32_0 = arith.constant 0 : i32
    %c0_i32_1 = arith.constant 0 : i32
    return %c0_i32, %c0_i32_0 : i32, i32
  }
  func.func @transform_6(%arg0: i32) -> (i32, i32) {
    %c0_i32 = arith.constant 0 : i32
    %c0_i32_0 = arith.constant 0 : i32
    return %arg0, %c0_i32 : i32, i32
  }
}

module attributes {stable_mosaic.version = 11 : i64} {
  func.func @_conv_stats_kernel(%arg0: i32, %arg1: memref<16x96xf32, #tpu.memory_space<vmem>>, %arg2: memref<96x64xf32, #tpu.memory_space<vmem>>, %arg3: memref<1x64xf32, #tpu.memory_space<vmem>>, %arg4: memref<16x64xf32, #tpu.memory_space<vmem>>, %arg5: memref<2x64xf32, #tpu.memory_space<vmem>>) attributes {dimension_semantics = [#tpu.dimension_semantics<arbitrary>], iteration_bounds = array<i64: 1>, scalar_prefetch = 0 : i64, scratch_operands = 0 : i64, tpu.core_type = #tpu.core_type<tc>, window_params = [{transform_indices = @transform_0, window_bounds = array<i64: 16, 96>}, {pipeline_mode = #tpu.pipeline_mode<synchronous>, transform_indices = @transform_1, window_bounds = array<i64: 96, 64>}, {pipeline_mode = #tpu.pipeline_mode<synchronous>, transform_indices = @transform_2, window_bounds = array<i64: 1, 64>}, {transform_indices = @transform_3, window_bounds = array<i64: 16, 64>}, {pipeline_mode = #tpu.pipeline_mode<synchronous>, transform_indices = @transform_4, window_bounds = array<i64: 2, 64>}]} {
    %c0 = arith.constant 0 : index
    %c0_0 = arith.constant 0 : index
    %0 = vector.load %arg1[%c0, %c0_0] : memref<16x96xf32, #tpu.memory_space<vmem>>, vector<16x96xf32>
    %c0_1 = arith.constant 0 : index
    %c0_2 = arith.constant 0 : index
    %1 = vector.load %arg2[%c0_1, %c0_2] : memref<96x64xf32, #tpu.memory_space<vmem>>, vector<96x64xf32>
    %cst = arith.constant dense<0.000000e+00> : vector<16x64xf32>
    %2 = tpu.matmul %0, %1, %cst {dimension_numbers = #tpu.dot_dimension_numbers<[1], [0], [0], [1], [0, 0, 1, 1], [], []>} : vector<16x96xf32>, vector<96x64xf32>, vector<16x64xf32> -> vector<16x64xf32>
    %c0_3 = arith.constant 0 : index
    %c0_4 = arith.constant 0 : index
    %3 = vector.load %arg3[%c0_3, %c0_4] : memref<1x64xf32, #tpu.memory_space<vmem>>, vector<1x64xf32>
    %4 = vector.broadcast %3 : vector<1x64xf32> to vector<16x64xf32>
    %5 = arith.addf %2, %4 : vector<16x64xf32>
    %c0_5 = arith.constant 0 : index
    %c0_6 = arith.constant 0 : index
    %6 = vector.load %arg4[%c0_5, %c0_6] : memref<16x64xf32, #tpu.memory_space<vmem>>, vector<16x64xf32>
    tpu.vector_store %arg4[%c0_5, %c0_6], %5 {strides = array<i32>} : memref<16x64xf32, #tpu.memory_space<vmem>>, vector<16x64xf32>,
    %7 = tpu.iota {dimensions = array<i32: 0>} : vector<16x1xi32>
    %c16_i32 = arith.constant 16 : i32
    %8 = arith.muli %arg0, %c16_i32 : i32
    %9 = vector.broadcast %8 : i32 to vector<16x1xi32>
    %10 = arith.addi %7, %9 : vector<16x1xi32>
    %c16_i32_7 = arith.constant 16 : i32
    %11 = vector.broadcast %c16_i32_7 : i32 to vector<16x1xi32>
    %12 = arith.cmpi slt, %10, %11 : vector<16x1xi32>
    %13 = arith.extui %12 : vector<16x1xi1> to vector<16x1xi32>
    %14 = arith.sitofp %13 : vector<16x1xi32> to vector<16x1xf32>
    %15 = vector.broadcast %14 : vector<16x1xf32> to vector<16x64xf32>
    %16 = arith.mulf %5, %15 : vector<16x64xf32>
    %cst_8 = arith.constant dense<0.000000e+00> : vector<64xf32>
    %17 = vector.multi_reduction <add>, %16, %cst_8 [0] : vector<16x64xf32> to vector<64xf32>
    %18 = vector.shape_cast %17 : vector<64xf32> to vector<1x64xf32>
    %19 = arith.mulf %16, %16 : vector<16x64xf32>
    %cst_9 = arith.constant dense<0.000000e+00> : vector<64xf32>
    %20 = vector.multi_reduction <add>, %19, %cst_9 [0] : vector<16x64xf32> to vector<64xf32>
    %21 = vector.shape_cast %20 : vector<64xf32> to vector<1x64xf32>
    %c0_i32 = arith.constant 0 : i32
    %22 = arith.cmpi eq, %arg0, %c0_i32 : i32
    %23 = arith.extui %22 : i1 to i32
    %c0_i32_10 = arith.constant 0 : i32
    %24 = arith.cmpi ne, %23, %c0_i32_10 : i32
    scf.if %24 {
      %cst_15 = arith.constant 0.000000e+00 : f32
      %29 = vector.broadcast %cst_15 : f32 to vector<2x64xf32>
      %c0_16 = arith.constant 0 : index
      %c0_17 = arith.constant 0 : index
      %30 = vector.load %arg5[%c0_16, %c0_17] : memref<2x64xf32, #tpu.memory_space<vmem>>, vector<2x64xf32>
      tpu.vector_store %arg5[%c0_16, %c0_17], %29 {strides = array<i32>} : memref<2x64xf32, #tpu.memory_space<vmem>>, vector<2x64xf32>,
    } else {
    }
    %c0_11 = arith.constant 0 : index
    %c0_12 = arith.constant 0 : index
    %25 = vector.load %arg5[%c0_11, %c0_12] : memref<2x64xf32, #tpu.memory_space<vmem>>, vector<2x64xf32>
    %26 = tpu.concatenate %18, %21 in 0 : vector<1x64xf32>, vector<1x64xf32> -> vector<2x64xf32>
    %27 = arith.addf %25, %26 : vector<2x64xf32>
    %c0_13 = arith.constant 0 : index
    %c0_14 = arith.constant 0 : index
    %28 = vector.load %arg5[%c0_13, %c0_14] : memref<2x64xf32, #tpu.memory_space<vmem>>, vector<2x64xf32>
    tpu.vector_store %arg5[%c0_13, %c0_14], %27 {strides = array<i32>} : memref<2x64xf32, #tpu.memory_space<vmem>>, vector<2x64xf32>,
    return
  }
  func.func @transform_0(%arg0: i32) -> (i32, i32) {
    %c0_i32 = arith.constant 0 : i32
    %c0_i32_0 = arith.constant 0 : i32
    return %arg0, %c0_i32 : i32, i32
  }
  func.func @transform_1(%arg0: i32) -> (i32, i32) {
    %c0_i32 = arith.constant 0 : i32
    %c0_i32_0 = arith.constant 0 : i32
    %c0_i32_1 = arith.constant 0 : i32
    return %c0_i32, %c0_i32_0 : i32, i32
  }
  func.func @transform_2(%arg0: i32) -> (i32, i32) {
    %c0_i32 = arith.constant 0 : i32
    %c0_i32_0 = arith.constant 0 : i32
    %c0_i32_1 = arith.constant 0 : i32
    return %c0_i32, %c0_i32_0 : i32, i32
  }
  func.func @transform_3(%arg0: i32) -> (i32, i32) {
    %c0_i32 = arith.constant 0 : i32
    %c0_i32_0 = arith.constant 0 : i32
    return %arg0, %c0_i32 : i32, i32
  }
  func.func @transform_4(%arg0: i32) -> (i32, i32) {
    %c0_i32 = arith.constant 0 : i32
    %c0_i32_0 = arith.constant 0 : i32
    %c0_i32_1 = arith.constant 0 : i32
    return %c0_i32, %c0_i32_0 : i32, i32
  }
}

module attributes {stable_mosaic.version = 11 : i64} {
  func.func @_conv_stats_kernel(%arg0: i32, %arg1: memref<8x96xf32, #tpu.memory_space<vmem>>, %arg2: memref<96x128xf32, #tpu.memory_space<vmem>>, %arg3: memref<1x128xf32, #tpu.memory_space<vmem>>, %arg4: memref<8x128xf32, #tpu.memory_space<vmem>>, %arg5: memref<2x128xf32, #tpu.memory_space<vmem>>) attributes {dimension_semantics = [#tpu.dimension_semantics<arbitrary>], iteration_bounds = array<i64: 1>, scalar_prefetch = 0 : i64, scratch_operands = 0 : i64, tpu.core_type = #tpu.core_type<tc>, window_params = [{transform_indices = @transform_0, window_bounds = array<i64: 8, 96>}, {pipeline_mode = #tpu.pipeline_mode<synchronous>, transform_indices = @transform_1, window_bounds = array<i64: 96, 128>}, {pipeline_mode = #tpu.pipeline_mode<synchronous>, transform_indices = @transform_2, window_bounds = array<i64: 1, 128>}, {transform_indices = @transform_3, window_bounds = array<i64: 8, 128>}, {pipeline_mode = #tpu.pipeline_mode<synchronous>, transform_indices = @transform_4, window_bounds = array<i64: 2, 128>}]} {
    %c0 = arith.constant 0 : index
    %c0_0 = arith.constant 0 : index
    %0 = vector.load %arg1[%c0, %c0_0] : memref<8x96xf32, #tpu.memory_space<vmem>>, vector<8x96xf32>
    %c0_1 = arith.constant 0 : index
    %c0_2 = arith.constant 0 : index
    %1 = vector.load %arg2[%c0_1, %c0_2] : memref<96x128xf32, #tpu.memory_space<vmem>>, vector<96x128xf32>
    %cst = arith.constant dense<0.000000e+00> : vector<8x128xf32>
    %2 = tpu.matmul %0, %1, %cst {dimension_numbers = #tpu.dot_dimension_numbers<[1], [0], [0], [1], [0, 0, 1, 1], [], []>} : vector<8x96xf32>, vector<96x128xf32>, vector<8x128xf32> -> vector<8x128xf32>
    %c0_3 = arith.constant 0 : index
    %c0_4 = arith.constant 0 : index
    %3 = vector.load %arg3[%c0_3, %c0_4] : memref<1x128xf32, #tpu.memory_space<vmem>>, vector<1x128xf32>
    %4 = vector.broadcast %3 : vector<1x128xf32> to vector<8x128xf32>
    %5 = arith.addf %2, %4 : vector<8x128xf32>
    %c0_5 = arith.constant 0 : index
    %c0_6 = arith.constant 0 : index
    %6 = vector.load %arg4[%c0_5, %c0_6] : memref<8x128xf32, #tpu.memory_space<vmem>>, vector<8x128xf32>
    tpu.vector_store %arg4[%c0_5, %c0_6], %5 {strides = array<i32>} : memref<8x128xf32, #tpu.memory_space<vmem>>, vector<8x128xf32>,
    %7 = tpu.iota {dimensions = array<i32: 0>} : vector<8x1xi32>
    %c8_i32 = arith.constant 8 : i32
    %8 = arith.muli %arg0, %c8_i32 : i32
    %9 = vector.broadcast %8 : i32 to vector<8x1xi32>
    %10 = arith.addi %7, %9 : vector<8x1xi32>
    %c8_i32_7 = arith.constant 8 : i32
    %11 = vector.broadcast %c8_i32_7 : i32 to vector<8x1xi32>
    %12 = arith.cmpi slt, %10, %11 : vector<8x1xi32>
    %13 = arith.extui %12 : vector<8x1xi1> to vector<8x1xi32>
    %14 = arith.sitofp %13 : vector<8x1xi32> to vector<8x1xf32>
    %15 = vector.broadcast %14 : vector<8x1xf32> to vector<8x128xf32>
    %16 = arith.mulf %5, %15 : vector<8x128xf32>
    %cst_8 = arith.constant dense<0.000000e+00> : vector<128xf32>
    %17 = vector.multi_reduction <add>, %16, %cst_8 [0] : vector<8x128xf32> to vector<128xf32>
    %18 = vector.shape_cast %17 : vector<128xf32> to vector<1x128xf32>
    %19 = arith.mulf %16, %16 : vector<8x128xf32>
    %cst_9 = arith.constant dense<0.000000e+00> : vector<128xf32>
    %20 = vector.multi_reduction <add>, %19, %cst_9 [0] : vector<8x128xf32> to vector<128xf32>
    %21 = vector.shape_cast %20 : vector<128xf32> to vector<1x128xf32>
    %c0_i32 = arith.constant 0 : i32
    %22 = arith.cmpi eq, %arg0, %c0_i32 : i32
    %23 = arith.extui %22 : i1 to i32
    %c0_i32_10 = arith.constant 0 : i32
    %24 = arith.cmpi ne, %23, %c0_i32_10 : i32
    scf.if %24 {
      %cst_15 = arith.constant 0.000000e+00 : f32
      %29 = vector.broadcast %cst_15 : f32 to vector<2x128xf32>
      %c0_16 = arith.constant 0 : index
      %c0_17 = arith.constant 0 : index
      %30 = vector.load %arg5[%c0_16, %c0_17] : memref<2x128xf32, #tpu.memory_space<vmem>>, vector<2x128xf32>
      tpu.vector_store %arg5[%c0_16, %c0_17], %29 {strides = array<i32>} : memref<2x128xf32, #tpu.memory_space<vmem>>, vector<2x128xf32>,
    } else {
    }
    %c0_11 = arith.constant 0 : index
    %c0_12 = arith.constant 0 : index
    %25 = vector.load %arg5[%c0_11, %c0_12] : memref<2x128xf32, #tpu.memory_space<vmem>>, vector<2x128xf32>
    %26 = tpu.concatenate %18, %21 in 0 : vector<1x128xf32>, vector<1x128xf32> -> vector<2x128xf32>
    %27 = arith.addf %25, %26 : vector<2x128xf32>
    %c0_13 = arith.constant 0 : index
    %c0_14 = arith.constant 0 : index
    %28 = vector.load %arg5[%c0_13, %c0_14] : memref<2x128xf32, #tpu.memory_space<vmem>>, vector<2x128xf32>
    tpu.vector_store %arg5[%c0_13, %c0_14], %27 {strides = array<i32>} : memref<2x128xf32, #tpu.memory_space<vmem>>, vector<2x128xf32>,
    return
  }
  func.func @transform_0(%arg0: i32) -> (i32, i32) {
    %c0_i32 = arith.constant 0 : i32
    %c0_i32_0 = arith.constant 0 : i32
    return %arg0, %c0_i32 : i32, i32
  }
  func.func @transform_1(%arg0: i32) -> (i32, i32) {
    %c0_i32 = arith.constant 0 : i32
    %c0_i32_0 = arith.constant 0 : i32
    %c0_i32_1 = arith.constant 0 : i32
    return %c0_i32, %c0_i32_0 : i32, i32
  }
  func.func @transform_2(%arg0: i32) -> (i32, i32) {
    %c0_i32 = arith.constant 0 : i32
    %c0_i32_0 = arith.constant 0 : i32
    %c0_i32_1 = arith.constant 0 : i32
    return %c0_i32, %c0_i32_0 : i32, i32
  }
  func.func @transform_3(%arg0: i32) -> (i32, i32) {
    %c0_i32 = arith.constant 0 : i32
    %c0_i32_0 = arith.constant 0 : i32
    return %arg0, %c0_i32 : i32, i32
  }
  func.func @transform_4(%arg0: i32) -> (i32, i32) {
    %c0_i32 = arith.constant 0 : i32
    %c0_i32_0 = arith.constant 0 : i32
    %c0_i32_1 = arith.constant 0 : i32
    return %c0_i32, %c0_i32_0 : i32, i32
  }
}

module attributes {stable_mosaic.version = 11 : i64} {
  func.func @_bn_conv2_residual_kernel(%arg0: i32, %arg1: memref<8x128xf32, #tpu.memory_space<vmem>>, %arg2: memref<2x128xf32, #tpu.memory_space<vmem>>, %arg3: memref<64x64xf32, #tpu.memory_space<vmem>>, %arg4: memref<1x64xf32, #tpu.memory_space<vmem>>, %arg5: memref<1x128xf32, #tpu.memory_space<vmem>>, %arg6: memref<1x128xf32, #tpu.memory_space<vmem>>, %arg7: memref<8x64xf32, #tpu.memory_space<vmem>>) attributes {dimension_semantics = [#tpu.dimension_semantics<parallel>], iteration_bounds = array<i64: 1>, scalar_prefetch = 0 : i64, scratch_operands = 0 : i64, tpu.core_type = #tpu.core_type<tc>, window_params = [{transform_indices = @transform_0, window_bounds = array<i64: 8, 128>}, {pipeline_mode = #tpu.pipeline_mode<synchronous>, transform_indices = @transform_1, window_bounds = array<i64: 2, 128>}, {pipeline_mode = #tpu.pipeline_mode<synchronous>, transform_indices = @transform_2, window_bounds = array<i64: 64, 64>}, {pipeline_mode = #tpu.pipeline_mode<synchronous>, transform_indices = @transform_3, window_bounds = array<i64: 1, 64>}, {pipeline_mode = #tpu.pipeline_mode<synchronous>, transform_indices = @transform_4, window_bounds = array<i64: 1, 128>}, {pipeline_mode = #tpu.pipeline_mode<synchronous>, transform_indices = @transform_5, window_bounds = array<i64: 1, 128>}, {transform_indices = @transform_6, window_bounds = array<i64: 8, 64>}]} {
    %c0 = arith.constant 0 : index
    %c0_0 = arith.constant 0 : index
    %0 = vector.load %arg2[%c0, %c0_0] : memref<2x128xf32, #tpu.memory_space<vmem>>, vector<2x128xf32>
    %1 = vector.extract_strided_slice %0 {offsets = [0, 0], sizes = [1, 128], strides = [1, 1]} : vector<2x128xf32> to vector<1x128xf32>
    %cst = arith.constant 1.250000e-01 : f32
    %2 = vector.broadcast %cst : f32 to vector<1x128xf32>
    %3 = arith.mulf %1, %2 : vector<1x128xf32>
    %4 = vector.extract_strided_slice %0 {offsets = [1, 0], sizes = [1, 128], strides = [1, 1]} : vector<2x128xf32> to vector<1x128xf32>
    %cst_1 = arith.constant 1.250000e-01 : f32
    %5 = vector.broadcast %cst_1 : f32 to vector<1x128xf32>
    %6 = arith.mulf %4, %5 : vector<1x128xf32>
    %7 = arith.mulf %3, %3 : vector<1x128xf32>
    %8 = arith.subf %6, %7 : vector<1x128xf32>
    %c0_2 = arith.constant 0 : index
    %c0_3 = arith.constant 0 : index
    %9 = vector.load %arg5[%c0_2, %c0_3] : memref<1x128xf32, #tpu.memory_space<vmem>>, vector<1x128xf32>
    %cst_4 = arith.constant 9.99999974E-6 : f32
    %10 = vector.broadcast %cst_4 : f32 to vector<1x128xf32>
    %11 = arith.addf %8, %10 : vector<1x128xf32>
    %12 = math.rsqrt %11 : vector<1x128xf32>
    %13 = arith.mulf %9, %12 : vector<1x128xf32>
    %c0_5 = arith.constant 0 : index
    %c0_6 = arith.constant 0 : index
    %14 = vector.load %arg6[%c0_5, %c0_6] : memref<1x128xf32, #tpu.memory_space<vmem>>, vector<1x128xf32>
    %15 = arith.mulf %3, %13 : vector<1x128xf32>
    %16 = arith.subf %14, %15 : vector<1x128xf32>
    %c0_7 = arith.constant 0 : index
    %c0_8 = arith.constant 0 : index
    %17 = vector.load %arg1[%c0_7, %c0_8] : memref<8x128xf32, #tpu.memory_space<vmem>>, vector<8x128xf32>
    %18 = vector.broadcast %13 : vector<1x128xf32> to vector<8x128xf32>
    %19 = arith.mulf %17, %18 : vector<8x128xf32>
    %20 = vector.broadcast %16 : vector<1x128xf32> to vector<8x128xf32>
    %21 = arith.addf %19, %20 : vector<8x128xf32>
    %22 = vector.extract_strided_slice %21 {offsets = [0, 0], sizes = [8, 64], strides = [1, 1]} : vector<8x128xf32> to vector<8x64xf32>
    %cst_9 = arith.constant 0.000000e+00 : f32
    %23 = vector.broadcast %cst_9 : f32 to vector<8x64xf32>
    %24 = arith.maximumf %22, %23 : vector<8x64xf32>
    %25 = vector.extract_strided_slice %21 {offsets = [0, 64], sizes = [8, 64], strides = [1, 1]} : vector<8x128xf32> to vector<8x64xf32>
    %c0_10 = arith.constant 0 : index
    %c0_11 = arith.constant 0 : index
    %26 = vector.load %arg3[%c0_10, %c0_11] : memref<64x64xf32, #tpu.memory_space<vmem>>, vector<64x64xf32>
    %cst_12 = arith.constant dense<0.000000e+00> : vector<8x64xf32>
    %27 = tpu.matmul %24, %26, %cst_12 {dimension_numbers = #tpu.dot_dimension_numbers<[1], [0], [0], [1], [0, 0, 1, 1], [], []>} : vector<8x64xf32>, vector<64x64xf32>, vector<8x64xf32> -> vector<8x64xf32>
    %c0_13 = arith.constant 0 : index
    %c0_14 = arith.constant 0 : index
    %28 = vector.load %arg4[%c0_13, %c0_14] : memref<1x64xf32, #tpu.memory_space<vmem>>, vector<1x64xf32>
    %29 = vector.broadcast %28 : vector<1x64xf32> to vector<8x64xf32>
    %30 = arith.addf %27, %29 : vector<8x64xf32>
    %31 = arith.addf %25, %30 : vector<8x64xf32>
    %cst_15 = arith.constant 0.000000e+00 : f32
    %32 = vector.broadcast %cst_15 : f32 to vector<8x64xf32>
    %33 = arith.maximumf %31, %32 : vector<8x64xf32>
    %c0_16 = arith.constant 0 : index
    %c0_17 = arith.constant 0 : index
    %34 = vector.load %arg7[%c0_16, %c0_17] : memref<8x64xf32, #tpu.memory_space<vmem>>, vector<8x64xf32>
    tpu.vector_store %arg7[%c0_16, %c0_17], %33 {strides = array<i32>} : memref<8x64xf32, #tpu.memory_space<vmem>>, vector<8x64xf32>,
    return
  }
  func.func @transform_0(%arg0: i32) -> (i32, i32) {
    %c0_i32 = arith.constant 0 : i32
    %c0_i32_0 = arith.constant 0 : i32
    return %arg0, %c0_i32 : i32, i32
  }
  func.func @transform_1(%arg0: i32) -> (i32, i32) {
    %c0_i32 = arith.constant 0 : i32
    %c0_i32_0 = arith.constant 0 : i32
    %c0_i32_1 = arith.constant 0 : i32
    return %c0_i32, %c0_i32_0 : i32, i32
  }
  func.func @transform_2(%arg0: i32) -> (i32, i32) {
    %c0_i32 = arith.constant 0 : i32
    %c0_i32_0 = arith.constant 0 : i32
    %c0_i32_1 = arith.constant 0 : i32
    return %c0_i32, %c0_i32_0 : i32, i32
  }
  func.func @transform_3(%arg0: i32) -> (i32, i32) {
    %c0_i32 = arith.constant 0 : i32
    %c0_i32_0 = arith.constant 0 : i32
    %c0_i32_1 = arith.constant 0 : i32
    return %c0_i32, %c0_i32_0 : i32, i32
  }
  func.func @transform_4(%arg0: i32) -> (i32, i32) {
    %c0_i32 = arith.constant 0 : i32
    %c0_i32_0 = arith.constant 0 : i32
    %c0_i32_1 = arith.constant 0 : i32
    return %c0_i32, %c0_i32_0 : i32, i32
  }
  func.func @transform_5(%arg0: i32) -> (i32, i32) {
    %c0_i32 = arith.constant 0 : i32
    %c0_i32_0 = arith.constant 0 : i32
    %c0_i32_1 = arith.constant 0 : i32
    return %c0_i32, %c0_i32_0 : i32, i32
  }
  func.func @transform_6(%arg0: i32) -> (i32, i32) {
    %c0_i32 = arith.constant 0 : i32
    %c0_i32_0 = arith.constant 0 : i32
    return %arg0, %c0_i32 : i32, i32
  }
}

module attributes {stable_mosaic.version = 11 : i64} {
  func.func @_conv_stats_kernel(%arg0: i32, %arg1: memref<8x192xf32, #tpu.memory_space<vmem>>, %arg2: memref<192x128xf32, #tpu.memory_space<vmem>>, %arg3: memref<1x128xf32, #tpu.memory_space<vmem>>, %arg4: memref<8x128xf32, #tpu.memory_space<vmem>>, %arg5: memref<2x128xf32, #tpu.memory_space<vmem>>) attributes {dimension_semantics = [#tpu.dimension_semantics<arbitrary>], iteration_bounds = array<i64: 1>, scalar_prefetch = 0 : i64, scratch_operands = 0 : i64, tpu.core_type = #tpu.core_type<tc>, window_params = [{transform_indices = @transform_0, window_bounds = array<i64: 8, 192>}, {pipeline_mode = #tpu.pipeline_mode<synchronous>, transform_indices = @transform_1, window_bounds = array<i64: 192, 128>}, {pipeline_mode = #tpu.pipeline_mode<synchronous>, transform_indices = @transform_2, window_bounds = array<i64: 1, 128>}, {transform_indices = @transform_3, window_bounds = array<i64: 8, 128>}, {pipeline_mode = #tpu.pipeline_mode<synchronous>, transform_indices = @transform_4, window_bounds = array<i64: 2, 128>}]} {
    %c0 = arith.constant 0 : index
    %c0_0 = arith.constant 0 : index
    %0 = vector.load %arg1[%c0, %c0_0] : memref<8x192xf32, #tpu.memory_space<vmem>>, vector<8x192xf32>
    %c0_1 = arith.constant 0 : index
    %c0_2 = arith.constant 0 : index
    %1 = vector.load %arg2[%c0_1, %c0_2] : memref<192x128xf32, #tpu.memory_space<vmem>>, vector<192x128xf32>
    %cst = arith.constant dense<0.000000e+00> : vector<8x128xf32>
    %2 = tpu.matmul %0, %1, %cst {dimension_numbers = #tpu.dot_dimension_numbers<[1], [0], [0], [1], [0, 0, 1, 1], [], []>} : vector<8x192xf32>, vector<192x128xf32>, vector<8x128xf32> -> vector<8x128xf32>
    %c0_3 = arith.constant 0 : index
    %c0_4 = arith.constant 0 : index
    %3 = vector.load %arg3[%c0_3, %c0_4] : memref<1x128xf32, #tpu.memory_space<vmem>>, vector<1x128xf32>
    %4 = vector.broadcast %3 : vector<1x128xf32> to vector<8x128xf32>
    %5 = arith.addf %2, %4 : vector<8x128xf32>
    %c0_5 = arith.constant 0 : index
    %c0_6 = arith.constant 0 : index
    %6 = vector.load %arg4[%c0_5, %c0_6] : memref<8x128xf32, #tpu.memory_space<vmem>>, vector<8x128xf32>
    tpu.vector_store %arg4[%c0_5, %c0_6], %5 {strides = array<i32>} : memref<8x128xf32, #tpu.memory_space<vmem>>, vector<8x128xf32>,
    %7 = tpu.iota {dimensions = array<i32: 0>} : vector<8x1xi32>
    %c8_i32 = arith.constant 8 : i32
    %8 = arith.muli %arg0, %c8_i32 : i32
    %9 = vector.broadcast %8 : i32 to vector<8x1xi32>
    %10 = arith.addi %7, %9 : vector<8x1xi32>
    %c8_i32_7 = arith.constant 8 : i32
    %11 = vector.broadcast %c8_i32_7 : i32 to vector<8x1xi32>
    %12 = arith.cmpi slt, %10, %11 : vector<8x1xi32>
    %13 = arith.extui %12 : vector<8x1xi1> to vector<8x1xi32>
    %14 = arith.sitofp %13 : vector<8x1xi32> to vector<8x1xf32>
    %15 = vector.broadcast %14 : vector<8x1xf32> to vector<8x128xf32>
    %16 = arith.mulf %5, %15 : vector<8x128xf32>
    %cst_8 = arith.constant dense<0.000000e+00> : vector<128xf32>
    %17 = vector.multi_reduction <add>, %16, %cst_8 [0] : vector<8x128xf32> to vector<128xf32>
    %18 = vector.shape_cast %17 : vector<128xf32> to vector<1x128xf32>
    %19 = arith.mulf %16, %16 : vector<8x128xf32>
    %cst_9 = arith.constant dense<0.000000e+00> : vector<128xf32>
    %20 = vector.multi_reduction <add>, %19, %cst_9 [0] : vector<8x128xf32> to vector<128xf32>
    %21 = vector.shape_cast %20 : vector<128xf32> to vector<1x128xf32>
    %c0_i32 = arith.constant 0 : i32
    %22 = arith.cmpi eq, %arg0, %c0_i32 : i32
    %23 = arith.extui %22 : i1 to i32
    %c0_i32_10 = arith.constant 0 : i32
    %24 = arith.cmpi ne, %23, %c0_i32_10 : i32
    scf.if %24 {
      %cst_15 = arith.constant 0.000000e+00 : f32
      %29 = vector.broadcast %cst_15 : f32 to vector<2x128xf32>
      %c0_16 = arith.constant 0 : index
      %c0_17 = arith.constant 0 : index
      %30 = vector.load %arg5[%c0_16, %c0_17] : memref<2x128xf32, #tpu.memory_space<vmem>>, vector<2x128xf32>
      tpu.vector_store %arg5[%c0_16, %c0_17], %29 {strides = array<i32>} : memref<2x128xf32, #tpu.memory_space<vmem>>, vector<2x128xf32>,
    } else {
    }
    %c0_11 = arith.constant 0 : index
    %c0_12 = arith.constant 0 : index
    %25 = vector.load %arg5[%c0_11, %c0_12] : memref<2x128xf32, #tpu.memory_space<vmem>>, vector<2x128xf32>
    %26 = tpu.concatenate %18, %21 in 0 : vector<1x128xf32>, vector<1x128xf32> -> vector<2x128xf32>
    %27 = arith.addf %25, %26 : vector<2x128xf32>
    %c0_13 = arith.constant 0 : index
    %c0_14 = arith.constant 0 : index
    %28 = vector.load %arg5[%c0_13, %c0_14] : memref<2x128xf32, #tpu.memory_space<vmem>>, vector<2x128xf32>
    tpu.vector_store %arg5[%c0_13, %c0_14], %27 {strides = array<i32>} : memref<2x128xf32, #tpu.memory_space<vmem>>, vector<2x128xf32>,
    return
  }
  func.func @transform_0(%arg0: i32) -> (i32, i32) {
    %c0_i32 = arith.constant 0 : i32
    %c0_i32_0 = arith.constant 0 : i32
    return %arg0, %c0_i32 : i32, i32
  }
  func.func @transform_1(%arg0: i32) -> (i32, i32) {
    %c0_i32 = arith.constant 0 : i32
    %c0_i32_0 = arith.constant 0 : i32
    %c0_i32_1 = arith.constant 0 : i32
    return %c0_i32, %c0_i32_0 : i32, i32
  }
  func.func @transform_2(%arg0: i32) -> (i32, i32) {
    %c0_i32 = arith.constant 0 : i32
    %c0_i32_0 = arith.constant 0 : i32
    %c0_i32_1 = arith.constant 0 : i32
    return %c0_i32, %c0_i32_0 : i32, i32
  }
  func.func @transform_3(%arg0: i32) -> (i32, i32) {
    %c0_i32 = arith.constant 0 : i32
    %c0_i32_0 = arith.constant 0 : i32
    return %arg0, %c0_i32 : i32, i32
  }
  func.func @transform_4(%arg0: i32) -> (i32, i32) {
    %c0_i32 = arith.constant 0 : i32
    %c0_i32_0 = arith.constant 0 : i32
    %c0_i32_1 = arith.constant 0 : i32
    return %c0_i32, %c0_i32_0 : i32, i32
  }
}

module attributes {stable_mosaic.version = 11 : i64} {
  func.func @_head_kernel(%arg0: memref<2x256xf32, #tpu.memory_space<vmem>>, %arg1: memref<256x32xf32, #tpu.memory_space<vmem>>, %arg2: memref<32x8xf32, #tpu.memory_space<vmem>>, %arg3: memref<1x8xf32, #tpu.memory_space<vmem>>, %arg4: memref<2x8xf32, #tpu.memory_space<vmem>>) attributes {dimension_semantics = [], scalar_prefetch = 0 : i64, scratch_operands = 0 : i64, tpu.core_type = #tpu.core_type<tc>} {
    %c0 = arith.constant 0 : index
    %c0_0 = arith.constant 0 : index
    %0 = vector.load %arg0[%c0, %c0_0] : memref<2x256xf32, #tpu.memory_space<vmem>>, vector<2x256xf32>
    %c0_1 = arith.constant 0 : index
    %c0_2 = arith.constant 0 : index
    %1 = vector.load %arg1[%c0_1, %c0_2] : memref<256x32xf32, #tpu.memory_space<vmem>>, vector<256x32xf32>
    %cst = arith.constant dense<0.000000e+00> : vector<2x32xf32>
    %2 = tpu.matmul %0, %1, %cst {dimension_numbers = #tpu.dot_dimension_numbers<[1], [0], [0], [1], [0, 0, 1, 1], [], []>} : vector<2x256xf32>, vector<256x32xf32>, vector<2x32xf32> -> vector<2x32xf32>
    %c0_3 = arith.constant 0 : index
    %c0_4 = arith.constant 0 : index
    %3 = vector.load %arg2[%c0_3, %c0_4] : memref<32x8xf32, #tpu.memory_space<vmem>>, vector<32x8xf32>
    %cst_5 = arith.constant dense<0.000000e+00> : vector<2x8xf32>
    %4 = tpu.matmul %2, %3, %cst_5 {dimension_numbers = #tpu.dot_dimension_numbers<[1], [0], [0], [1], [0, 0, 1, 1], [], []>} : vector<2x32xf32>, vector<32x8xf32>, vector<2x8xf32> -> vector<2x8xf32>
    %c0_6 = arith.constant 0 : index
    %c0_7 = arith.constant 0 : index
    %5 = vector.load %arg3[%c0_6, %c0_7] : memref<1x8xf32, #tpu.memory_space<vmem>>, vector<1x8xf32>
    %6 = vector.broadcast %5 : vector<1x8xf32> to vector<2x8xf32>
    %7 = arith.addf %4, %6 : vector<2x8xf32>
    %cst_8 = arith.constant dense<0xFF800000> : vector<2xf32>
    %8 = vector.multi_reduction <maximumf>, %7, %cst_8 [1] : vector<2x8xf32> to vector<2xf32>
    %9 = vector.shape_cast %8 : vector<2xf32> to vector<2x1xf32>
    %10 = vector.broadcast %9 : vector<2x1xf32> to vector<2x8xf32>
    %11 = arith.subf %7, %10 : vector<2x8xf32>
    %12 = math.exp %11 : vector<2x8xf32>
    %cst_9 = arith.constant dense<0.000000e+00> : vector<2xf32>
    %13 = vector.multi_reduction <add>, %12, %cst_9 [1] : vector<2x8xf32> to vector<2xf32>
    %14 = vector.shape_cast %13 : vector<2xf32> to vector<2x1xf32>
    %15 = vector.broadcast %14 : vector<2x1xf32> to vector<2x8xf32>
    %16 = arith.divf %12, %15 : vector<2x8xf32>
    %c0_10 = arith.constant 0 : index
    %c0_11 = arith.constant 0 : index
    %17 = vector.load %arg4[%c0_10, %c0_11] : memref<2x8xf32, #tpu.memory_space<vmem>>, vector<2x8xf32>
    tpu.vector_store %arg4[%c0_10, %c0_11], %16 {strides = array<i32>} : memref<2x8xf32, #tpu.memory_space<vmem>>, vector<2x8xf32>,
    return
  }
}

</mosaic_0001>

<llo_original>
// kernel: residnn_forward.20
$region0: #{residnn_forward.20}
  #allocation0 [shape = 'u32[]', space=smem, size = 0x4, offset = 0x4, fixed_abs, tag = 'smem constant byte address 0x4 - core index']
  #allocation1 [shape = 'u32[144,128]{1,0:T(1,128)}', space=vmem, size = 0x12000, scoped, tag = 'internal scratch']
  %s0 = inlined_call_operand.vmem [shape: f32[32,32], index: 0, kind: input, shape index: {}]
  %s1 = inlined_call_operand.vmem [shape: f32[2,32], index: 1, kind: input, shape index: {}]
  %s2 = inlined_call_operand.vmem [shape: f32[16,16], index: 2, kind: input, shape index: {}]
  %s3 = inlined_call_operand.vmem [shape: f32[1,16], index: 3, kind: input, shape index: {}]
  %s4 = inlined_call_operand.vmem [shape: f32[1,32], index: 4, kind: input, shape index: {}]
  %s5 = inlined_call_operand.vmem [shape: f32[1,32], index: 5, kind: input, shape index: {}]
  %s6 = inlined_call_operand.vmem [shape: f32[32,16], index: 6, kind: output, shape index: {}]
  %s7 = sld [smem:[#allocation0]]
  $region34: #{residnn_forward.20} parent=0
    _
  %s9 = ssub.s32 1, %s7
  %s10 = scalar_select 0, %s9, %s7
  // Predicated region
  $region2: #{residnn_forward.20} parent=0 // pred_check
    _
  $region3: #{residnn_forward.20} parent=0 // pred_check_branch
    %12 = sbr.rel (0) target = $region5
  $region4: #{residnn_forward.20} parent=0 // pred_region
    _
  $region5: #{residnn_forward.20} parent=0 // pred_fallthru
    _
  // Predicated region
  $region6: #{residnn_forward.20} parent=0 // pred_check
    _
  $region7: #{residnn_forward.20} parent=0 // pred_check_branch
    %14 = sbr.rel (0) target = $region9
  $region8: #{residnn_forward.20} parent=0 // pred_region
    _
  $region9: #{residnn_forward.20} parent=0 // pred_fallthru
    _
  // Predicated region
  $region10: #{residnn_forward.20} parent=0 // pred_check
    _
  $region11: #{residnn_forward.20} parent=0 // pred_check_branch
    %16 = sbr.rel (0) target = $region13
  $region12: #{residnn_forward.20} parent=0 // pred_region
    _
  $region13: #{residnn_forward.20} parent=0 // pred_fallthru
    _
  // Predicated region
  $region14: #{residnn_forward.20} parent=0 // pred_check
    _
  $region15: #{residnn_forward.20} parent=0 // pred_check_branch
    %18 = sbr.rel (0) target = $region17
  $region16: #{residnn_forward.20} parent=0 // pred_region
    _
  $region17: #{residnn_forward.20} parent=0 // pred_fallthru
    _
  // Predicated region
  $region18: #{residnn_forward.20} parent=0 // pred_check
    _
  $region19: #{residnn_forward.20} parent=0 // pred_check_branch
    %20 = sbr.rel (0) target = $region21
  $region20: #{residnn_forward.20} parent=0 // pred_region
    _
  $region21: #{residnn_forward.20} parent=0 // pred_fallthru
    _
  // Predicated region
  $region22: #{residnn_forward.20} parent=0 // pred_check
    _
  $region23: #{residnn_forward.20} parent=0 // pred_check_branch
    %22 = sbr.rel (0) target = $region25
  $region24: #{residnn_forward.20} parent=0 // pred_region
    _
  $region25: #{residnn_forward.20} parent=0 // pred_fallthru
    _
  %v23 = vld [vmem:[%s1] sm:$0x3]
  %v24 = vmul.f32 %v23, 0.03125
  %v25 = vmul.f32 %v24, %v24
  %v27 = vrot.slane %v25, 7
  %v29 = vsub.f32 %v24, %v27
  %v30 = vld [vmem:[%s4] sm:$0x1]
  %v31 = vadd.f32 %v29, 1e-05
  %v32 = vrsqrt.pop %v31
  %v35 = vunpack.c.l.s4 1966171168
  %v36 = vunpack.c.0.s8 %v35
  %v37 = vlaneseq
  %v38 = vshrl.u32 %v37, 7
  %v39 = vsub.s32 %v36, %v38
  %v40 = vrot.slane %v32, %v39
  %v41 = vcombine.high %v40, %v40
  %v43 = vunpack.c.l.s4 1966171168
  %v44 = vunpack.c.0.s8 %v43
  %v45 = vlaneseq
  %v46 = vshrl.u32 %v45, 7
  %v47 = vsub.s32 %v44, %v46
  %v48 = vrot.slane %v41, %v47
  %v50 = vmul.f32 %v30, %v48
  %v51 = vld [vmem:[%s5] sm:$0x1]
  %v52 = vmul.f32 %v24, %v50
  %v53 = vsub.f32 %v51, %v52
  %v54 = vld [vmem:[%s0] sm:$0xff]
  %v55 = vld [vmem:[%s0 + $0x8] sm:$0xff]
  %v56 = vld [vmem:[%s0 + $0x10] sm:$0xff]
  %v57 = vld [vmem:[%s0 + $0x18] sm:$0xff]
  %v59 = vlaneseq
  %v60 = vshrl.u32 %v59, 7
  %v61 = vsub.s32 0, %v60
  %v62 = vrot.slane %v50, %v61
  %v64 = vmul.f32 %v54, %v62
  %v65 = vmul.f32 %v55, %v62
  %v66 = vmul.f32 %v56, %v62
  %v67 = vmul.f32 %v57, %v62
  %v69 = vlaneseq
  %v70 = vshrl.u32 %v69, 7
  %v71 = vsub.s32 0, %v70
  %v72 = vrot.slane %v53, %v71
  %v74 = vadd.f32 %v64, %v72
  %v75 = vadd.f32 %v65, %v72
  %v76 = vadd.f32 %v66, %v72
  %v77 = vadd.f32 %v67, %v72
  %v78 = vmax.f32 %v74, 0.0
  %v79 = vmax.f32 %v75, 0.0
  %v80 = vmax.f32 %v76, 0.0
  %v81 = vmax.f32 %v77, 0.0
  %v82 = vld [vmem:[%s2] sm:$0xff]
  %v83 = vld [vmem:[%s2 + $0x8] sm:$0xff]
  %v84 = vld [vmem:[%s3] sm:$0x1]
  %v86 = vlaneseq
  %v87 = vshrl.u32 %v86, 7
  %v88 = vsub.s32 0, %v87
  %v89 = vrot.slane %v84, %v88
  %vm91 = vcmask 130048
  %v93 = vsel %vm91, %v78, 0
  %v96 = vsel %vm91, %v79, 0
  %v99 = vsel %vm91, %v80, 0
  %v102 = vsel %vm91, %v81, 0
  %104 = vmatprep.subr.mxu0 0.0
  %105 = vmatpush1.msra.mxu0 %v82
  %106 = vmatprep.subr.mxu0 0.0
  %107 = vmatpush1.msra.mxu0 %v83
  %108 = vmatprep.subr.mxu0 0.0
  %109 = vmatpush1.msra.mxu0 0.0
  %110 = vmatprep.subr.mxu0 0.0
  %111 = vmatpush1.msra.mxu0 0.0
  %112 = vmatprep.subr.mxu0 0.0
  %113 = vmatpush1.msra.mxu0 0.0
  %114 = vmatprep.subr.mxu0 0.0
  %115 = vmatpush1.msra.mxu0 0.0
  %116 = vmatprep.subr.mxu0 0.0
  %117 = vmatpush1.msra.mxu0 0.0
  %118 = vmatprep.subr.mxu0 0.0
  %119 = vmatpush1.msra.mxu0 0.0
  %120 = vmatprep.subr.mxu0 0.0
  %121 = vmatpush1.msra.mxu0 0.0
  %122 = vmatprep.subr.mxu0 0.0
  %123 = vmatpush1.msra.mxu0 0.0
  %124 = vmatprep.subr.mxu0 0.0
  %125 = vmatpush1.msra.mxu0 0.0
  %126 = vmatprep.subr.mxu0 0.0
  %127 = vmatpush1.msra.mxu0 0.0
  %128 = vmatprep.subr.mxu0 0.0
  %129 = vmatpush1.msra.mxu0 0.0
  %130 = vmatprep.subr.mxu0 0.0
  %131 = vmatpush1.msra.mxu0 0.0
  %132 = vmatprep.subr.mxu0 0.0
  %133 = vmatpush1.msra.mxu0 0.0
  %134 = vmatprep.subr.mxu0 0.0
  %135 = vmatpush1.msra.mxu0 0.0
  %136 = vmatprep.subr.mxu0 0.0
  %137 = vmatpush1.msra.mxu0 0.0
  %138 = vmatprep.subr.mxu0 0.0
  %139 = vmatpush1.msra.mxu0 0.0
  %140 = vmatprep.subr.mxu0 0.0
  %141 = vmatpush1.msra.mxu0 0.0
  %142 = vmatprep.subr.mxu0 0.0
  %143 = vmatpush1.msra.mxu0 0.0
  %144 = vmatprep.subr.mxu0 0.0
  %145 = vmatpush1.msra.mxu0 0.0
  %146 = vmatprep.subr.mxu0 0.0
  %147 = vmatpush1.msra.mxu0 0.0
  %148 = vmatprep.subr.mxu0 0.0
  %149 = vmatpush1.msra.mxu0 0.0
  %150 = vmatprep.subr.mxu0 0.0
  %151 = vmatpush1.msra.mxu0 0.0
  %152 = vmatprep.subr.mxu0 0.0
  %153 = vmatpush1.msra.mxu0 0.0
  %154 = vmatprep.subr.mxu0 0.0
  %155 = vmatpush1.msra.mxu0 0.0
  %156 = vmatprep.subr.mxu0 0.0
  %157 = vmatpush1.msra.mxu0 0.0
  %158 = vmatprep.subr.mxu0 0.0
  %159 = vmatpush1.msra.mxu0 0.0
  %160 = vmatprep.subr.mxu0 0.0
  %161 = vmatpush1.msra.mxu0 0.0
  %162 = vmatprep.subr.mxu0 0.0
  %163 = vmatpush1.msra.mxu0 0.0
  %164 = vmatprep.subr.mxu0 0.0
  %165 = vmatpush1.msra.mxu0 0.0
  %166 = vmatprep.subr.mxu0 0.0
  %167 = vmatpush1.msra.mxu0 0.0
  %168 = vmatprep.mubr.f32.mxu0 0.0
  %169 = vmatmul.mubr.f32.gmra.mrb[0].mxu0 %v93
  %v170 = vpop.f32.mrb[0].mxu0
  %v171 = vadd.f32 %v89, %v170
  %v172 = vpop.f32.mrb[0].mxu0
  %173 = vmatprep.mubr.f32.mxu0 0.0
  %174 = vmatmul.mubr.f32.gmra.mrb[0].mxu0 %v96
  %v175 = vpop.f32.mrb[0].mxu0
  %v176 = vadd.f32 %v89, %v175
  %v177 = vpop.f32.mrb[0].mxu0
  %178 = vmatprep.mubr.f32.mxu0 0.0
  %179 = vmatmul.mubr.f32.gmra.mrb[0].mxu0 %v99
  %v180 = vpop.f32.mrb[0].mxu0
  %v181 = vadd.f32 %v89, %v180
  %v182 = vpop.f32.mrb[0].mxu0
  %183 = vmatprep.mubr.f32.mxu0 0.0
  %184 = vmatmul.mubr.f32.gmra.mrb[0].mxu0 %v102
  %v185 = vpop.f32.mrb[0].mxu0
  %v186 = vadd.f32 %v89, %v185
  %v187 = vpop.f32.mrb[0].mxu0
  %188 = vdwg.mxu0
  %193 = vrot.lane.b32.xlu0 %v171, 16
  %v194 = vpop.permute.xlu0 %193
  %195 = vrot.lane.b32.xlu0 %v176, 16
  %v196 = vpop.permute.xlu0 %195
  %197 = vrot.lane.b32.xlu0 %v181, 16
  %v198 = vpop.permute.xlu0 %197
  %199 = vrot.lane.b32.xlu0 %v186, 16
  %v200 = vpop.permute.xlu0 %199
  %v205 = vadd.f32 %v74, %v194
  %v206 = vadd.f32 %v75, %v196
  %v207 = vadd.f32 %v76, %v198
  %v208 = vadd.f32 %v77, %v200
  %v209 = vmax.f32 %v205, 0.0
  %v210 = vmax.f32 %v206, 0.0
  %v211 = vmax.f32 %v207, 0.0
  %v212 = vmax.f32 %v208, 0.0
  %217 = vrot.lane.b32.xlu0 %v209, 112
  %v218 = vpop.permute.xlu0 %217
  %219 = vrot.lane.b32.xlu0 %v210, 112
  %v220 = vpop.permute.xlu0 %219
  %221 = vrot.lane.b32.xlu0 %v211, 112
  %v222 = vpop.permute.xlu0 %221
  %223 = vrot.lane.b32.xlu0 %v212, 112
  %v224 = vpop.permute.xlu0 %223
  %229 = vst.msk [vmem:[%s6] sm:$0xff] %vm91, %v218
  %230 = vst.msk [vmem:[%s6 + $0x8] sm:$0xff] %vm91, %v220
  %231 = vst.msk [vmem:[%s6 + $0x10] sm:$0xff] %vm91, %v222
  %232 = vst.msk [vmem:[%s6 + $0x18] sm:$0xff] %vm91, %v224
  // Predicated region
  $region26: #{residnn_forward.20} parent=0 // pred_check
    _
  $region27: #{residnn_forward.20} parent=0 // pred_check_branch
    %234 = sbr.rel (0) target = $region29
  $region28: #{residnn_forward.20} parent=0 // pred_region
    _
  $region29: #{residnn_forward.20} parent=0 // pred_fallthru
    _
  // Predicated region
  $region30: #{residnn_forward.20} parent=0 // pred_check
    _
  $region31: #{residnn_forward.20} parent=0 // pred_check_branch
    %236 = sbr.rel (0) target = $region33
  $region32: #{residnn_forward.20} parent=0 // pred_region
    _
  $region33: #{residnn_forward.20} parent=0 // pred_fallthru
    _

// kernel: residnn_forward.19
$region0: #{residnn_forward.19}
  #allocation0 [shape = 'u32[]', space=smem, size = 0x4, offset = 0x4, fixed_abs, tag = 'smem constant byte address 0x4 - core index']
  #allocation1 [shape = 'u32[144,128]{1,0:T(1,128)}', space=vmem, size = 0x12000, scoped, tag = 'internal scratch']
  %s0 = inlined_call_operand.vmem [shape: f32[32,3], index: 0, kind: input, shape index: {}]
  %s1 = inlined_call_operand.vmem [shape: f32[3,32], index: 1, kind: input, shape index: {}]
  %s2 = inlined_call_operand.vmem [shape: f32[1,32], index: 2, kind: input, shape index: {}]
  %s3 = inlined_call_operand.vmem [shape: f32[32,32], index: 3, kind: output, shape index: {0}]
  %s4 = inlined_call_operand.vmem [shape: f32[2,32], index: 4, kind: output, shape index: {1}]
  %5 = xla_tuple %s3, %s4
  %s6 = sld [smem:[#allocation0]]
  $region34: #{residnn_forward.19} parent=0
    _
  %s8 = ssub.s32 1, %s6
  %s9 = scalar_select 0, %s8, %s6
  // Predicated region
  $region2: #{residnn_forward.19} parent=0 // pred_check
    _
  $region3: #{residnn_forward.19} parent=0 // pred_check_branch
    %11 = sbr.rel (0) target = $region5
  $region4: #{residnn_forward.19} parent=0 // pred_region
    _
  $region5: #{residnn_forward.19} parent=0 // pred_fallthru
    _
  // Predicated region
  $region6: #{residnn_forward.19} parent=0 // pred_check
    _
  $region7: #{residnn_forward.19} parent=0 // pred_check_branch
    %13 = sbr.rel (0) target = $region9
  $region8: #{residnn_forward.19} parent=0 // pred_region
    _
  $region9: #{residnn_forward.19} parent=0 // pred_fallthru
    _
  // Predicated region
  $region10: #{residnn_forward.19} parent=0 // pred_check
    _
  $region11: #{residnn_forward.19} parent=0 // pred_check_branch
    %15 = sbr.rel (0) target = $region13
  $region12: #{residnn_forward.19} parent=0 // pred_region
    _
  $region13: #{residnn_forward.19} parent=0 // pred_fallthru
    _
  %v16 = vld [vmem:[%s0] sm:$0xff]
  %v17 = vld [vmem:[%s0 + $0x8] sm:$0xff]
  %v18 = vld [vmem:[%s0 + $0x10] sm:$0xff]
  %v19 = vld [vmem:[%s0 + $0x18] sm:$0xff]
  %v20 = vld [vmem:[%s1] sm:$0x7]
  %v21 = vld [vmem:[%s2] sm:$0x1]
  %v23 = vlaneseq
  %v24 = vshrl.u32 %v23, 7
  %v25 = vsub.s32 0, %v24
  %v26 = vrot.slane %v21, %v25
  %vm28 = vcmask 23552
  %v30 = vsel %vm28, %v16, 0
  %v33 = vsel %vm28, %v17, 0
  %v36 = vsel %vm28, %v18, 0
  %v39 = vsel %vm28, %v19, 0
  %vm41 = vcmask 1042432
  %v43 = vsel %vm41, %v20, 0
  %45 = vmatprep.subr.mxu0 0.0
  %46 = vmatpush1.msra.mxu0 %v43
  %47 = vmatprep.subr.mxu0 0.0
  %48 = vmatpush1.msra.mxu0 0.0
  %49 = vmatprep.subr.mxu0 0.0
  %50 = vmatpush1.msra.mxu0 0.0
  %51 = vmatprep.subr.mxu0 0.0
  %52 = vmatpush1.msra.mxu0 0.0
  %53 = vmatprep.subr.mxu0 0.0
  %54 = vmatpush1.msra.mxu0 0.0
  %55 = vmatprep.subr.mxu0 0.0
  %56 = vmatpush1.msra.mxu0 0.0
  %57 = vmatprep.subr.mxu0 0.0
  %58 = vmatpush1.msra.mxu0 0.0
  %59 = vmatprep.subr.mxu0 0.0
  %60 = vmatpush1.msra.mxu0 0.0
  %61 = vmatprep.subr.mxu0 0.0
  %62 = vmatpush1.msra.mxu0 0.0
  %63 = vmatprep.subr.mxu0 0.0
  %64 = vmatpush1.msra.mxu0 0.0
  %65 = vmatprep.subr.mxu0 0.0
  %66 = vmatpush1.msra.mxu0 0.0
  %67 = vmatprep.subr.mxu0 0.0
  %68 = vmatpush1.msra.mxu0 0.0
  %69 = vmatprep.subr.mxu0 0.0
  %70 = vmatpush1.msra.mxu0 0.0
  %71 = vmatprep.subr.mxu0 0.0
  %72 = vmatpush1.msra.mxu0 0.0
  %73 = vmatprep.subr.mxu0 0.0
  %74 = vmatpush1.msra.mxu0 0.0
  %75 = vmatprep.subr.mxu0 0.0
  %76 = vmatpush1.msra.mxu0 0.0
  %77 = vmatprep.subr.mxu0 0.0
  %78 = vmatpush1.msra.mxu0 0.0
  %79 = vmatprep.subr.mxu0 0.0
  %80 = vmatpush1.msra.mxu0 0.0
  %81 = vmatprep.subr.mxu0 0.0
  %82 = vmatpush1.msra.mxu0 0.0
  %83 = vmatprep.subr.mxu0 0.0
  %84 = vmatpush1.msra.mxu0 0.0
  %85 = vmatprep.subr.mxu0 0.0
  %86 = vmatpush1.msra.mxu0 0.0
  %87 = vmatprep.subr.mxu0 0.0
  %88 = vmatpush1.msra.mxu0 0.0
  %89 = vmatprep.subr.mxu0 0.0
  %90 = vmatpush1.msra.mxu0 0.0
  %91 = vmatprep.subr.mxu0 0.0
  %92 = vmatpush1.msra.mxu0 0.0
  %93 = vmatprep.subr.mxu0 0.0
  %94 = vmatpush1.msra.mxu0 0.0
  %95 = vmatprep.subr.mxu0 0.0
  %96 = vmatpush1.msra.mxu0 0.0
  %97 = vmatprep.subr.mxu0 0.0
  %98 = vmatpush1.msra.mxu0 0.0
  %99 = vmatprep.subr.mxu0 0.0
  %100 = vmatpush1.msra.mxu0 0.0
  %101 = vmatprep.subr.mxu0 0.0
  %102 = vmatpush1.msra.mxu0 0.0
  %103 = vmatprep.subr.mxu0 0.0
  %104 = vmatpush1.msra.mxu0 0.0
  %105 = vmatprep.subr.mxu0 0.0
  %106 = vmatpush1.msra.mxu0 0.0
  %107 = vmatprep.subr.mxu0 0.0
  %108 = vmatpush1.msra.mxu0 0.0
  %109 = vmatprep.mubr.f32.mxu0 0.0
  %110 = vmatmul.mubr.f32.gmra.mrb[0].mxu0 %v30
  %v111 = vpop.f32.mrb[0].mxu0
  %v112 = vadd.f32 %v26, %v111
  %v113 = vpop.f32.mrb[0].mxu0
  %114 = vmatprep.mubr.f32.mxu0 0.0
  %115 = vmatmul.mubr.f32.gmra.mrb[0].mxu0 %v33
  %v116 = vpop.f32.mrb[0].mxu0
  %v117 = vadd.f32 %v26, %v116
  %v118 = vpop.f32.mrb[0].mxu0
  %119 = vmatprep.mubr.f32.mxu0 0.0
  %120 = vmatmul.mubr.f32.gmra.mrb[0].mxu0 %v36
  %v121 = vpop.f32.mrb[0].mxu0
  %v122 = vadd.f32 %v26, %v121
  %v123 = vpop.f32.mrb[0].mxu0
  %124 = vmatprep.mubr.f32.mxu0 0.0
  %125 = vmatmul.mubr.f32.gmra.mrb[0].mxu0 %v39
  %v126 = vpop.f32.mrb[0].mxu0
  %v127 = vadd.f32 %v26, %v126
  %v128 = vpop.f32.mrb[0].mxu0
  %129 = vdwg.mxu0
  %vm130 = vcmask 261120
  %131 = vst.msk [vmem:[%s3] sm:$0xff] %vm130, %v112
  %132 = vst.msk [vmem:[%s3 + $0x8] sm:$0xff] %vm130, %v117
  %133 = vst.msk [vmem:[%s3 + $0x10] sm:$0xff] %vm130, %v122
  %134 = vst.msk [vmem:[%s3 + $0x18] sm:$0xff] %vm130, %v127
  %v135 = vlaneseq
  %v136 = vshrl.u32 %v135, 7
  %v137 = vadd.s32 %v136, 8
  %v138 = vadd.s32 %v136, 16
  %v139 = vadd.s32 %v136, 24
  %s140 = smul.u32 0, 32
  %v141 = vstv %s140
  %v142 = vadd.s32 %v136, %v141
  %v143 = vadd.s32 %v137, %v141
  %v144 = vadd.s32 %v138, %v141
  %v145 = vadd.s32 %v139, %v141
  %vm146 = vcmp.lt.s32.totalorder %v142, 32
  %vm147 = vcmp.lt.s32.totalorder %v143, 32
  %vm148 = vcmp.lt.s32.totalorder %v144, 32
  %vm149 = vcmp.lt.s32.totalorder %v145, 32
  %v150 = vsel %vm146, 1, 0
  %v151 = vsel %vm147, 1, 0
  %v152 = vsel %vm148, 1, 0
  %v153 = vsel %vm149, 1, 0
  %v154 = vcvt.s32.f32 %v150
  %v155 = vcvt.s32.f32 %v151
  %v156 = vcvt.s32.f32 %v152
  %v157 = vcvt.s32.f32 %v153
  %v158 = vmul.f32 %v112, %v154
  %v159 = vmul.f32 %v117, %v155
  %v160 = vmul.f32 %v122, %v156
  %v161 = vmul.f32 %v127, %v157
  %v162 = vsel %vm130, %v158, 0.0
  %v163 = vsel %vm130, %v159, 0.0
  %v164 = vadd.f32 %v162, %v163
  %v165 = vsel %vm130, %v160, 0.0
  %v166 = vadd.f32 %v164, %v165
  %v167 = vsel %vm130, %v161, 0.0
  %v168 = vadd.f32 %v166, %v167
  %v169 = vrot.slane %v168, 4
  %v170 = vadd.f32 %v168, %v169
  %v171 = vrot.slane %v170, 2
  %v172 = vadd.f32 %v170, %v171
  %v173 = vrot.slane %v172, 1
  %v174 = vadd.f32 %v172, %v173
  %v175 = vmul.f32 %v158, %v158
  %v176 = vmul.f32 %v159, %v159
  %v177 = vmul.f32 %v160, %v160
  %v178 = vmul.f32 %v161, %v161
  %v179 = vsel %vm130, %v175, 0.0
  %v180 = vsel %vm130, %v176, 0.0
  %v181 = vadd.f32 %v179, %v180
  %v182 = vsel %vm130, %v177, 0.0
  %v183 = vadd.f32 %v181, %v182
  %v184 = vsel %vm130, %v178, 0.0
  %v185 = vadd.f32 %v183, %v184
  %v186 = vrot.slane %v185, 4
  %v187 = vadd.f32 %v185, %v186
  %v188 = vrot.slane %v187, 2
  %v189 = vadd.f32 %v187, %v188
  %v190 = vrot.slane %v189, 1
  %v191 = vadd.f32 %v189, %v190
  %p192 = scmp.eq.s32.totalorder 0, 0
  // Predicated region
  $region14: #{residnn_forward.19} parent=0 // pred_check
    %p193 = pneg %p192
  $region15: #{residnn_forward.19} parent=0 // pred_check_branch
    %195 = sbr.rel (%p193) target = $region17
  $region16: #{residnn_forward.19} parent=0 // pred_region
    %vm196 = vcmask 254976
    %197 = vst.msk [vmem:[%s4] sm:$0x3] %vm196, 0.0
  $region17: #{residnn_forward.19} parent=0 // pred_fallthru
    _
  %v198 = vld [vmem:[%s4] sm:$0x3]
  %vm199 = vcmask 1040384
  %v200 = vsel %vm199, %v174, %v191
  %v201 = vadd.f32 %v198, %v200
  %vm202 = vcmask 254976
  %203 = vst.msk [vmem:[%s4] sm:$0x3] %vm202, %v201
  // Predicated region
  $region18: #{residnn_forward.19} parent=0 // pred_check
    _
  $region19: #{residnn_forward.19} parent=0 // pred_check_branch
    %205 = sbr.rel (0) target = $region21
  $region20: #{residnn_forward.19} parent=0 // pred_region
    _
  $region21: #{residnn_forward.19} parent=0 // pred_fallthru
    _
  // Predicated region
  $region22: #{residnn_forward.19} parent=0 // pred_check
    _
  $region23: #{residnn_forward.19} parent=0 // pred_check_branch
    %207 = sbr.rel (0) target = $region25
  $region24: #{residnn_forward.19} parent=0 // pred_region
    _
  $region25: #{residnn_forward.19} parent=0 // pred_fallthru
    _
  // Predicated region
  $region26: #{residnn_forward.19} parent=0 // pred_check
    _
  $region27: #{residnn_forward.19} parent=0 // pred_check_branch
    %209 = sbr.rel (0) target = $region29
  $region28: #{residnn_forward.19} parent=0 // pred_region
    _
  $region29: #{residnn_forward.19} parent=0 // pred_fallthru
    _
  // Predicated region
  $region30: #{residnn_forward.19} parent=0 // pred_check
    _
  $region31: #{residnn_forward.19} parent=0 // pred_check_branch
    %211 = sbr.rel (0) target = $region33
  $region32: #{residnn_forward.19} parent=0 // pred_region
    _
  $region33: #{residnn_forward.19} parent=0 // pred_fallthru
    _

// kernel: residnn_forward.21
$region0: #{residnn_forward.21}
  #allocation0 [shape = 'u32[]', space=smem, size = 0x4, offset = 0x4, fixed_abs, tag = 'smem constant byte address 0x4 - core index']
  #allocation1 [shape = 'u32[144,128]{1,0:T(1,128)}', space=vmem, size = 0x12000, scoped, tag = 'internal scratch']
  %s0 = inlined_call_operand.vmem [shape: f32[32,48], index: 0, kind: input, shape index: {}]
  %s1 = inlined_call_operand.vmem [shape: f32[48,32], index: 1, kind: input, shape index: {}]
  %s2 = inlined_call_operand.vmem [shape: f32[1,32], index: 2, kind: input, shape index: {}]
  %s3 = inlined_call_operand.vmem [shape: f32[32,32], index: 3, kind: output, shape index: {0}]
  %s4 = inlined_call_operand.vmem [shape: f32[2,32], index: 4, kind: output, shape index: {1}]
  %5 = xla_tuple %s3, %s4
  %s6 = sld [smem:[#allocation0]]
  $region34: #{residnn_forward.21} parent=0
    _
  %s8 = ssub.s32 1, %s6
  %s9 = scalar_select 0, %s8, %s6
  // Predicated region
  $region2: #{residnn_forward.21} parent=0 // pred_check
    _
  $region3: #{residnn_forward.21} parent=0 // pred_check_branch
    %11 = sbr.rel (0) target = $region5
  $region4: #{residnn_forward.21} parent=0 // pred_region
    _
  $region5: #{residnn_forward.21} parent=0 // pred_fallthru
    _
  // Predicated region
  $region6: #{residnn_forward.21} parent=0 // pred_check
    _
  $region7: #{residnn_forward.21} parent=0 // pred_check_branch
    %13 = sbr.rel (0) target = $region9
  $region8: #{residnn_forward.21} parent=0 // pred_region
    _
  $region9: #{residnn_forward.21} parent=0 // pred_fallthru
    _
  // Predicated region
  $region10: #{residnn_forward.21} parent=0 // pred_check
    _
  $region11: #{residnn_forward.21} parent=0 // pred_check_branch
    %15 = sbr.rel (0) target = $region13
  $region12: #{residnn_forward.21} parent=0 // pred_region
    _
  $region13: #{residnn_forward.21} parent=0 // pred_fallthru
    _
  %v16 = vld [vmem:[%s0] sm:$0xff]
  %v17 = vld [vmem:[%s0 + $0x8] sm:$0xff]
  %v18 = vld [vmem:[%s0 + $0x10] sm:$0xff]
  %v19 = vld [vmem:[%s0 + $0x18] sm:$0xff]
  %v20 = vld [vmem:[%s1] sm:$0xff]
  %v21 = vld [vmem:[%s1 + $0x8] sm:$0xff]
  %v22 = vld [vmem:[%s1 + $0x10] sm:$0xff]
  %v23 = vld [vmem:[%s1 + $0x18] sm:$0xff]
  %v24 = vld [vmem:[%s1 + $0x20] sm:$0xff]
  %v25 = vld [vmem:[%s1 + $0x28] sm:$0xff]
  %v26 = vld [vmem:[%s2] sm:$0x1]
  %v28 = vlaneseq
  %v29 = vshrl.u32 %v28, 7
  %v30 = vsub.s32 0, %v29
  %v31 = vrot.slane %v26, %v30
  %vm33 = vcmask 392192
  %v35 = vsel %vm33, %v16, 0
  %v38 = vsel %vm33, %v17, 0
  %v41 = vsel %vm33, %v18, 0
  %v44 = vsel %vm33, %v19, 0
  %46 = vmatprep.subr.mxu0 0.0
  %47 = vmatpush1.msra.mxu0 %v20
  %48 = vmatprep.subr.mxu0 0.0
  %49 = vmatpush1.msra.mxu0 %v21
  %50 = vmatprep.subr.mxu0 0.0
  %51 = vmatpush1.msra.mxu0 %v22
  %52 = vmatprep.subr.mxu0 0.0
  %53 = vmatpush1.msra.mxu0 %v23
  %54 = vmatprep.subr.mxu0 0.0
  %55 = vmatpush1.msra.mxu0 %v24
  %56 = vmatprep.subr.mxu0 0.0
  %57 = vmatpush1.msra.mxu0 %v25
  %58 = vmatprep.subr.mxu0 0.0
  %59 = vmatpush1.msra.mxu0 0.0
  %60 = vmatprep.subr.mxu0 0.0
  %61 = vmatpush1.msra.mxu0 0.0
  %62 = vmatprep.subr.mxu0 0.0
  %63 = vmatpush1.msra.mxu0 0.0
  %64 = vmatprep.subr.mxu0 0.0
  %65 = vmatpush1.msra.mxu0 0.0
  %66 = vmatprep.subr.mxu0 0.0
  %67 = vmatpush1.msra.mxu0 0.0
  %68 = vmatprep.subr.mxu0 0.0
  %69 = vmatpush1.msra.mxu0 0.0
  %70 = vmatprep.subr.mxu0 0.0
  %71 = vmatpush1.msra.mxu0 0.0
  %72 = vmatprep.subr.mxu0 0.0
  %73 = vmatpush1.msra.mxu0 0.0
  %74 = vmatprep.subr.mxu0 0.0
  %75 = vmatpush1.msra.mxu0 0.0
  %76 = vmatprep.subr.mxu0 0.0
  %77 = vmatpush1.msra.mxu0 0.0
  %78 = vmatprep.subr.mxu0 0.0
  %79 = vmatpush1.msra.mxu0 0.0
  %80 = vmatprep.subr.mxu0 0.0
  %81 = vmatpush1.msra.mxu0 0.0
  %82 = vmatprep.subr.mxu0 0.0
  %83 = vmatpush1.msra.mxu0 0.0
  %84 = vmatprep.subr.mxu0 0.0
  %85 = vmatpush1.msra.mxu0 0.0
  %86 = vmatprep.subr.mxu0 0.0
  %87 = vmatpush1.msra.mxu0 0.0
  %88 = vmatprep.subr.mxu0 0.0
  %89 = vmatpush1.msra.mxu0 0.0
  %90 = vmatprep.subr.mxu0 0.0
  %91 = vmatpush1.msra.mxu0 0.0
  %92 = vmatprep.subr.mxu0 0.0
  %93 = vmatpush1.msra.mxu0 0.0
  %94 = vmatprep.subr.mxu0 0.0
  %95 = vmatpush1.msra.mxu0 0.0
  %96 = vmatprep.subr.mxu0 0.0
  %97 = vmatpush1.msra.mxu0 0.0
  %98 = vmatprep.subr.mxu0 0.0
  %99 = vmatpush1.msra.mxu0 0.0
  %100 = vmatprep.subr.mxu0 0.0
  %101 = vmatpush1.msra.mxu0 0.0
  %102 = vmatprep.subr.mxu0 0.0
  %103 = vmatpush1.msra.mxu0 0.0
  %104 = vmatprep.subr.mxu0 0.0
  %105 = vmatpush1.msra.mxu0 0.0
  %106 = vmatprep.subr.mxu0 0.0
  %107 = vmatpush1.msra.mxu0 0.0
  %108 = vmatprep.subr.mxu0 0.0
  %109 = vmatpush1.msra.mxu0 0.0
  %110 = vmatprep.mubr.f32.mxu0 0.0
  %111 = vmatmul.mubr.f32.gmra.mrb[0].mxu0 %v35
  %v112 = vpop.f32.mrb[0].mxu0
  %v113 = vadd.f32 %v31, %v112
  %v114 = vpop.f32.mrb[0].mxu0
  %115 = vmatprep.mubr.f32.mxu0 0.0
  %116 = vmatmul.mubr.f32.gmra.mrb[0].mxu0 %v38
  %v117 = vpop.f32.mrb[0].mxu0
  %v118 = vadd.f32 %v31, %v117
  %v119 = vpop.f32.mrb[0].mxu0
  %120 = vmatprep.mubr.f32.mxu0 0.0
  %121 = vmatmul.mubr.f32.gmra.mrb[0].mxu0 %v41
  %v122 = vpop.f32.mrb[0].mxu0
  %v123 = vadd.f32 %v31, %v122
  %v124 = vpop.f32.mrb[0].mxu0
  %125 = vmatprep.mubr.f32.mxu0 0.0
  %126 = vmatmul.mubr.f32.gmra.mrb[0].mxu0 %v44
  %v127 = vpop.f32.mrb[0].mxu0
  %v128 = vadd.f32 %v31, %v127
  %v129 = vpop.f32.mrb[0].mxu0
  %130 = vdwg.mxu0
  %vm131 = vcmask 261120
  %132 = vst.msk [vmem:[%s3] sm:$0xff] %vm131, %v113
  %133 = vst.msk [vmem:[%s3 + $0x8] sm:$0xff] %vm131, %v118
  %134 = vst.msk [vmem:[%s3 + $0x10] sm:$0xff] %vm131, %v123
  %135 = vst.msk [vmem:[%s3 + $0x18] sm:$0xff] %vm131, %v128
  %v136 = vlaneseq
  %v137 = vshrl.u32 %v136, 7
  %v138 = vadd.s32 %v137, 8
  %v139 = vadd.s32 %v137, 16
  %v140 = vadd.s32 %v137, 24
  %s141 = smul.u32 0, 32
  %v142 = vstv %s141
  %v143 = vadd.s32 %v137, %v142
  %v144 = vadd.s32 %v138, %v142
  %v145 = vadd.s32 %v139, %v142
  %v146 = vadd.s32 %v140, %v142
  %vm147 = vcmp.lt.s32.totalorder %v143, 32
  %vm148 = vcmp.lt.s32.totalorder %v144, 32
  %vm149 = vcmp.lt.s32.totalorder %v145, 32
  %vm150 = vcmp.lt.s32.totalorder %v146, 32
  %v151 = vsel %vm147, 1, 0
  %v152 = vsel %vm148, 1, 0
  %v153 = vsel %vm149, 1, 0
  %v154 = vsel %vm150, 1, 0
  %v155 = vcvt.s32.f32 %v151
  %v156 = vcvt.s32.f32 %v152
  %v157 = vcvt.s32.f32 %v153
  %v158 = vcvt.s32.f32 %v154
  %v159 = vmul.f32 %v113, %v155
  %v160 = vmul.f32 %v118, %v156
  %v161 = vmul.f32 %v123, %v157
  %v162 = vmul.f32 %v128, %v158
  %v163 = vsel %vm131, %v159, 0.0
  %v164 = vsel %vm131, %v160, 0.0
  %v165 = vadd.f32 %v163, %v164
  %v166 = vsel %vm131, %v161, 0.0
  %v167 = vadd.f32 %v165, %v166
  %v168 = vsel %vm131, %v162, 0.0
  %v169 = vadd.f32 %v167, %v168
  %v170 = vrot.slane %v169, 4
  %v171 = vadd.f32 %v169, %v170
  %v172 = vrot.slane %v171, 2
  %v173 = vadd.f32 %v171, %v172
  %v174 = vrot.slane %v173, 1
  %v175 = vadd.f32 %v173, %v174
  %v176 = vmul.f32 %v159, %v159
  %v177 = vmul.f32 %v160, %v160
  %v178 = vmul.f32 %v161, %v161
  %v179 = vmul.f32 %v162, %v162
  %v180 = vsel %vm131, %v176, 0.0
  %v181 = vsel %vm131, %v177, 0.0
  %v182 = vadd.f32 %v180, %v181
  %v183 = vsel %vm131, %v178, 0.0
  %v184 = vadd.f32 %v182, %v183
  %v185 = vsel %vm131, %v179, 0.0
  %v186 = vadd.f32 %v184, %v185
  %v187 = vrot.slane %v186, 4
  %v188 = vadd.f32 %v186, %v187
  %v189 = vrot.slane %v188, 2
  %v190 = vadd.f32 %v188, %v189
  %v191 = vrot.slane %v190, 1
  %v192 = vadd.f32 %v190, %v191
  %p193 = scmp.eq.s32.totalorder 0, 0
  // Predicated region
  $region14: #{residnn_forward.21} parent=0 // pred_check
    %p194 = pneg %p193
  $region15: #{residnn_forward.21} parent=0 // pred_check_branch
    %196 = sbr.rel (%p194) target = $region17
  $region16: #{residnn_forward.21} parent=0 // pred_region
    %vm197 = vcmask 254976
    %198 = vst.msk [vmem:[%s4] sm:$0x3] %vm197, 0.0
  $region17: #{residnn_forward.21} parent=0 // pred_fallthru
    _
  %v199 = vld [vmem:[%s4] sm:$0x3]
  %vm200 = vcmask 1040384
  %v201 = vsel %vm200, %v175, %v192
  %v202 = vadd.f32 %v199, %v201
  %vm203 = vcmask 254976
  %204 = vst.msk [vmem:[%s4] sm:$0x3] %vm203, %v202
  // Predicated region
  $region18: #{residnn_forward.21} parent=0 // pred_check
    _
  $region19: #{residnn_forward.21} parent=0 // pred_check_branch
    %206 = sbr.rel (0) target = $region21
  $region20: #{residnn_forward.21} parent=0 // pred_region
    _
  $region21: #{residnn_forward.21} parent=0 // pred_fallthru
    _
  // Predicated region
  $region22: #{residnn_forward.21} parent=0 // pred_check
    _
  $region23: #{residnn_forward.21} parent=0 // pred_check_branch
    %208 = sbr.rel (0) target = $region25
  $region24: #{residnn_forward.21} parent=0 // pred_region
    _
  $region25: #{residnn_forward.21} parent=0 // pred_fallthru
    _
  // Predicated region
  $region26: #{residnn_forward.21} parent=0 // pred_check
    _
  $region27: #{residnn_forward.21} parent=0 // pred_check_branch
    %210 = sbr.rel (0) target = $region29
  $region28: #{residnn_forward.21} parent=0 // pred_region
    _
  $region29: #{residnn_forward.21} parent=0 // pred_fallthru
    _
  // Predicated region
  $region30: #{residnn_forward.21} parent=0 // pred_check
    _
  $region31: #{residnn_forward.21} parent=0 // pred_check_branch
    %212 = sbr.rel (0) target = $region33
  $region32: #{residnn_forward.21} parent=0 // pred_region
    _
  $region33: #{residnn_forward.21} parent=0 // pred_fallthru
    _

// kernel: residnn_forward.26
$region0: #{residnn_forward.26}
  #allocation0 [shape = 'u32[]', space=smem, size = 0x4, offset = 0x4, fixed_abs, tag = 'smem constant byte address 0x4 - core index']
  #allocation1 [shape = 'u32[144,128]{1,0:T(1,128)}', space=vmem, size = 0x12000, scoped, tag = 'internal scratch']
  %s0 = inlined_call_operand.vmem [shape: f32[16,64], index: 0, kind: input, shape index: {}]
  %s1 = inlined_call_operand.vmem [shape: f32[2,64], index: 1, kind: input, shape index: {}]
  %s2 = inlined_call_operand.vmem [shape: f32[32,32], index: 2, kind: input, shape index: {}]
  %s3 = inlined_call_operand.vmem [shape: f32[1,32], index: 3, kind: input, shape index: {}]
  %s4 = inlined_call_operand.vmem [shape: f32[1,64], index: 4, kind: input, shape index: {}]
  %s5 = inlined_call_operand.vmem [shape: f32[1,64], index: 5, kind: input, shape index: {}]
  %s6 = inlined_call_operand.vmem [shape: f32[16,32], index: 6, kind: output, shape index: {}]
  %s7 = sld [smem:[#allocation0]]
  $region34: #{residnn_forward.26} parent=0
    _
  %s9 = ssub.s32 1, %s7
  %s10 = scalar_select 0, %s9, %s7
  // Predicated region
  $region2: #{residnn_forward.26} parent=0 // pred_check
    _
  $region3: #{residnn_forward.26} parent=0 // pred_check_branch
    %12 = sbr.rel (0) target = $region5
  $region4: #{residnn_forward.26} parent=0 // pred_region
    _
  $region5: #{residnn_forward.26} parent=0 // pred_fallthru
    _
  // Predicated region
  $region6: #{residnn_forward.26} parent=0 // pred_check
    _
  $region7: #{residnn_forward.26} parent=0 // pred_check_branch
    %14 = sbr.rel (0) target = $region9
  $region8: #{residnn_forward.26} parent=0 // pred_region
    _
  $region9: #{residnn_forward.26} parent=0 // pred_fallthru
    _
  // Predicated region
  $region10: #{residnn_forward.26} parent=0 // pred_check
    _
  $region11: #{residnn_forward.26} parent=0 // pred_check_branch
    %16 = sbr.rel (0) target = $region13
  $region12: #{residnn_forward.26} parent=0 // pred_region
    _
  $region13: #{residnn_forward.26} parent=0 // pred_fallthru
    _
  // Predicated region
  $region14: #{residnn_forward.26} parent=0 // pred_check
    _
  $region15: #{residnn_forward.26} parent=0 // pred_check_branch
    %18 = sbr.rel (0) target = $region17
  $region16: #{residnn_forward.26} parent=0 // pred_region
    _
  $region17: #{residnn_forward.26} parent=0 // pred_fallthru
    _
  // Predicated region
  $region18: #{residnn_forward.26} parent=0 // pred_check
    _
  $region19: #{residnn_forward.26} parent=0 // pred_check_branch
    %20 = sbr.rel (0) target = $region21
  $region20: #{residnn_forward.26} parent=0 // pred_region
    _
  $region21: #{residnn_forward.26} parent=0 // pred_fallthru
    _
  // Predicated region
  $region22: #{residnn_forward.26} parent=0 // pred_check
    _
  $region23: #{residnn_forward.26} parent=0 // pred_check_branch
    %22 = sbr.rel (0) target = $region25
  $region24: #{residnn_forward.26} parent=0 // pred_region
    _
  $region25: #{residnn_forward.26} parent=0 // pred_fallthru
    _
  %v23 = vld [vmem:[%s1] sm:$0x3]
  %v24 = vmul.f32 %v23, 0.0625
  %v25 = vmul.f32 %v24, %v24
  %v27 = vrot.slane %v25, 7
  %v29 = vsub.f32 %v24, %v27
  %v30 = vld [vmem:[%s4] sm:$0x1]
  %v31 = vadd.f32 %v29, 1e-05
  %v32 = vrsqrt.pop %v31
  %v35 = vunpack.c.l.s4 1966171168
  %v36 = vunpack.c.0.s8 %v35
  %v37 = vlaneseq
  %v38 = vshrl.u32 %v37, 7
  %v39 = vsub.s32 %v36, %v38
  %v40 = vrot.slane %v32, %v39
  %v41 = vcombine.high %v40, %v40
  %v43 = vunpack.c.l.s4 1966171168
  %v44 = vunpack.c.0.s8 %v43
  %v45 = vlaneseq
  %v46 = vshrl.u32 %v45, 7
  %v47 = vsub.s32 %v44, %v46
  %v48 = vrot.slane %v41, %v47
  %v50 = vmul.f32 %v30, %v48
  %v51 = vld [vmem:[%s5] sm:$0x1]
  %v52 = vmul.f32 %v24, %v50
  %v53 = vsub.f32 %v51, %v52
  %v54 = vld [vmem:[%s0] sm:$0xff]
  %v55 = vld [vmem:[%s0 + $0x8] sm:$0xff]
  %v57 = vlaneseq
  %v58 = vshrl.u32 %v57, 7
  %v59 = vsub.s32 0, %v58
  %v60 = vrot.slane %v50, %v59
  %v62 = vmul.f32 %v54, %v60
  %v63 = vmul.f32 %v55, %v60
  %v65 = vlaneseq
  %v66 = vshrl.u32 %v65, 7
  %v67 = vsub.s32 0, %v66
  %v68 = vrot.slane %v53, %v67
  %v70 = vadd.f32 %v62, %v68
  %v71 = vadd.f32 %v63, %v68
  %v72 = vmax.f32 %v70, 0.0
  %v73 = vmax.f32 %v71, 0.0
  %v74 = vld [vmem:[%s2] sm:$0xff]
  %v75 = vld [vmem:[%s2 + $0x8] sm:$0xff]
  %v76 = vld [vmem:[%s2 + $0x10] sm:$0xff]
  %v77 = vld [vmem:[%s2 + $0x18] sm:$0xff]
  %v78 = vld [vmem:[%s3] sm:$0x1]
  %v80 = vlaneseq
  %v81 = vshrl.u32 %v80, 7
  %v82 = vsub.s32 0, %v81
  %v83 = vrot.slane %v78, %v82
  %vm85 = vcmask 261120
  %v87 = vsel %vm85, %v72, 0
  %v90 = vsel %vm85, %v73, 0
  %92 = vmatprep.subr.mxu0 0.0
  %93 = vmatpush1.msra.mxu0 %v74
  %94 = vmatprep.subr.mxu0 0.0
  %95 = vmatpush1.msra.mxu0 %v75
  %96 = vmatprep.subr.mxu0 0.0
  %97 = vmatpush1.msra.mxu0 %v76
  %98 = vmatprep.subr.mxu0 0.0
  %99 = vmatpush1.msra.mxu0 %v77
  %100 = vmatprep.subr.mxu0 0.0
  %101 = vmatpush1.msra.mxu0 0.0
  %102 = vmatprep.subr.mxu0 0.0
  %103 = vmatpush1.msra.mxu0 0.0
  %104 = vmatprep.subr.mxu0 0.0
  %105 = vmatpush1.msra.mxu0 0.0
  %106 = vmatprep.subr.mxu0 0.0
  %107 = vmatpush1.msra.mxu0 0.0
  %108 = vmatprep.subr.mxu0 0.0
  %109 = vmatpush1.msra.mxu0 0.0
  %110 = vmatprep.subr.mxu0 0.0
  %111 = vmatpush1.msra.mxu0 0.0
  %112 = vmatprep.subr.mxu0 0.0
  %113 = vmatpush1.msra.mxu0 0.0
  %114 = vmatprep.subr.mxu0 0.0
  %115 = vmatpush1.msra.mxu0 0.0
  %116 = vmatprep.subr.mxu0 0.0
  %117 = vmatpush1.msra.mxu0 0.0
  %118 = vmatprep.subr.mxu0 0.0
  %119 = vmatpush1.msra.mxu0 0.0
  %120 = vmatprep.subr.mxu0 0.0
  %121 = vmatpush1.msra.mxu0 0.0
  %122 = vmatprep.subr.mxu0 0.0
  %123 = vmatpush1.msra.mxu0 0.0
  %124 = vmatprep.subr.mxu0 0.0
  %125 = vmatpush1.msra.mxu0 0.0
  %126 = vmatprep.subr.mxu0 0.0
  %127 = vmatpush1.msra.mxu0 0.0
  %128 = vmatprep.subr.mxu0 0.0
  %129 = vmatpush1.msra.mxu0 0.0
  %130 = vmatprep.subr.mxu0 0.0
  %131 = vmatpush1.msra.mxu0 0.0
  %132 = vmatprep.subr.mxu0 0.0
  %133 = vmatpush1.msra.mxu0 0.0
  %134 = vmatprep.subr.mxu0 0.0
  %135 = vmatpush1.msra.mxu0 0.0
  %136 = vmatprep.subr.mxu0 0.0
  %137 = vmatpush1.msra.mxu0 0.0
  %138 = vmatprep.subr.mxu0 0.0
  %139 = vmatpush1.msra.mxu0 0.0
  %140 = vmatprep.subr.mxu0 0.0
  %141 = vmatpush1.msra.mxu0 0.0
  %142 = vmatprep.subr.mxu0 0.0
  %143 = vmatpush1.msra.mxu0 0.0
  %144 = vmatprep.subr.mxu0 0.0
  %145 = vmatpush1.msra.mxu0 0.0
  %146 = vmatprep.subr.mxu0 0.0
  %147 = vmatpush1.msra.mxu0 0.0
  %148 = vmatprep.subr.mxu0 0.0
  %149 = vmatpush1.msra.mxu0 0.0
  %150 = vmatprep.subr.mxu0 0.0
  %151 = vmatpush1.msra.mxu0 0.0
  %152 = vmatprep.subr.mxu0 0.0
  %153 = vmatpush1.msra.mxu0 0.0
  %154 = vmatprep.subr.mxu0 0.0
  %155 = vmatpush1.msra.mxu0 0.0
  %156 = vmatprep.mubr.f32.mxu0 0.0
  %157 = vmatmul.mubr.f32.gmra.mrb[0].mxu0 %v87
  %v158 = vpop.f32.mrb[0].mxu0
  %v159 = vadd.f32 %v83, %v158
  %v160 = vpop.f32.mrb[0].mxu0
  %161 = vmatprep.mubr.f32.mxu0 0.0
  %162 = vmatmul.mubr.f32.gmra.mrb[0].mxu0 %v90
  %v163 = vpop.f32.mrb[0].mxu0
  %v164 = vadd.f32 %v83, %v163
  %v165 = vpop.f32.mrb[0].mxu0
  %166 = vdwg.mxu0
  %169 = vrot.lane.b32.xlu0 %v159, 32
  %v170 = vpop.permute.xlu0 %169
  %171 = vrot.lane.b32.xlu0 %v164, 32
  %v172 = vpop.permute.xlu0 %171
  %v175 = vadd.f32 %v70, %v170
  %v176 = vadd.f32 %v71, %v172
  %v177 = vmax.f32 %v175, 0.0
  %v178 = vmax.f32 %v176, 0.0
  %181 = vrot.lane.b32.xlu0 %v177, 96
  %v182 = vpop.permute.xlu0 %181
  %183 = vrot.lane.b32.xlu0 %v178, 96
  %v184 = vpop.permute.xlu0 %183
  %187 = vst.msk [vmem:[%s6] sm:$0xff] %vm85, %v182
  %188 = vst.msk [vmem:[%s6 + $0x8] sm:$0xff] %vm85, %v184
  // Predicated region
  $region26: #{residnn_forward.26} parent=0 // pred_check
    _
  $region27: #{residnn_forward.26} parent=0 // pred_check_branch
    %190 = sbr.rel (0) target = $region29
  $region28: #{residnn_forward.26} parent=0 // pred_region
    _
  $region29: #{residnn_forward.26} parent=0 // pred_fallthru
    _
  // Predicated region
  $region30: #{residnn_forward.26} parent=0 // pred_check
    _
  $region31: #{residnn_forward.26} parent=0 // pred_check_branch
    %192 = sbr.rel (0) target = $region33
  $region32: #{residnn_forward.26} parent=0 // pred_region
    _
  $region33: #{residnn_forward.26} parent=0 // pred_fallthru
    _

// kernel: residnn_forward.25
$region0: #{residnn_forward.25}
  #allocation0 [shape = 'u32[]', space=smem, size = 0x4, offset = 0x4, fixed_abs, tag = 'smem constant byte address 0x4 - core index']
  #allocation1 [shape = 'u32[144,128]{1,0:T(1,128)}', space=vmem, size = 0x12000, scoped, tag = 'internal scratch']
  %s0 = inlined_call_operand.vmem [shape: f32[16,48], index: 0, kind: input, shape index: {}]
  %s1 = inlined_call_operand.vmem [shape: f32[48,64], index: 1, kind: input, shape index: {}]
  %s2 = inlined_call_operand.vmem [shape: f32[1,64], index: 2, kind: input, shape index: {}]
  %s3 = inlined_call_operand.vmem [shape: f32[16,64], index: 3, kind: output, shape index: {0}]
  %s4 = inlined_call_operand.vmem [shape: f32[2,64], index: 4, kind: output, shape index: {1}]
  %5 = xla_tuple %s3, %s4
  %s6 = sld [smem:[#allocation0]]
  $region34: #{residnn_forward.25} parent=0
    _
  %s8 = ssub.s32 1, %s6
  %s9 = scalar_select 0, %s8, %s6
  // Predicated region
  $region2: #{residnn_forward.25} parent=0 // pred_check
    _
  $region3: #{residnn_forward.25} parent=0 // pred_check_branch
    %11 = sbr.rel (0) target = $region5
  $region4: #{residnn_forward.25} parent=0 // pred_region
    _
  $region5: #{residnn_forward.25} parent=0 // pred_fallthru
    _
  // Predicated region
  $region6: #{residnn_forward.25} parent=0 // pred_check
    _
  $region7: #{residnn_forward.25} parent=0 // pred_check_branch
    %13 = sbr.rel (0) target = $region9
  $region8: #{residnn_forward.25} parent=0 // pred_region
    _
  $region9: #{residnn_forward.25} parent=0 // pred_fallthru
    _
  // Predicated region
  $region10: #{residnn_forward.25} parent=0 // pred_check
    _
  $region11: #{residnn_forward.25} parent=0 // pred_check_branch
    %15 = sbr.rel (0) target = $region13
  $region12: #{residnn_forward.25} parent=0 // pred_region
    _
  $region13: #{residnn_forward.25} parent=0 // pred_fallthru
    _
  %v16 = vld [vmem:[%s0] sm:$0xff]
  %v17 = vld [vmem:[%s0 + $0x8] sm:$0xff]
  %v18 = vld [vmem:[%s1] sm:$0xff]
  %v19 = vld [vmem:[%s1 + $0x8] sm:$0xff]
  %v20 = vld [vmem:[%s1 + $0x10] sm:$0xff]
  %v21 = vld [vmem:[%s1 + $0x18] sm:$0xff]
  %v22 = vld [vmem:[%s1 + $0x20] sm:$0xff]
  %v23 = vld [vmem:[%s1 + $0x28] sm:$0xff]
  %v24 = vld [vmem:[%s2] sm:$0x1]
  %v26 = vlaneseq
  %v27 = vshrl.u32 %v26, 7
  %v28 = vsub.s32 0, %v27
  %v29 = vrot.slane %v24, %v28
  %vm31 = vcmask 392192
  %v33 = vsel %vm31, %v16, 0
  %v36 = vsel %vm31, %v17, 0
  %38 = vmatprep.subr.mxu0 0.0
  %39 = vmatpush1.msra.mxu0 %v18
  %40 = vmatprep.subr.mxu0 0.0
  %41 = vmatpush1.msra.mxu0 %v19
  %42 = vmatprep.subr.mxu0 0.0
  %43 = vmatpush1.msra.mxu0 %v20
  %44 = vmatprep.subr.mxu0 0.0
  %45 = vmatpush1.msra.mxu0 %v21
  %46 = vmatprep.subr.mxu0 0.0
  %47 = vmatpush1.msra.mxu0 %v22
  %48 = vmatprep.subr.mxu0 0.0
  %49 = vmatpush1.msra.mxu0 %v23
  %50 = vmatprep.subr.mxu0 0.0
  %51 = vmatpush1.msra.mxu0 0.0
  %52 = vmatprep.subr.mxu0 0.0
  %53 = vmatpush1.msra.mxu0 0.0
  %54 = vmatprep.subr.mxu0 0.0
  %55 = vmatpush1.msra.mxu0 0.0
  %56 = vmatprep.subr.mxu0 0.0
  %57 = vmatpush1.msra.mxu0 0.0
  %58 = vmatprep.subr.mxu0 0.0
  %59 = vmatpush1.msra.mxu0 0.0
  %60 = vmatprep.subr.mxu0 0.0
  %61 = vmatpush1.msra.mxu0 0.0
  %62 = vmatprep.subr.mxu0 0.0
  %63 = vmatpush1.msra.mxu0 0.0
  %64 = vmatprep.subr.mxu0 0.0
  %65 = vmatpush1.msra.mxu0 0.0
  %66 = vmatprep.subr.mxu0 0.0
  %67 = vmatpush1.msra.mxu0 0.0
  %68 = vmatprep.subr.mxu0 0.0
  %69 = vmatpush1.msra.mxu0 0.0
  %70 = vmatprep.subr.mxu0 0.0
  %71 = vmatpush1.msra.mxu0 0.0
  %72 = vmatprep.subr.mxu0 0.0
  %73 = vmatpush1.msra.mxu0 0.0
  %74 = vmatprep.subr.mxu0 0.0
  %75 = vmatpush1.msra.mxu0 0.0
  %76 = vmatprep.subr.mxu0 0.0
  %77 = vmatpush1.msra.mxu0 0.0
  %78 = vmatprep.subr.mxu0 0.0
  %79 = vmatpush1.msra.mxu0 0.0
  %80 = vmatprep.subr.mxu0 0.0
  %81 = vmatpush1.msra.mxu0 0.0
  %82 = vmatprep.subr.mxu0 0.0
  %83 = vmatpush1.msra.mxu0 0.0
  %84 = vmatprep.subr.mxu0 0.0
  %85 = vmatpush1.msra.mxu0 0.0
  %86 = vmatprep.subr.mxu0 0.0
  %87 = vmatpush1.msra.mxu0 0.0
  %88 = vmatprep.subr.mxu0 0.0
  %89 = vmatpush1.msra.mxu0 0.0
  %90 = vmatprep.subr.mxu0 0.0
  %91 = vmatpush1.msra.mxu0 0.0
  %92 = vmatprep.subr.mxu0 0.0
  %93 = vmatpush1.msra.mxu0 0.0
  %94 = vmatprep.subr.mxu0 0.0
  %95 = vmatpush1.msra.mxu0 0.0
  %96 = vmatprep.subr.mxu0 0.0
  %97 = vmatpush1.msra.mxu0 0.0
  %98 = vmatprep.subr.mxu0 0.0
  %99 = vmatpush1.msra.mxu0 0.0
  %100 = vmatprep.subr.mxu0 0.0
  %101 = vmatpush1.msra.mxu0 0.0
  %102 = vmatprep.mubr.f32.mxu0 0.0
  %103 = vmatmul.mubr.f32.gmra.mrb[0].mxu0 %v33
  %v104 = vpop.f32.mrb[0].mxu0
  %v105 = vadd.f32 %v29, %v104
  %v106 = vpop.f32.mrb[0].mxu0
  %107 = vmatprep.mubr.f32.mxu0 0.0
  %108 = vmatmul.mubr.f32.gmra.mrb[0].mxu0 %v36
  %v109 = vpop.f32.mrb[0].mxu0
  %v110 = vadd.f32 %v29, %v109
  %v111 = vpop.f32.mrb[0].mxu0
  %112 = vdwg.mxu0
  %vm113 = vcmask 523264
  %114 = vst.msk [vmem:[%s3] sm:$0xff] %vm113, %v105
  %115 = vst.msk [vmem:[%s3 + $0x8] sm:$0xff] %vm113, %v110
  %v116 = vlaneseq
  %v117 = vshrl.u32 %v116, 7
  %v118 = vadd.s32 %v117, 8
  %s119 = smul.u32 0, 16
  %v120 = vstv %s119
  %v121 = vadd.s32 %v117, %v120
  %v122 = vadd.s32 %v118, %v120
  %vm123 = vcmp.lt.s32.totalorder %v121, 16
  %vm124 = vcmp.lt.s32.totalorder %v122, 16
  %v125 = vsel %vm123, 1, 0
  %v126 = vsel %vm124, 1, 0
  %v127 = vcvt.s32.f32 %v125
  %v128 = vcvt.s32.f32 %v126
  %v129 = vmul.f32 %v105, %v127
  %v130 = vmul.f32 %v110, %v128
  %v131 = vsel %vm113, %v129, 0.0
  %v132 = vsel %vm113, %v130, 0.0
  %v133 = vadd.f32 %v131, %v132
  %v134 = vrot.slane %v133, 4
  %v135 = vadd.f32 %v133, %v134
  %v136 = vrot.slane %v135, 2
  %v137 = vadd.f32 %v135, %v136
  %v138 = vrot.slane %v137, 1
  %v139 = vadd.f32 %v137, %v138
  %v140 = vmul.f32 %v129, %v129
  %v141 = vmul.f32 %v130, %v130
  %v142 = vsel %vm113, %v140, 0.0
  %v143 = vsel %vm113, %v141, 0.0
  %v144 = vadd.f32 %v142, %v143
  %v145 = vrot.slane %v144, 4
  %v146 = vadd.f32 %v144, %v145
  %v147 = vrot.slane %v146, 2
  %v148 = vadd.f32 %v146, %v147
  %v149 = vrot.slane %v148, 1
  %v150 = vadd.f32 %v148, %v149
  %p151 = scmp.eq.s32.totalorder 0, 0
  // Predicated region
  $region14: #{residnn_forward.25} parent=0 // pred_check
    %p152 = pneg %p151
  $region15: #{residnn_forward.25} parent=0 // pred_check_branch
    %154 = sbr.rel (%p152) target = $region17
  $region16: #{residnn_forward.25} parent=0 // pred_region
    %vm155 = vcmask 517120
    %156 = vst.msk [vmem:[%s4] sm:$0x3] %vm155, 0.0
  $region17: #{residnn_forward.25} parent=0 // pred_fallthru
    _
  %v157 = vld [vmem:[%s4] sm:$0x3]
  %vm158 = vcmask 1040384
  %v159 = vsel %vm158, %v139, %v150
  %v160 = vadd.f32 %v157, %v159
  %vm161 = vcmask 517120
  %162 = vst.msk [vmem:[%s4] sm:$0x3] %vm161, %v160
  // Predicated region
  $region18: #{residnn_forward.25} parent=0 // pred_check
    _
  $region19: #{residnn_forward.25} parent=0 // pred_check_branch
    %164 = sbr.rel (0) target = $region21
  $region20: #{residnn_forward.25} parent=0 // pred_region
    _
  $region21: #{residnn_forward.25} parent=0 // pred_fallthru
    _
  // Predicated region
  $region22: #{residnn_forward.25} parent=0 // pred_check
    _
  $region23: #{residnn_forward.25} parent=0 // pred_check_branch
    %166 = sbr.rel (0) target = $region25
  $region24: #{residnn_forward.25} parent=0 // pred_region
    _
  $region25: #{residnn_forward.25} parent=0 // pred_fallthru
    _
  // Predicated region
  $region26: #{residnn_forward.25} parent=0 // pred_check
    _
  $region27: #{residnn_forward.25} parent=0 // pred_check_branch
    %168 = sbr.rel (0) target = $region29
  $region28: #{residnn_forward.25} parent=0 // pred_region
    _
  $region29: #{residnn_forward.25} parent=0 // pred_fallthru
    _
  // Predicated region
  $region30: #{residnn_forward.25} parent=0 // pred_check
    _
  $region31: #{residnn_forward.25} parent=0 // pred_check_branch
    %170 = sbr.rel (0) target = $region33
  $region32: #{residnn_forward.25} parent=0 // pred_region
    _
  $region33: #{residnn_forward.25} parent=0 // pred_fallthru
    _

// kernel: residnn_forward.27
$region0: #{residnn_forward.27}
  #allocation0 [shape = 'u32[]', space=smem, size = 0x4, offset = 0x4, fixed_abs, tag = 'smem constant byte address 0x4 - core index']
  #allocation1 [shape = 'u32[144,128]{1,0:T(1,128)}', space=vmem, size = 0x12000, scoped, tag = 'internal scratch']
  %s0 = inlined_call_operand.vmem [shape: f32[16,96], index: 0, kind: input, shape index: {}]
  %s1 = inlined_call_operand.vmem [shape: f32[96,64], index: 1, kind: input, shape index: {}]
  %s2 = inlined_call_operand.vmem [shape: f32[1,64], index: 2, kind: input, shape index: {}]
  %s3 = inlined_call_operand.vmem [shape: f32[16,64], index: 3, kind: output, shape index: {0}]
  %s4 = inlined_call_operand.vmem [shape: f32[2,64], index: 4, kind: output, shape index: {1}]
  %5 = xla_tuple %s3, %s4
  %s6 = sld [smem:[#allocation0]]
  $region34: #{residnn_forward.27} parent=0
    _
  %s8 = ssub.s32 1, %s6
  %s9 = scalar_select 0, %s8, %s6
  // Predicated region
  $region2: #{residnn_forward.27} parent=0 // pred_check
    _
  $region3: #{residnn_forward.27} parent=0 // pred_check_branch
    %11 = sbr.rel (0) target = $region5
  $region4: #{residnn_forward.27} parent=0 // pred_region
    _
  $region5: #{residnn_forward.27} parent=0 // pred_fallthru
    _
  // Predicated region
  $region6: #{residnn_forward.27} parent=0 // pred_check
    _
  $region7: #{residnn_forward.27} parent=0 // pred_check_branch
    %13 = sbr.rel (0) target = $region9
  $region8: #{residnn_forward.27} parent=0 // pred_region
    _
  $region9: #{residnn_forward.27} parent=0 // pred_fallthru
    _
  // Predicated region
  $region10: #{residnn_forward.27} parent=0 // pred_check
    _
  $region11: #{residnn_forward.27} parent=0 // pred_check_branch
    %15 = sbr.rel (0) target = $region13
  $region12: #{residnn_forward.27} parent=0 // pred_region
    _
  $region13: #{residnn_forward.27} parent=0 // pred_fallthru
    _
  %v16 = vld [vmem:[%s0] sm:$0xff]
  %v17 = vld [vmem:[%s0 + $0x8] sm:$0xff]
  %v18 = vld [vmem:[%s1] sm:$0xff]
  %v19 = vld [vmem:[%s1 + $0x8] sm:$0xff]
  %v20 = vld [vmem:[%s1 + $0x10] sm:$0xff]
  %v21 = vld [vmem:[%s1 + $0x18] sm:$0xff]
  %v22 = vld [vmem:[%s1 + $0x20] sm:$0xff]
  %v23 = vld [vmem:[%s1 + $0x28] sm:$0xff]
  %v24 = vld [vmem:[%s1 + $0x30] sm:$0xff]
  %v25 = vld [vmem:[%s1 + $0x38] sm:$0xff]
  %v26 = vld [vmem:[%s1 + $0x40] sm:$0xff]
  %v27 = vld [vmem:[%s1 + $0x48] sm:$0xff]
  %v28 = vld [vmem:[%s1 + $0x50] sm:$0xff]
  %v29 = vld [vmem:[%s1 + $0x58] sm:$0xff]
  %v30 = vld [vmem:[%s2] sm:$0x1]
  %v32 = vlaneseq
  %v33 = vshrl.u32 %v32, 7
  %v34 = vsub.s32 0, %v33
  %v35 = vrot.slane %v30, %v34
  %vm37 = vcmask 785408
  %v39 = vsel %vm37, %v16, 0
  %v42 = vsel %vm37, %v17, 0
  %44 = vmatprep.subr.mxu0 0.0
  %45 = vmatpush1.msra.mxu0 %v18
  %46 = vmatprep.subr.mxu0 0.0
  %47 = vmatpush1.msra.mxu0 %v19
  %48 = vmatprep.subr.mxu0 0.0
  %49 = vmatpush1.msra.mxu0 %v20
  %50 = vmatprep.subr.mxu0 0.0
  %51 = vmatpush1.msra.mxu0 %v21
  %52 = vmatprep.subr.mxu0 0.0
  %53 = vmatpush1.msra.mxu0 %v22
  %54 = vmatprep.subr.mxu0 0.0
  %55 = vmatpush1.msra.mxu0 %v23
  %56 = vmatprep.subr.mxu0 0.0
  %57 = vmatpush1.msra.mxu0 %v24
  %58 = vmatprep.subr.mxu0 0.0
  %59 = vmatpush1.msra.mxu0 %v25
  %60 = vmatprep.subr.mxu0 0.0
  %61 = vmatpush1.msra.mxu0 %v26
  %62 = vmatprep.subr.mxu0 0.0
  %63 = vmatpush1.msra.mxu0 %v27
  %64 = vmatprep.subr.mxu0 0.0
  %65 = vmatpush1.msra.mxu0 %v28
  %66 = vmatprep.subr.mxu0 0.0
  %67 = vmatpush1.msra.mxu0 %v29
  %68 = vmatprep.subr.mxu0 0.0
  %69 = vmatpush1.msra.mxu0 0.0
  %70 = vmatprep.subr.mxu0 0.0
  %71 = vmatpush1.msra.mxu0 0.0
  %72 = vmatprep.subr.mxu0 0.0
  %73 = vmatpush1.msra.mxu0 0.0
  %74 = vmatprep.subr.mxu0 0.0
  %75 = vmatpush1.msra.mxu0 0.0
  %76 = vmatprep.subr.mxu0 0.0
  %77 = vmatpush1.msra.mxu0 0.0
  %78 = vmatprep.subr.mxu0 0.0
  %79 = vmatpush1.msra.mxu0 0.0
  %80 = vmatprep.subr.mxu0 0.0
  %81 = vmatpush1.msra.mxu0 0.0
  %82 = vmatprep.subr.mxu0 0.0
  %83 = vmatpush1.msra.mxu0 0.0
  %84 = vmatprep.subr.mxu0 0.0
  %85 = vmatpush1.msra.mxu0 0.0
  %86 = vmatprep.subr.mxu0 0.0
  %87 = vmatpush1.msra.mxu0 0.0
  %88 = vmatprep.subr.mxu0 0.0
  %89 = vmatpush1.msra.mxu0 0.0
  %90 = vmatprep.subr.mxu0 0.0
  %91 = vmatpush1.msra.mxu0 0.0
  %92 = vmatprep.subr.mxu0 0.0
  %93 = vmatpush1.msra.mxu0 0.0
  %94 = vmatprep.subr.mxu0 0.0
  %95 = vmatpush1.msra.mxu0 0.0
  %96 = vmatprep.subr.mxu0 0.0
  %97 = vmatpush1.msra.mxu0 0.0
  %98 = vmatprep.subr.mxu0 0.0
  %99 = vmatpush1.msra.mxu0 0.0
  %100 = vmatprep.subr.mxu0 0.0
  %101 = vmatpush1.msra.mxu0 0.0
  %102 = vmatprep.subr.mxu0 0.0
  %103 = vmatpush1.msra.mxu0 0.0
  %104 = vmatprep.subr.mxu0 0.0
  %105 = vmatpush1.msra.mxu0 0.0
  %106 = vmatprep.subr.mxu0 0.0
  %107 = vmatpush1.msra.mxu0 0.0
  %108 = vmatprep.mubr.f32.mxu0 0.0
  %109 = vmatmul.mubr.f32.gmra.mrb[0].mxu0 %v39
  %v110 = vpop.f32.mrb[0].mxu0
  %v111 = vadd.f32 %v35, %v110
  %v112 = vpop.f32.mrb[0].mxu0
  %113 = vmatprep.mubr.f32.mxu0 0.0
  %114 = vmatmul.mubr.f32.gmra.mrb[0].mxu0 %v42
  %v115 = vpop.f32.mrb[0].mxu0
  %v116 = vadd.f32 %v35, %v115
  %v117 = vpop.f32.mrb[0].mxu0
  %118 = vdwg.mxu0
  %vm119 = vcmask 523264
  %120 = vst.msk [vmem:[%s3] sm:$0xff] %vm119, %v111
  %121 = vst.msk [vmem:[%s3 + $0x8] sm:$0xff] %vm119, %v116
  %v122 = vlaneseq
  %v123 = vshrl.u32 %v122, 7
  %v124 = vadd.s32 %v123, 8
  %s125 = smul.u32 0, 16
  %v126 = vstv %s125
  %v127 = vadd.s32 %v123, %v126
  %v128 = vadd.s32 %v124, %v126
  %vm129 = vcmp.lt.s32.totalorder %v127, 16
  %vm130 = vcmp.lt.s32.totalorder %v128, 16
  %v131 = vsel %vm129, 1, 0
  %v132 = vsel %vm130, 1, 0
  %v133 = vcvt.s32.f32 %v131
  %v134 = vcvt.s32.f32 %v132
  %v135 = vmul.f32 %v111, %v133
  %v136 = vmul.f32 %v116, %v134
  %v137 = vsel %vm119, %v135, 0.0
  %v138 = vsel %vm119, %v136, 0.0
  %v139 = vadd.f32 %v137, %v138
  %v140 = vrot.slane %v139, 4
  %v141 = vadd.f32 %v139, %v140
  %v142 = vrot.slane %v141, 2
  %v143 = vadd.f32 %v141, %v142
  %v144 = vrot.slane %v143, 1
  %v145 = vadd.f32 %v143, %v144
  %v146 = vmul.f32 %v135, %v135
  %v147 = vmul.f32 %v136, %v136
  %v148 = vsel %vm119, %v146, 0.0
  %v149 = vsel %vm119, %v147, 0.0
  %v150 = vadd.f32 %v148, %v149
  %v151 = vrot.slane %v150, 4
  %v152 = vadd.f32 %v150, %v151
  %v153 = vrot.slane %v152, 2
  %v154 = vadd.f32 %v152, %v153
  %v155 = vrot.slane %v154, 1
  %v156 = vadd.f32 %v154, %v155
  %p157 = scmp.eq.s32.totalorder 0, 0
  // Predicated region
  $region14: #{residnn_forward.27} parent=0 // pred_check
    %p158 = pneg %p157
  $region15: #{residnn_forward.27} parent=0 // pred_check_branch
    %160 = sbr.rel (%p158) target = $region17
  $region16: #{residnn_forward.27} parent=0 // pred_region
    %vm161 = vcmask 517120
    %162 = vst.msk [vmem:[%s4] sm:$0x3] %vm161, 0.0
  $region17: #{residnn_forward.27} parent=0 // pred_fallthru
    _
  %v163 = vld [vmem:[%s4] sm:$0x3]
  %vm164 = vcmask 1040384
  %v165 = vsel %vm164, %v145, %v156
  %v166 = vadd.f32 %v163, %v165
  %vm167 = vcmask 517120
  %168 = vst.msk [vmem:[%s4] sm:$0x3] %vm167, %v166
  // Predicated region
  $region18: #{residnn_forward.27} parent=0 // pred_check
    _
  $region19: #{residnn_forward.27} parent=0 // pred_check_branch
    %170 = sbr.rel (0) target = $region21
  $region20: #{residnn_forward.27} parent=0 // pred_region
    _
  $region21: #{residnn_forward.27} parent=0 // pred_fallthru
    _
  // Predicated region
  $region22: #{residnn_forward.27} parent=0 // pred_check
    _
  $region23: #{residnn_forward.27} parent=0 // pred_check_branch
    %172 = sbr.rel (0) target = $region25
  $region24: #{residnn_forward.27} parent=0 // pred_region
    _
  $region25: #{residnn_forward.27} parent=0 // pred_fallthru
    _
  // Predicated region
  $region26: #{residnn_forward.27} parent=0 // pred_check
    _
  $region27: #{residnn_forward.27} parent=0 // pred_check_branch
    %174 = sbr.rel (0) target = $region29
  $region28: #{residnn_forward.27} parent=0 // pred_region
    _
  $region29: #{residnn_forward.27} parent=0 // pred_fallthru
    _
  // Predicated region
  $region30: #{residnn_forward.27} parent=0 // pred_check
    _
  $region31: #{residnn_forward.27} parent=0 // pred_check_branch
    %176 = sbr.rel (0) target = $region33
  $region32: #{residnn_forward.27} parent=0 // pred_region
    _
  $region33: #{residnn_forward.27} parent=0 // pred_fallthru
    _

// kernel: residnn_forward.31
$region0: #{residnn_forward.31}
  #allocation0 [shape = 'u32[]', space=smem, size = 0x4, offset = 0x4, fixed_abs, tag = 'smem constant byte address 0x4 - core index']
  #allocation1 [shape = 'u32[144,128]{1,0:T(1,128)}', space=vmem, size = 0x12000, scoped, tag = 'internal scratch']
  %s0 = inlined_call_operand.vmem [shape: f32[8,96], index: 0, kind: input, shape index: {}]
  %s1 = inlined_call_operand.vmem [shape: f32[96,128], index: 1, kind: input, shape index: {}]
  %s2 = inlined_call_operand.vmem [shape: f32[1,128], index: 2, kind: input, shape index: {}]
  %s3 = inlined_call_operand.vmem [shape: f32[8,128], index: 3, kind: output, shape index: {0}]
  %s4 = inlined_call_operand.vmem [shape: f32[2,128], index: 4, kind: output, shape index: {1}]
  %5 = xla_tuple %s3, %s4
  %s6 = sld [smem:[#allocation0]]
  $region34: #{residnn_forward.31} parent=0
    _
  %s8 = ssub.s32 1, %s6
  %s9 = scalar_select 0, %s8, %s6
  // Predicated region
  $region2: #{residnn_forward.31} parent=0 // pred_check
    _
  $region3: #{residnn_forward.31} parent=0 // pred_check_branch
    %11 = sbr.rel (0) target = $region5
  $region4: #{residnn_forward.31} parent=0 // pred_region
    _
  $region5: #{residnn_forward.31} parent=0 // pred_fallthru
    _
  // Predicated region
  $region6: #{residnn_forward.31} parent=0 // pred_check
    _
  $region7: #{residnn_forward.31} parent=0 // pred_check_branch
    %13 = sbr.rel (0) target = $region9
  $region8: #{residnn_forward.31} parent=0 // pred_region
    _
  $region9: #{residnn_forward.31} parent=0 // pred_fallthru
    _
  // Predicated region
  $region10: #{residnn_forward.31} parent=0 // pred_check
    _
  $region11: #{residnn_forward.31} parent=0 // pred_check_branch
    %15 = sbr.rel (0) target = $region13
  $region12: #{residnn_forward.31} parent=0 // pred_region
    _
  $region13: #{residnn_forward.31} parent=0 // pred_fallthru
    _
  %v16 = vld [vmem:[%s0] sm:$0xff]
  %v17 = vld [vmem:[%s1] sm:$0xff]
  %v18 = vld [vmem:[%s1 + $0x8] sm:$0xff]
  %v19 = vld [vmem:[%s1 + $0x10] sm:$0xff]
  %v20 = vld [vmem:[%s1 + $0x18] sm:$0xff]
  %v21 = vld [vmem:[%s1 + $0x20] sm:$0xff]
  %v22 = vld [vmem:[%s1 + $0x28] sm:$0xff]
  %v23 = vld [vmem:[%s1 + $0x30] sm:$0xff]
  %v24 = vld [vmem:[%s1 + $0x38] sm:$0xff]
  %v25 = vld [vmem:[%s1 + $0x40] sm:$0xff]
  %v26 = vld [vmem:[%s1 + $0x48] sm:$0xff]
  %v27 = vld [vmem:[%s1 + $0x50] sm:$0xff]
  %v28 = vld [vmem:[%s1 + $0x58] sm:$0xff]
  %v29 = vld [vmem:[%s2] sm:$0x1]
  %v31 = vlaneseq
  %v32 = vshrl.u32 %v31, 7
  %v33 = vsub.s32 0, %v32
  %v34 = vrot.slane %v29, %v33
  %vm36 = vcmask 785408
  %v38 = vsel %vm36, %v16, 0
  %40 = vmatprep.subr.mxu0 0.0
  %41 = vmatpush1.msra.mxu0 %v17
  %42 = vmatprep.subr.mxu0 0.0
  %43 = vmatpush1.msra.mxu0 %v18
  %44 = vmatprep.subr.mxu0 0.0
  %45 = vmatpush1.msra.mxu0 %v19
  %46 = vmatprep.subr.mxu0 0.0
  %47 = vmatpush1.msra.mxu0 %v20
  %48 = vmatprep.subr.mxu0 0.0
  %49 = vmatpush1.msra.mxu0 %v21
  %50 = vmatprep.subr.mxu0 0.0
  %51 = vmatpush1.msra.mxu0 %v22
  %52 = vmatprep.subr.mxu0 0.0
  %53 = vmatpush1.msra.mxu0 %v23
  %54 = vmatprep.subr.mxu0 0.0
  %55 = vmatpush1.msra.mxu0 %v24
  %56 = vmatprep.subr.mxu0 0.0
  %57 = vmatpush1.msra.mxu0 %v25
  %58 = vmatprep.subr.mxu0 0.0
  %59 = vmatpush1.msra.mxu0 %v26
  %60 = vmatprep.subr.mxu0 0.0
  %61 = vmatpush1.msra.mxu0 %v27
  %62 = vmatprep.subr.mxu0 0.0
  %63 = vmatpush1.msra.mxu0 %v28
  %64 = vmatprep.subr.mxu0 0.0
  %65 = vmatpush1.msra.mxu0 0.0
  %66 = vmatprep.subr.mxu0 0.0
  %67 = vmatpush1.msra.mxu0 0.0
  %68 = vmatprep.subr.mxu0 0.0
  %69 = vmatpush1.msra.mxu0 0.0
  %70 = vmatprep.subr.mxu0 0.0
  %71 = vmatpush1.msra.mxu0 0.0
  %72 = vmatprep.subr.mxu0 0.0
  %73 = vmatpush1.msra.mxu0 0.0
  %74 = vmatprep.subr.mxu0 0.0
  %75 = vmatpush1.msra.mxu0 0.0
  %76 = vmatprep.subr.mxu0 0.0
  %77 = vmatpush1.msra.mxu0 0.0
  %78 = vmatprep.subr.mxu0 0.0
  %79 = vmatpush1.msra.mxu0 0.0
  %80 = vmatprep.subr.mxu0 0.0
  %81 = vmatpush1.msra.mxu0 0.0
  %82 = vmatprep.subr.mxu0 0.0
  %83 = vmatpush1.msra.mxu0 0.0
  %84 = vmatprep.subr.mxu0 0.0
  %85 = vmatpush1.msra.mxu0 0.0
  %86 = vmatprep.subr.mxu0 0.0
  %87 = vmatpush1.msra.mxu0 0.0
  %88 = vmatprep.subr.mxu0 0.0
  %89 = vmatpush1.msra.mxu0 0.0
  %90 = vmatprep.subr.mxu0 0.0
  %91 = vmatpush1.msra.mxu0 0.0
  %92 = vmatprep.subr.mxu0 0.0
  %93 = vmatpush1.msra.mxu0 0.0
  %94 = vmatprep.subr.mxu0 0.0
  %95 = vmatpush1.msra.mxu0 0.0
  %96 = vmatprep.subr.mxu0 0.0
  %97 = vmatpush1.msra.mxu0 0.0
  %98 = vmatprep.subr.mxu0 0.0
  %99 = vmatpush1.msra.mxu0 0.0
  %100 = vmatprep.subr.mxu0 0.0
  %101 = vmatpush1.msra.mxu0 0.0
  %102 = vmatprep.subr.mxu0 0.0
  %103 = vmatpush1.msra.mxu0 0.0
  %104 = vmatprep.mubr.f32.mxu0 0.0
  %105 = vmatmul.mubr.f32.gmra.mrb[0].mxu0 %v38
  %v106 = vpop.f32.mrb[0].mxu0
  %v107 = vadd.f32 %v34, %v106
  %v108 = vpop.f32.mrb[0].mxu0
  %109 = vdwg.mxu0
  %110 = vst [vmem:[%s3] sm:$0xff] %v107
  %v111 = vlaneseq
  %v112 = vshrl.u32 %v111, 7
  %s113 = smul.u32 0, 8
  %v114 = vstv %s113
  %v115 = vadd.s32 %v112, %v114
  %vm116 = vcmp.lt.s32.totalorder %v115, 8
  %v117 = vsel %vm116, 1, 0
  %v118 = vcvt.s32.f32 %v117
  %v119 = vmul.f32 %v107, %v118
  %v120 = vrot.slane %v119, 4
  %v121 = vadd.f32 %v119, %v120
  %v122 = vrot.slane %v121, 2
  %v123 = vadd.f32 %v121, %v122
  %v124 = vrot.slane %v123, 1
  %v125 = vadd.f32 %v123, %v124
  %v126 = vmul.f32 %v119, %v119
  %v127 = vrot.slane %v126, 4
  %v128 = vadd.f32 %v126, %v127
  %v129 = vrot.slane %v128, 2
  %v130 = vadd.f32 %v128, %v129
  %v131 = vrot.slane %v130, 1
  %v132 = vadd.f32 %v130, %v131
  %p133 = scmp.eq.s32.totalorder 0, 0
  // Predicated region
  $region14: #{residnn_forward.31} parent=0 // pred_check
    %p134 = pneg %p133
  $region15: #{residnn_forward.31} parent=0 // pred_check_branch
    %136 = sbr.rel (%p134) target = $region17
  $region16: #{residnn_forward.31} parent=0 // pred_region
    %137 = vst [vmem:[%s4] sm:$0x3] 0.0
  $region17: #{residnn_forward.31} parent=0 // pred_fallthru
    _
  %v138 = vld [vmem:[%s4] sm:$0x3]
  %vm139 = vcmask 1040384
  %v140 = vsel %vm139, %v125, %v132
  %v141 = vadd.f32 %v138, %v140
  %142 = vst [vmem:[%s4] sm:$0x3] %v141
  // Predicated region
  $region18: #{residnn_forward.31} parent=0 // pred_check
    _
  $region19: #{residnn_forward.31} parent=0 // pred_check_branch
    %144 = sbr.rel (0) target = $region21
  $region20: #{residnn_forward.31} parent=0 // pred_region
    _
  $region21: #{residnn_forward.31} parent=0 // pred_fallthru
    _
  // Predicated region
  $region22: #{residnn_forward.31} parent=0 // pred_check
    _
  $region23: #{residnn_forward.31} parent=0 // pred_check_branch
    %146 = sbr.rel (0) target = $region25
  $region24: #{residnn_forward.31} parent=0 // pred_region
    _
  $region25: #{residnn_forward.31} parent=0 // pred_fallthru
    _
  // Predicated region
  $region26: #{residnn_forward.31} parent=0 // pred_check
    _
  $region27: #{residnn_forward.31} parent=0 // pred_check_branch
    %148 = sbr.rel (0) target = $region29
  $region28: #{residnn_forward.31} parent=0 // pred_region
    _
  $region29: #{residnn_forward.31} parent=0 // pred_fallthru
    _
  // Predicated region
  $region30: #{residnn_forward.31} parent=0 // pred_check
    _
  $region31: #{residnn_forward.31} parent=0 // pred_check_branch
    %150 = sbr.rel (0) target = $region33
  $region32: #{residnn_forward.31} parent=0 // pred_region
    _
  $region33: #{residnn_forward.31} parent=0 // pred_fallthru
    _

// kernel: residnn_forward.32
$region0: #{residnn_forward.32}
  #allocation0 [shape = 'u32[]', space=smem, size = 0x4, offset = 0x4, fixed_abs, tag = 'smem constant byte address 0x4 - core index']
  #allocation1 [shape = 'u32[144,128]{1,0:T(1,128)}', space=vmem, size = 0x12000, scoped, tag = 'internal scratch']
  %s0 = inlined_call_operand.vmem [shape: f32[8,128], index: 0, kind: input, shape index: {}]
  %s1 = inlined_call_operand.vmem [shape: f32[2,128], index: 1, kind: input, shape index: {}]
  %s2 = inlined_call_operand.vmem [shape: f32[64,64], index: 2, kind: input, shape index: {}]
  %s3 = inlined_call_operand.vmem [shape: f32[1,64], index: 3, kind: input, shape index: {}]
  %s4 = inlined_call_operand.vmem [shape: f32[1,128], index: 4, kind: input, shape index: {}]
  %s5 = inlined_call_operand.vmem [shape: f32[1,128], index: 5, kind: input, shape index: {}]
  %s6 = inlined_call_operand.vmem [shape: f32[8,64], index: 6, kind: output, shape index: {}]
  %s7 = sld [smem:[#allocation0]]
  $region34: #{residnn_forward.32} parent=0
    _
  %s9 = ssub.s32 1, %s7
  %s10 = scalar_select 0, %s9, %s7
  // Predicated region
  $region2: #{residnn_forward.32} parent=0 // pred_check
    _
  $region3: #{residnn_forward.32} parent=0 // pred_check_branch
    %12 = sbr.rel (0) target = $region5
  $region4: #{residnn_forward.32} parent=0 // pred_region
    _
  $region5: #{residnn_forward.32} parent=0 // pred_fallthru
    _
  // Predicated region
  $region6: #{residnn_forward.32} parent=0 // pred_check
    _
  $region7: #{residnn_forward.32} parent=0 // pred_check_branch
    %14 = sbr.rel (0) target = $region9
  $region8: #{residnn_forward.32} parent=0 // pred_region
    _
  $region9: #{residnn_forward.32} parent=0 // pred_fallthru
    _
  // Predicated region
  $region10: #{residnn_forward.32} parent=0 // pred_check
    _
  $region11: #{residnn_forward.32} parent=0 // pred_check_branch
    %16 = sbr.rel (0) target = $region13
  $region12: #{residnn_forward.32} parent=0 // pred_region
    _
  $region13: #{residnn_forward.32} parent=0 // pred_fallthru
    _
  // Predicated region
  $region14: #{residnn_forward.32} parent=0 // pred_check
    _
  $region15: #{residnn_forward.32} parent=0 // pred_check_branch
    %18 = sbr.rel (0) target = $region17
  $region16: #{residnn_forward.32} parent=0 // pred_region
    _
  $region17: #{residnn_forward.32} parent=0 // pred_fallthru
    _
  // Predicated region
  $region18: #{residnn_forward.32} parent=0 // pred_check
    _
  $region19: #{residnn_forward.32} parent=0 // pred_check_branch
    %20 = sbr.rel (0) target = $region21
  $region20: #{residnn_forward.32} parent=0 // pred_region
    _
  $region21: #{residnn_forward.32} parent=0 // pred_fallthru
    _
  // Predicated region
  $region22: #{residnn_forward.32} parent=0 // pred_check
    _
  $region23: #{residnn_forward.32} parent=0 // pred_check_branch
    %22 = sbr.rel (0) target = $region25
  $region24: #{residnn_forward.32} parent=0 // pred_region
    _
  $region25: #{residnn_forward.32} parent=0 // pred_fallthru
    _
  %v23 = vld [vmem:[%s1] sm:$0x3]
  %v24 = vmul.f32 %v23, 0.125
  %v25 = vmul.f32 %v24, %v24
  %v27 = vrot.slane %v25, 7
  %v29 = vsub.f32 %v24, %v27
  %v30 = vld [vmem:[%s4] sm:$0x1]
  %v31 = vadd.f32 %v29, 1e-05
  %v32 = vrsqrt.pop %v31
  %v35 = vunpack.c.l.s4 1966171168
  %v36 = vunpack.c.0.s8 %v35
  %v37 = vlaneseq
  %v38 = vshrl.u32 %v37, 7
  %v39 = vsub.s32 %v36, %v38
  %v40 = vrot.slane %v32, %v39
  %v41 = vcombine.high %v40, %v40
  %v43 = vunpack.c.l.s4 1966171168
  %v44 = vunpack.c.0.s8 %v43
  %v45 = vlaneseq
  %v46 = vshrl.u32 %v45, 7
  %v47 = vsub.s32 %v44, %v46
  %v48 = vrot.slane %v41, %v47
  %v50 = vmul.f32 %v30, %v48
  %v51 = vld [vmem:[%s5] sm:$0x1]
  %v52 = vmul.f32 %v24, %v50
  %v53 = vsub.f32 %v51, %v52
  %v54 = vld [vmem:[%s0] sm:$0xff]
  %v56 = vlaneseq
  %v57 = vshrl.u32 %v56, 7
  %v58 = vsub.s32 0, %v57
  %v59 = vrot.slane %v50, %v58
  %v61 = vmul.f32 %v54, %v59
  %v63 = vlaneseq
  %v64 = vshrl.u32 %v63, 7
  %v65 = vsub.s32 0, %v64
  %v66 = vrot.slane %v53, %v65
  %v68 = vadd.f32 %v61, %v66
  %v69 = vmax.f32 %v68, 0.0
  %v70 = vld [vmem:[%s2] sm:$0xff]
  %v71 = vld [vmem:[%s2 + $0x8] sm:$0xff]
  %v72 = vld [vmem:[%s2 + $0x10] sm:$0xff]
  %v73 = vld [vmem:[%s2 + $0x18] sm:$0xff]
  %v74 = vld [vmem:[%s2 + $0x20] sm:$0xff]
  %v75 = vld [vmem:[%s2 + $0x28] sm:$0xff]
  %v76 = vld [vmem:[%s2 + $0x30] sm:$0xff]
  %v77 = vld [vmem:[%s2 + $0x38] sm:$0xff]
  %v78 = vld [vmem:[%s3] sm:$0x1]
  %v80 = vlaneseq
  %v81 = vshrl.u32 %v80, 7
  %v82 = vsub.s32 0, %v81
  %v83 = vrot.slane %v78, %v82
  %vm85 = vcmask 523264
  %v87 = vsel %vm85, %v69, 0
  %89 = vmatprep.subr.mxu0 0.0
  %90 = vmatpush1.msra.mxu0 %v70
  %91 = vmatprep.subr.mxu0 0.0
  %92 = vmatpush1.msra.mxu0 %v71
  %93 = vmatprep.subr.mxu0 0.0
  %94 = vmatpush1.msra.mxu0 %v72
  %95 = vmatprep.subr.mxu0 0.0
  %96 = vmatpush1.msra.mxu0 %v73
  %97 = vmatprep.subr.mxu0 0.0
  %98 = vmatpush1.msra.mxu0 %v74
  %99 = vmatprep.subr.mxu0 0.0
  %100 = vmatpush1.msra.mxu0 %v75
  %101 = vmatprep.subr.mxu0 0.0
  %102 = vmatpush1.msra.mxu0 %v76
  %103 = vmatprep.subr.mxu0 0.0
  %104 = vmatpush1.msra.mxu0 %v77
  %105 = vmatprep.subr.mxu0 0.0
  %106 = vmatpush1.msra.mxu0 0.0
  %107 = vmatprep.subr.mxu0 0.0
  %108 = vmatpush1.msra.mxu0 0.0
  %109 = vmatprep.subr.mxu0 0.0
  %110 = vmatpush1.msra.mxu0 0.0
  %111 = vmatprep.subr.mxu0 0.0
  %112 = vmatpush1.msra.mxu0 0.0
  %113 = vmatprep.subr.mxu0 0.0
  %114 = vmatpush1.msra.mxu0 0.0
  %115 = vmatprep.subr.mxu0 0.0
  %116 = vmatpush1.msra.mxu0 0.0
  %117 = vmatprep.subr.mxu0 0.0
  %118 = vmatpush1.msra.mxu0 0.0
  %119 = vmatprep.subr.mxu0 0.0
  %120 = vmatpush1.msra.mxu0 0.0
  %121 = vmatprep.subr.mxu0 0.0
  %122 = vmatpush1.msra.mxu0 0.0
  %123 = vmatprep.subr.mxu0 0.0
  %124 = vmatpush1.msra.mxu0 0.0
  %125 = vmatprep.subr.mxu0 0.0
  %126 = vmatpush1.msra.mxu0 0.0
  %127 = vmatprep.subr.mxu0 0.0
  %128 = vmatpush1.msra.mxu0 0.0
  %129 = vmatprep.subr.mxu0 0.0
  %130 = vmatpush1.msra.mxu0 0.0
  %131 = vmatprep.subr.mxu0 0.0
  %132 = vmatpush1.msra.mxu0 0.0
  %133 = vmatprep.subr.mxu0 0.0
  %134 = vmatpush1.msra.mxu0 0.0
  %135 = vmatprep.subr.mxu0 0.0
  %136 = vmatpush1.msra.mxu0 0.0
  %137 = vmatprep.subr.mxu0 0.0
  %138 = vmatpush1.msra.mxu0 0.0
  %139 = vmatprep.subr.mxu0 0.0
  %140 = vmatpush1.msra.mxu0 0.0
  %141 = vmatprep.subr.mxu0 0.0
  %142 = vmatpush1.msra.mxu0 0.0
  %143 = vmatprep.subr.mxu0 0.0
  %144 = vmatpush1.msra.mxu0 0.0
  %145 = vmatprep.subr.mxu0 0.0
  %146 = vmatpush1.msra.mxu0 0.0
  %147 = vmatprep.subr.mxu0 0.0
  %148 = vmatpush1.msra.mxu0 0.0
  %149 = vmatprep.subr.mxu0 0.0
  %150 = vmatpush1.msra.mxu0 0.0
  %151 = vmatprep.subr.mxu0 0.0
  %152 = vmatpush1.msra.mxu0 0.0
  %153 = vmatprep.mubr.f32.mxu0 0.0
  %154 = vmatmul.mubr.f32.gmra.mrb[0].mxu0 %v87
  %v155 = vpop.f32.mrb[0].mxu0
  %v156 = vadd.f32 %v83, %v155
  %v157 = vpop.f32.mrb[0].mxu0
  %158 = vdwg.mxu0
  %160 = vrot.lane.b32.xlu0 %v156, 64
  %v161 = vpop.permute.xlu0 %160
  %v163 = vadd.f32 %v68, %v161
  %v164 = vmax.f32 %v163, 0.0
  %166 = vrot.lane.b32.xlu0 %v164, 64
  %v167 = vpop.permute.xlu0 %166
  %169 = vst.msk [vmem:[%s6] sm:$0xff] %vm85, %v167
  // Predicated region
  $region26: #{residnn_forward.32} parent=0 // pred_check
    _
  $region27: #{residnn_forward.32} parent=0 // pred_check_branch
    %171 = sbr.rel (0) target = $region29
  $region28: #{residnn_forward.32} parent=0 // pred_region
    _
  $region29: #{residnn_forward.32} parent=0 // pred_fallthru
    _
  // Predicated region
  $region30: #{residnn_forward.32} parent=0 // pred_check
    _
  $region31: #{residnn_forward.32} parent=0 // pred_check_branch
    %173 = sbr.rel (0) target = $region33
  $region32: #{residnn_forward.32} parent=0 // pred_region
    _
  $region33: #{residnn_forward.32} parent=0 // pred_fallthru
    _

// kernel: residnn_forward.33
$region0: #{residnn_forward.33}
  #allocation0 [shape = 'u32[]', space=smem, size = 0x4, offset = 0x4, fixed_abs, tag = 'smem constant byte address 0x4 - core index']
  #allocation1 [shape = 'u32[144,128]{1,0:T(1,128)}', space=vmem, size = 0x12000, scoped, tag = 'internal scratch']
  %s0 = inlined_call_operand.vmem [shape: f32[8,192], index: 0, kind: input, shape index: {}]
  %s1 = inlined_call_operand.vmem [shape: f32[192,128], index: 1, kind: input, shape index: {}]
  %s2 = inlined_call_operand.vmem [shape: f32[1,128], index: 2, kind: input, shape index: {}]
  %s3 = inlined_call_operand.vmem [shape: f32[8,128], index: 3, kind: output, shape index: {0}]
  %s4 = inlined_call_operand.vmem [shape: f32[2,128], index: 4, kind: output, shape index: {1}]
  %5 = xla_tuple %s3, %s4
  %s6 = sld [smem:[#allocation0]]
  $region34: #{residnn_forward.33} parent=0
    _
  %s8 = ssub.s32 1, %s6
  %s9 = scalar_select 0, %s8, %s6
  // Predicated region
  $region2: #{residnn_forward.33} parent=0 // pred_check
    _
  $region3: #{residnn_forward.33} parent=0 // pred_check_branch
    %11 = sbr.rel (0) target = $region5
  $region4: #{residnn_forward.33} parent=0 // pred_region
    _
  $region5: #{residnn_forward.33} parent=0 // pred_fallthru
    _
  // Predicated region
  $region6: #{residnn_forward.33} parent=0 // pred_check
    _
  $region7: #{residnn_forward.33} parent=0 // pred_check_branch
    %13 = sbr.rel (0) target = $region9
  $region8: #{residnn_forward.33} parent=0 // pred_region
    _
  $region9: #{residnn_forward.33} parent=0 // pred_fallthru
    _
  // Predicated region
  $region10: #{residnn_forward.33} parent=0 // pred_check
    _
  $region11: #{residnn_forward.33} parent=0 // pred_check_branch
    %15 = sbr.rel (0) target = $region13
  $region12: #{residnn_forward.33} parent=0 // pred_region
    _
  $region13: #{residnn_forward.33} parent=0 // pred_fallthru
    _
  %v16 = vld [vmem:[%s0] sm:$0xff]
  %v17 = vld [vmem:[%s0 + $0x8] sm:$0xff]
  %v18 = vld [vmem:[%s1] sm:$0xff]
  %v19 = vld [vmem:[%s1 + $0x8] sm:$0xff]
  %v20 = vld [vmem:[%s1 + $0x10] sm:$0xff]
  %v21 = vld [vmem:[%s1 + $0x18] sm:$0xff]
  %v22 = vld [vmem:[%s1 + $0x20] sm:$0xff]
  %v23 = vld [vmem:[%s1 + $0x28] sm:$0xff]
  %v24 = vld [vmem:[%s1 + $0x30] sm:$0xff]
  %v25 = vld [vmem:[%s1 + $0x38] sm:$0xff]
  %v26 = vld [vmem:[%s1 + $0x40] sm:$0xff]
  %v27 = vld [vmem:[%s1 + $0x48] sm:$0xff]
  %v28 = vld [vmem:[%s1 + $0x50] sm:$0xff]
  %v29 = vld [vmem:[%s1 + $0x58] sm:$0xff]
  %v30 = vld [vmem:[%s1 + $0x60] sm:$0xff]
  %v31 = vld [vmem:[%s1 + $0x68] sm:$0xff]
  %v32 = vld [vmem:[%s1 + $0x70] sm:$0xff]
  %v33 = vld [vmem:[%s1 + $0x78] sm:$0xff]
  %v34 = vld [vmem:[%s1 + $0x80] sm:$0xff]
  %v35 = vld [vmem:[%s1 + $0x88] sm:$0xff]
  %v36 = vld [vmem:[%s1 + $0x90] sm:$0xff]
  %v37 = vld [vmem:[%s1 + $0x98] sm:$0xff]
  %v38 = vld [vmem:[%s1 + $0xa0] sm:$0xff]
  %v39 = vld [vmem:[%s1 + $0xa8] sm:$0xff]
  %v40 = vld [vmem:[%s1 + $0xb0] sm:$0xff]
  %v41 = vld [vmem:[%s1 + $0xb8] sm:$0xff]
  %v42 = vld [vmem:[%s2] sm:$0x1]
  %v44 = vlaneseq
  %v45 = vshrl.u32 %v44, 7
  %v46 = vsub.s32 0, %v45
  %v47 = vrot.slane %v42, %v46
  %vm49 = vcmask 523264
  %v51 = vsel %vm49, %v17, 0
  %53 = vmatprep.subr.mxu0 0.0
  %54 = vmatpush1.msra.mxu0 %v18
  %55 = vmatprep.subr.mxu0 0.0
  %56 = vmatpush1.msra.mxu0 %v19
  %57 = vmatprep.subr.mxu0 0.0
  %58 = vmatpush1.msra.mxu0 %v20
  %59 = vmatprep.subr.mxu0 0.0
  %60 = vmatpush1.msra.mxu0 %v21
  %61 = vmatprep.subr.mxu0 0.0
  %62 = vmatpush1.msra.mxu0 %v22
  %63 = vmatprep.subr.mxu0 0.0
  %64 = vmatpush1.msra.mxu0 %v23
  %65 = vmatprep.subr.mxu0 0.0
  %66 = vmatpush1.msra.mxu0 %v24
  %67 = vmatprep.subr.mxu0 0.0
  %68 = vmatpush1.msra.mxu0 %v25
  %69 = vmatprep.subr.mxu0 0.0
  %70 = vmatpush1.msra.mxu0 %v26
  %71 = vmatprep.subr.mxu0 0.0
  %72 = vmatpush1.msra.mxu0 %v27
  %73 = vmatprep.subr.mxu0 0.0
  %74 = vmatpush1.msra.mxu0 %v28
  %75 = vmatprep.subr.mxu0 0.0
  %76 = vmatpush1.msra.mxu0 %v29
  %77 = vmatprep.subr.mxu0 0.0
  %78 = vmatpush1.msra.mxu0 %v30
  %79 = vmatprep.subr.mxu0 0.0
  %80 = vmatpush1.msra.mxu0 %v31
  %81 = vmatprep.subr.mxu0 0.0
  %82 = vmatpush1.msra.mxu0 %v32
  %83 = vmatprep.subr.mxu0 0.0
  %84 = vmatpush1.msra.mxu0 %v33
  %85 = vmatprep.subr.mxu0 0.0
  %86 = vmatpush1.msra.mxu0 %v34
  %87 = vmatprep.subr.mxu0 0.0
  %88 = vmatpush1.msra.mxu0 %v35
  %89 = vmatprep.subr.mxu0 0.0
  %90 = vmatpush1.msra.mxu0 %v36
  %91 = vmatprep.subr.mxu0 0.0
  %92 = vmatpush1.msra.mxu0 %v37
  %93 = vmatprep.subr.mxu0 0.0
  %94 = vmatpush1.msra.mxu0 %v38
  %95 = vmatprep.subr.mxu0 0.0
  %96 = vmatpush1.msra.mxu0 %v39
  %97 = vmatprep.subr.mxu0 0.0
  %98 = vmatpush1.msra.mxu0 %v40
  %99 = vmatprep.subr.mxu0 0.0
  %100 = vmatpush1.msra.mxu0 %v41
  %101 = vmatprep.subr.mxu0 0.0
  %102 = vmatpush1.msra.mxu0 0.0
  %103 = vmatprep.subr.mxu0 0.0
  %104 = vmatpush1.msra.mxu0 0.0
  %105 = vmatprep.subr.mxu0 0.0
  %106 = vmatpush1.msra.mxu0 0.0
  %107 = vmatprep.subr.mxu0 0.0
  %108 = vmatpush1.msra.mxu0 0.0
  %109 = vmatprep.subr.mxu0 0.0
  %110 = vmatpush1.msra.mxu0 0.0
  %111 = vmatprep.subr.mxu0 0.0
  %112 = vmatpush1.msra.mxu0 0.0
  %113 = vmatprep.subr.mxu0 0.0
  %114 = vmatpush1.msra.mxu0 0.0
  %115 = vmatprep.subr.mxu0 0.0
  %116 = vmatpush1.msra.mxu0 0.0
  %117 = vmatprep.mubr.f32.mxu0 %v51
  %118 = vmatmul.mubr.f32.gmra.mrb[0].mxu0 %v16
  %v119 = vpop.f32.mrb[0].mxu0
  %v120 = vadd.f32 %v47, %v119
  %v121 = vpop.f32.mrb[0].mxu0
  %122 = vdwg.mxu0
  %123 = vst [vmem:[%s3] sm:$0xff] %v120
  %v124 = vlaneseq
  %v125 = vshrl.u32 %v124, 7
  %s126 = smul.u32 0, 8
  %v127 = vstv %s126
  %v128 = vadd.s32 %v125, %v127
  %vm129 = vcmp.lt.s32.totalorder %v128, 8
  %v130 = vsel %vm129, 1, 0
  %v131 = vcvt.s32.f32 %v130
  %v132 = vmul.f32 %v120, %v131
  %v133 = vrot.slane %v132, 4
  %v134 = vadd.f32 %v132, %v133
  %v135 = vrot.slane %v134, 2
  %v136 = vadd.f32 %v134, %v135
  %v137 = vrot.slane %v136, 1
  %v138 = vadd.f32 %v136, %v137
  %v139 = vmul.f32 %v132, %v132
  %v140 = vrot.slane %v139, 4
  %v141 = vadd.f32 %v139, %v140
  %v142 = vrot.slane %v141, 2
  %v143 = vadd.f32 %v141, %v142
  %v144 = vrot.slane %v143, 1
  %v145 = vadd.f32 %v143, %v144
  %p146 = scmp.eq.s32.totalorder 0, 0
  // Predicated region
  $region14: #{residnn_forward.33} parent=0 // pred_check
    %p147 = pneg %p146
  $region15: #{residnn_forward.33} parent=0 // pred_check_branch
    %149 = sbr.rel (%p147) target = $region17
  $region16: #{residnn_forward.33} parent=0 // pred_region
    %150 = vst [vmem:[%s4] sm:$0x3] 0.0
  $region17: #{residnn_forward.33} parent=0 // pred_fallthru
    _
  %v151 = vld [vmem:[%s4] sm:$0x3]
  %vm152 = vcmask 1040384
  %v153 = vsel %vm152, %v138, %v145
  %v154 = vadd.f32 %v151, %v153
  %155 = vst [vmem:[%s4] sm:$0x3] %v154
  // Predicated region
  $region18: #{residnn_forward.33} parent=0 // pred_check
    _
  $region19: #{residnn_forward.33} parent=0 // pred_check_branch
    %157 = sbr.rel (0) target = $region21
  $region20: #{residnn_forward.33} parent=0 // pred_region
    _
  $region21: #{residnn_forward.33} parent=0 // pred_fallthru
    _
  // Predicated region
  $region22: #{residnn_forward.33} parent=0 // pred_check
    _
  $region23: #{residnn_forward.33} parent=0 // pred_check_branch
    %159 = sbr.rel (0) target = $region25
  $region24: #{residnn_forward.33} parent=0 // pred_region
    _
  $region25: #{residnn_forward.33} parent=0 // pred_fallthru
    _
  // Predicated region
  $region26: #{residnn_forward.33} parent=0 // pred_check
    _
  $region27: #{residnn_forward.33} parent=0 // pred_check_branch
    %161 = sbr.rel (0) target = $region29
  $region28: #{residnn_forward.33} parent=0 // pred_region
    _
  $region29: #{residnn_forward.33} parent=0 // pred_fallthru
    _
  // Predicated region
  $region30: #{residnn_forward.33} parent=0 // pred_check
    _
  $region31: #{residnn_forward.33} parent=0 // pred_check_branch
    %163 = sbr.rel (0) target = $region33
  $region32: #{residnn_forward.33} parent=0 // pred_region
    _
  $region33: #{residnn_forward.33} parent=0 // pred_fallthru
    _

// kernel: residnn_forward.37
$region0: #{residnn_forward.37}
  #allocation0 [shape = 'u32[]', space=smem, size = 0x4, offset = 0x4, fixed_abs, tag = 'smem constant byte address 0x4 - core index']
  #allocation1 [shape = 'u32[144,128]{1,0:T(1,128)}', space=vmem, size = 0x12000, scoped, tag = 'internal scratch']
  %s0 = inlined_call_operand.vmem [shape: f32[2,256], index: 0, kind: input, shape index: {}]
  %s1 = inlined_call_operand.vmem [shape: f32[256,32], index: 1, kind: input, shape index: {}]
  %s2 = inlined_call_operand.vmem [shape: f32[32,8], index: 2, kind: input, shape index: {}]
  %s3 = inlined_call_operand.vmem [shape: f32[1,8], index: 3, kind: input, shape index: {}]
  %s4 = inlined_call_operand.hbm [shape: f32[2,8], index: 4, kind: output, shape index: {}]
  %s5 = sld [smem:[#allocation0]]
  $region26: #{residnn_forward.37} parent=0
    _
  %s7 = ssub.s32 1, %s5
  %s8 = scalar_select 0, %s7, %s5
  $region1: #{residnn_forward.37} parent=0
    #allocation2 [shape = 'u8[1024]{0}', space=vmem, size = 0x400, scoped, tag = 'output window, operand 0, single buffered']
    #allocation3 [shape = 's32[1]{0}', space=sflag, size = 0x4, scoped, tag = 'scoped memory for residnn_forward.37']
    %9 = vsyncpa [#allocation3], 0
    // Predicated region
    $region2: #{residnn_forward.37} parent=1 // pred_check
      _
    $region3: #{residnn_forward.37} parent=1 // pred_check_branch
      %11 = sbr.rel (0) target = $region5
    $region4: #{residnn_forward.37} parent=1 // pred_region
      _
    $region5: #{residnn_forward.37} parent=1 // pred_fallthru
      _
    // Predicated region
    $region6: #{residnn_forward.37} parent=1 // pred_check
      _
    $region7: #{residnn_forward.37} parent=1 // pred_check_branch
      %13 = sbr.rel (0) target = $region9
    $region8: #{residnn_forward.37} parent=1 // pred_region
      _
    $region9: #{residnn_forward.37} parent=1 // pred_fallthru
      _
    // Predicated region
    $region10: #{residnn_forward.37} parent=1 // pred_check
      _
    $region11: #{residnn_forward.37} parent=1 // pred_check_branch
      %15 = sbr.rel (0) target = $region13
    $region12: #{residnn_forward.37} parent=1 // pred_region
      _
    $region13: #{residnn_forward.37} parent=1 // pred_fallthru
      _
    // Predicated region
    $region14: #{residnn_forward.37} parent=1 // pred_check
      _
    $region15: #{residnn_forward.37} parent=1 // pred_check_branch
      %17 = sbr.rel (0) target = $region17
    $region16: #{residnn_forward.37} parent=1 // pred_region
      _
    $region17: #{residnn_forward.37} parent=1 // pred_fallthru
      _
    %v18 = vld [vmem:[%s0] sm:$0xf]
    %v19 = vld [vmem:[%s1] sm:$0xff]
    %v20 = vld [vmem:[%s1 + $0x8] sm:$0xff]
    %v21 = vld [vmem:[%s1 + $0x10] sm:$0xff]
    %v22 = vld [vmem:[%s1 + $0x18] sm:$0xff]
    %v23 = vld [vmem:[%s1 + $0x20] sm:$0xff]
    %v24 = vld [vmem:[%s1 + $0x28] sm:$0xff]
    %v25 = vld [vmem:[%s1 + $0x30] sm:$0xff]
    %v26 = vld [vmem:[%s1 + $0x38] sm:$0xff]
    %v27 = vld [vmem:[%s1 + $0x40] sm:$0xff]
    %v28 = vld [vmem:[%s1 + $0x48] sm:$0xff]
    %v29 = vld [vmem:[%s1 + $0x50] sm:$0xff]
    %v30 = vld [vmem:[%s1 + $0x58] sm:$0xff]
    %v31 = vld [vmem:[%s1 + $0x60] sm:$0xff]
    %v32 = vld [vmem:[%s1 + $0x68] sm:$0xff]
    %v33 = vld [vmem:[%s1 + $0x70] sm:$0xff]
    %v34 = vld [vmem:[%s1 + $0x78] sm:$0xff]
    %v35 = vld [vmem:[%s1 + $0x80] sm:$0xff]
    %v36 = vld [vmem:[%s1 + $0x88] sm:$0xff]
    %v37 = vld [vmem:[%s1 + $0x90] sm:$0xff]
    %v38 = vld [vmem:[%s1 + $0x98] sm:$0xff]
    %v39 = vld [vmem:[%s1 + $0xa0] sm:$0xff]
    %v40 = vld [vmem:[%s1 + $0xa8] sm:$0xff]
    %v41 = vld [vmem:[%s1 + $0xb0] sm:$0xff]
    %v42 = vld [vmem:[%s1 + $0xb8] sm:$0xff]
    %v43 = vld [vmem:[%s1 + $0xc0] sm:$0xff]
    %v44 = vld [vmem:[%s1 + $0xc8] sm:$0xff]
    %v45 = vld [vmem:[%s1 + $0xd0] sm:$0xff]
    %v46 = vld [vmem:[%s1 + $0xd8] sm:$0xff]
    %v47 = vld [vmem:[%s1 + $0xe0] sm:$0xff]
    %v48 = vld [vmem:[%s1 + $0xe8] sm:$0xff]
    %v49 = vld [vmem:[%s1 + $0xf0] sm:$0xff]
    %v50 = vld [vmem:[%s1 + $0xf8] sm:$0xff]
    %v53 = vunpack.c.l.s4 1983009808
    %v54 = vunpack.c.0.s8 %v53
    %v55 = vlaneseq
    %v56 = vshrl.u32 %v55, 7
    %v57 = vsub.s32 %v54, %v56
    %v58 = vrot.slane %v18, %v57
    %v59 = vcombine.high %v58, %v58
    %62 = vmatprep.subr.mxu0 0.0
    %63 = vmatpush1.msra.mxu0 %v19
    %64 = vmatprep.subr.mxu0 0.0
    %65 = vmatpush1.msra.mxu0 %v20
    %66 = vmatprep.subr.mxu0 0.0
    %67 = vmatpush1.msra.mxu0 %v21
    %68 = vmatprep.subr.mxu0 0.0
    %69 = vmatpush1.msra.mxu0 %v22
    %70 = vmatprep.subr.mxu0 0.0
    %71 = vmatpush1.msra.mxu0 %v23
    %72 = vmatprep.subr.mxu0 0.0
    %73 = vmatpush1.msra.mxu0 %v24
    %74 = vmatprep.subr.mxu0 0.0
    %75 = vmatpush1.msra.mxu0 %v25
    %76 = vmatprep.subr.mxu0 0.0
    %77 = vmatpush1.msra.mxu0 %v26
    %78 = vmatprep.subr.mxu0 0.0
    %79 = vmatpush1.msra.mxu0 %v27
    %80 = vmatprep.subr.mxu0 0.0
    %81 = vmatpush1.msra.mxu0 %v28
    %82 = vmatprep.subr.mxu0 0.0
    %83 = vmatpush1.msra.mxu0 %v29
    %84 = vmatprep.subr.mxu0 0.0
    %85 = vmatpush1.msra.mxu0 %v30
    %86 = vmatprep.subr.mxu0 0.0
    %87 = vmatpush1.msra.mxu0 %v31
    %88 = vmatprep.subr.mxu0 0.0
    %89 = vmatpush1.msra.mxu0 %v32
    %90 = vmatprep.subr.mxu0 0.0
    %91 = vmatpush1.msra.mxu0 %v33
    %92 = vmatprep.subr.mxu0 0.0
    %93 = vmatpush1.msra.mxu0 %v34
    %94 = vmatprep.subr.mxu0 0.0
    %95 = vmatpush1.msra.mxu0 %v35
    %96 = vmatprep.subr.mxu0 0.0
    %97 = vmatpush1.msra.mxu0 %v36
    %98 = vmatprep.subr.mxu0 0.0
    %99 = vmatpush1.msra.mxu0 %v37
    %100 = vmatprep.subr.mxu0 0.0
    %101 = vmatpush1.msra.mxu0 %v38
    %102 = vmatprep.subr.mxu0 0.0
    %103 = vmatpush1.msra.mxu0 %v39
    %104 = vmatprep.subr.mxu0 0.0
    %105 = vmatpush1.msra.mxu0 %v40
    %106 = vmatprep.subr.mxu0 0.0
    %107 = vmatpush1.msra.mxu0 %v41
    %108 = vmatprep.subr.mxu0 0.0
    %109 = vmatpush1.msra.mxu0 %v42
    %110 = vmatprep.subr.mxu0 0.0
    %111 = vmatpush1.msra.mxu0 %v43
    %112 = vmatprep.subr.mxu0 0.0
    %113 = vmatpush1.msra.mxu0 %v44
    %114 = vmatprep.subr.mxu0 0.0
    %115 = vmatpush1.msra.mxu0 %v45
    %116 = vmatprep.subr.mxu0 0.0
    %117 = vmatpush1.msra.mxu0 %v46
    %118 = vmatprep.subr.mxu0 0.0
    %119 = vmatpush1.msra.mxu0 %v47
    %120 = vmatprep.subr.mxu0 0.0
    %121 = vmatpush1.msra.mxu0 %v48
    %122 = vmatprep.subr.mxu0 0.0
    %123 = vmatpush1.msra.mxu0 %v49
    %124 = vmatprep.subr.mxu0 0.0
    %125 = vmatpush1.msra.mxu0 %v50
    %126 = vmatprep.mubr.f32.mxu0 %v59
    %127 = vmatmul.mubr.f32.gmra.mrb[0].mxu0 %v58
    %v128 = vpop.f32.mrb[0].mxu0
    %v129 = vadd.f32 0.0, %v128
    %v130 = vpop.f32.mrb[0].mxu0
    %131 = vdwg.mxu0
    %v132 = vld [vmem:[%s2] sm:$0xff]
    %v133 = vld [vmem:[%s2 + $0x8] sm:$0xff]
    %v134 = vld [vmem:[%s2 + $0x10] sm:$0xff]
    %v135 = vld [vmem:[%s2 + $0x18] sm:$0xff]
    %v136 = vld [vmem:[%s3] sm:$0x1]
    %v138 = vlaneseq
    %v139 = vshrl.u32 %v138, 7
    %v140 = vsub.s32 0, %v139
    %v141 = vrot.slane %v136, %v140
    %vm143 = vcmask 261120
    %v145 = vsel %vm143, %v129, 0
    %147 = vmatprep.subr.mxu0 0.0
    %148 = vmatpush1.msra.mxu0 %v132
    %149 = vmatprep.subr.mxu0 0.0
    %150 = vmatpush1.msra.mxu0 %v133
    %151 = vmatprep.subr.mxu0 0.0
    %152 = vmatpush1.msra.mxu0 %v134
    %153 = vmatprep.subr.mxu0 0.0
    %154 = vmatpush1.msra.mxu0 %v135
    %155 = vmatprep.subr.mxu0 0.0
    %156 = vmatpush1.msra.mxu0 0.0
    %157 = vmatprep.subr.mxu0 0.0
    %158 = vmatpush1.msra.mxu0 0.0
    %159 = vmatprep.subr.mxu0 0.0
    %160 = vmatpush1.msra.mxu0 0.0
    %161 = vmatprep.subr.mxu0 0.0
    %162 = vmatpush1.msra.mxu0 0.0
    %163 = vmatprep.subr.mxu0 0.0
    %164 = vmatpush1.msra.mxu0 0.0
    %165 = vmatprep.subr.mxu0 0.0
    %166 = vmatpush1.msra.mxu0 0.0
    %167 = vmatprep.subr.mxu0 0.0
    %168 = vmatpush1.msra.mxu0 0.0
    %169 = vmatprep.subr.mxu0 0.0
    %170 = vmatpush1.msra.mxu0 0.0
    %171 = vmatprep.subr.mxu0 0.0
    %172 = vmatpush1.msra.mxu0 0.0
    %173 = vmatprep.subr.mxu0 0.0
    %174 = vmatpush1.msra.mxu0 0.0
    %175 = vmatprep.subr.mxu0 0.0
    %176 = vmatpush1.msra.mxu0 0.0
    %177 = vmatprep.subr.mxu0 0.0
    %178 = vmatpush1.msra.mxu0 0.0
    %179 = vmatprep.subr.mxu0 0.0
    %180 = vmatpush1.msra.mxu0 0.0
    %181 = vmatprep.subr.mxu0 0.0
    %182 = vmatpush1.msra.mxu0 0.0
    %183 = vmatprep.subr.mxu0 0.0
    %184 = vmatpush1.msra.mxu0 0.0
    %185 = vmatprep.subr.mxu0 0.0
    %186 = vmatpush1.msra.mxu0 0.0
    %187 = vmatprep.subr.mxu0 0.0
    %188 = vmatpush1.msra.mxu0 0.0
    %189 = vmatprep.subr.mxu0 0.0
    %190 = vmatpush1.msra.mxu0 0.0
    %191 = vmatprep.subr.mxu0 0.0
    %192 = vmatpush1.msra.mxu0 0.0
    %193 = vmatprep.subr.mxu0 0.0
    %194 = vmatpush1.msra.mxu0 0.0
    %195 = vmatprep.subr.mxu0 0.0
    %196 = vmatpush1.msra.mxu0 0.0
    %197 = vmatprep.subr.mxu0 0.0
    %198 = vmatpush1.msra.mxu0 0.0
    %199 = vmatprep.subr.mxu0 0.0
    %200 = vmatpush1.msra.mxu0 0.0
    %201 = vmatprep.subr.mxu0 0.0
    %202 = vmatpush1.msra.mxu0 0.0
    %203 = vmatprep.subr.mxu0 0.0
    %204 = vmatpush1.msra.mxu0 0.0
    %205 = vmatprep.subr.mxu0 0.0
    %206 = vmatpush1.msra.mxu0 0.0
    %207 = vmatprep.subr.mxu0 0.0
    %208 = vmatpush1.msra.mxu0 0.0
    %209 = vmatprep.subr.mxu0 0.0
    %210 = vmatpush1.msra.mxu0 0.0
    %211 = vmatprep.mubr.f32.mxu0 0.0
    %212 = vmatmul.mubr.f32.gmra.mrb[0].mxu0 %v145
    %v213 = vpop.f32.mrb[0].mxu0
    %v214 = vadd.f32 %v141, %v213
    %v215 = vpop.f32.mrb[0].mxu0
    %216 = vdwg.mxu0
    %vm217 = vcmask 58368
    %v218 = vsel %vm217, %v214, -inf
    %219 = vmax.xlane.f32.xlu0 %v218
    %v220 = vpop.xlane.xlu0 %219
    %v221 = vsub.f32 %v214, %v220
    %v222 = vmul.f32 %v221, 1.442695
    %v223 = vpow.pop %v222
    %v224 = vsel %vm217, %v223, 0.0
    %225 = vadd.xlane.f32.xlu0 %v224
    %v226 = vpop.xlane.xlu0 %225
    %v227 = vrcp.pop %v226
    %v228 = vmul.f32 %v223, %v227
    %229 = vst.msk [vmem:[#allocation2] sm:$0x3] %vm217, %v228
    // Predicated region
    $region18: #{residnn_forward.37} parent=1 // pred_check
      _
    $region19: #{residnn_forward.37} parent=1 // pred_check_branch
      %231 = sbr.rel (0) target = $region21
    $region20: #{residnn_forward.37} parent=1 // pred_region
      %s233 = ssub.s32 32, 32
      %234 = vsyncadd [#allocation3], %s233
      %s236 = sshll.u32 [#allocation2], 4
      %s237 = int_to_ptr.vmem [resolvable:$true] %s236
      %239 = dma.vmem_to_hbm [thread:$0]  %s237, 32, %s4, [#allocation3]
    $region21: #{residnn_forward.37} parent=1 // pred_fallthru
      _
    // Predicated region
    $region22: #{residnn_forward.37} parent=1 // pred_check
      _
    $region23: #{residnn_forward.37} parent=1 // pred_check_branch
      %241 = sbr.rel (0) target = $region25
    $region24: #{residnn_forward.37} parent=1 // pred_region
      %242 = dma.done [#allocation3], 32
    $region25: #{residnn_forward.37} parent=1 // pred_fallthru
      _
    %243 = vsyncpa [#allocation3], 1

</llo_original>
